<compile_context>
chip_gen: v6e
topology: v6e:2x2x1
jax: 0.10.0
libtpu: 0.0.40
codegen_flags: <defaults>
</compile_context>

<pallas_src>
import jax
import jax.numpy as jnp
from jax.experimental import pallas as pl
from jax.experimental.pallas import tpu as pltpu

LN_EPS = 1e-5


# ----------------------------- in-kernel helpers -----------------------------

def _layernorm(x, w, b):
    m = jnp.mean(x, axis=-1, keepdims=True)
    v = jnp.mean((x - m) ** 2, axis=-1, keepdims=True)
    return (x - m) * jax.lax.rsqrt(v + LN_EPS) * w + b


def _mm(a, b):
    return jnp.dot(a, b, preferred_element_type=jnp.float32)


def _quick_gelu(x):
    # CLIP hidden_act="quick_gelu": x * sigmoid(1.702 x); divide goes to the EUP slot.
    return x * pl.reciprocal(1.0 + jnp.exp(-1.702 * x), approx=True)


def _gelu_tanh(x):
    # TODO(synk): PyTorch nn.GELU() is the exact erf form; tanh approximation used because
    # erf lowering is not guaranteed in Mosaic (~1e-3 level divergence).
    c = 0.7978845608028654  # sqrt(2/pi)
    return 0.5 * x * (1.0 + jnp.tanh(c * (x + 0.044715 * x * x * x)))


# ------------------------------- fused kernel -------------------------------

def make_inversion_adapter_kernel(num_heads, head_dim):
    D = num_heads * head_dim
    scale = head_dim ** -0.5
    bf16 = jnp.bfloat16

    def kernel(x_ref,
               ln1w_ref, ln1b_ref, wqkv_ref, bqkv_ref, wo_ref, bo_ref,
               ln2w_ref, ln2b_ref, w1_ref, b1_ref, w2_ref, b2_ref,
               plnw_ref, plnb_ref, hw1_ref, hb1_ref, hw2_ref, hb2_ref, hw3_ref, hb3_ref,
               out_ref,
               act_ref, ctx_ref):
        l = pl.program_id(1)

        # Load this batch element's tokens into the resident activation scratch once.
        @pl.when(l == 0)
        def _():
            act_ref[...] = x_ref[0]

        x = act_ref[...]                                           # (S, D) f32 residual stream

        # ---------------- self-attention block (pre-LN) ----------------
        h = _layernorm(x, ln1w_ref[0], ln1b_ref[0])
        hb = h.astype(bf16)

        # Fused QKV projection: one lane-dense (S,D)x(D,3D) MXU matmul.
        qkv = _mm(hb, wqkv_ref[0]) + bqkv_ref[0]                   # (S, 3D) f32
        q = qkv[:, 0:D] * scale                                    # CLIP scales q (post-bias)
        k = qkv[:, D:2 * D]
        v = qkv[:, 2 * D:3 * D]

        # Per-head attention: static unroll over heads; context written directly into a
        # VMEM scratch lane-slice (no concatenate, no batch loop -- batch is on the grid).
        for hd in range(num_heads):
            sl = slice(hd * head_dim, (hd + 1) * head_dim)
            qh = q[:, sl].astype(bf16)                             # (S, Dh)
            kh = k[:, sl].astype(bf16)
            vh = v[:, sl].astype(bf16)
            s = jax.lax.dot_general(qh, kh, (((1,), (1,)), ((), ())),
                                    preferred_element_type=jnp.float32)   # (S, S)
            s = s - jnp.max(s, axis=-1, keepdims=True)             # f32 softmax
            p = jnp.exp(s)
            p = p * pl.reciprocal(jnp.sum(p, axis=-1, keepdims=True), approx=True)
            ctx_ref[:, sl] = jnp.dot(p.astype(bf16), vh,
                                     preferred_element_type=jnp.float32)

        attn = _mm(ctx_ref[...].astype(bf16), wo_ref[0]) + bo_ref[0]
        x = x + attn                                               # residual 1

        # ---------------- MLP block (pre-LN, quick_gelu) ----------------
        h2 = _layernorm(x, ln2w_ref[0], ln2b_ref[0])
        m = _quick_gelu(_mm(h2.astype(bf16), w1_ref[0]) + b1_ref[0])
        m = _mm(m.astype(bf16), w2_ref[0]) + b2_ref[0]
        x = x + m                                                  # residual 2
        act_ref[...] = x

        # ---- fused head: post-LN + (Linear, GELU) x2 + Linear on the CLS token ----
        # (Dropout is identity at inference.)  Runs only on the final layer step, so the
        # full activation never goes back to HBM and there is no second kernel launch.
        @pl.when(l == pl.num_programs(1) - 1)
        def _():
            cls = x[0:1, :]                                        # token 0 of this batch elem
            hh = _layernorm(cls, plnw_ref[...], plnb_ref[...])
            hh = _gelu_tanh(_mm(hh.astype(bf16), hw1_ref[...]) + hb1_ref[...])
            hh = _gelu_tanh(_mm(hh.astype(bf16), hw2_ref[...]) + hb2_ref[...])
            out_ref[0] = _mm(hh.astype(bf16), hw3_ref[...]) + hb3_ref[...]

    return kernel


# --------------------------------- wrapper ---------------------------------

def inversion_adapter_forward(x, enc_params, head_params, num_heads, output_dim):
    B, S, D = x.shape
    L = enc_params[2].shape[0]            # wqkv: (L, D, 3D)
    assert D % num_heads == 0, "hidden size must divide evenly into heads"
    assert S % 8 == 0 and D % 128 == 0, "demo requires sublane/lane-aligned shapes"

    def layer_spec(a):                    # per-layer weight slab, streamed over grid axis l
        nd = a.ndim
        return pl.BlockSpec((1,) + a.shape[1:],
                            lambda b, l, nd=nd: (l,) + (0,) * (nd - 1))

    def const_spec(a):                    # fetched once, stays VMEM-resident
        nd = a.ndim
        return pl.BlockSpec(a.shape, lambda b, l, nd=nd: (0,) * nd)

    in_specs = ([pl.BlockSpec((1, S, D), lambda b, l: (b, 0, 0))]
                + [layer_spec(a) for a in enc_params]
                + [const_spec(a) for a in head_params])

    kernel = make_inversion_adapter_kernel(num_heads, D // num_heads)

    grid_spec = pltpu.PrefetchScalarGridSpec(
        num_scalar_prefetch=0,
        grid=(B, L),                                        # (batch-parallel, layer-sequential)
        in_specs=in_specs,
        out_specs=pl.BlockSpec((1, 1, output_dim), lambda b, l: (b, 0, 0)),
        scratch_shapes=[pltpu.VMEM((S, D), jnp.float32),    # resident activation
                        pltpu.VMEM((S, D), jnp.float32)],   # per-head attention context
    )

    out = pl.pallas_call(
        kernel,
        out_shape=jax.ShapeDtypeStruct((B, 1, output_dim), jnp.float32),
        grid_spec=grid_spec,
        compiler_params=pltpu.CompilerParams(
            dimension_semantics=("parallel", "arbitrary"),
            vmem_limit_bytes=32 * 1024 * 1024,              # explicit, with headroom on v7x
        ),
    )(x, *enc_params, *head_params)
    return out.reshape(B, output_dim)


# ------------------------------ parameter init ------------------------------

def init_params(key, num_layers, D, inter, hidden_dim, output_dim):
    """Encoder weights stacked along a leading layer axis in the kernel's native layout:
    matmul weights stored bf16 as (in, out) (pre-transposed vs torch (out, in)); the
    q/k/v projections are pre-fused into one (L, D, 3D) slab at load time (one-time weight
    layout transform, NOT per-call wrapper work); LN params and biases stay f32."""
    def w(k, shape):
        return (0.02 * jax.random.normal(k, shape, jnp.float32)).astype(jnp.bfloat16)

    kq, kk, kv, ko, k1, k2, kh1, kh2, kh3 = jax.random.split(key, 9)
    L, f32 = num_layers, jnp.float32
    wqkv = jnp.concatenate([w(kq, (L, D, D)), w(kk, (L, D, D)), w(kv, (L, D, D))], axis=-1)
    bqkv = jnp.zeros((L, 1, 3 * D), f32)
    enc_params = (
        jnp.ones((L, 1, D), f32), jnp.zeros((L, 1, D), f32),        # ln1 w, b
        wqkv, bqkv,                                                 # fused q/k/v proj
        w(ko, (L, D, D)), jnp.zeros((L, 1, D), f32),                # out proj
        jnp.ones((L, 1, D), f32), jnp.zeros((L, 1, D), f32),        # ln2 w, b
        w(k1, (L, D, inter)), jnp.zeros((L, 1, inter), f32),        # fc1
        w(k2, (L, inter, D)), jnp.zeros((L, 1, D), f32),            # fc2
    )
    head_params = (
        jnp.ones((1, D), f32), jnp.zeros((1, D), f32),              # post_layernorm
        w(kh1, (D, hidden_dim)), jnp.zeros((1, hidden_dim), f32),   # layers.0
        w(kh2, (hidden_dim, hidden_dim)), jnp.zeros((1, hidden_dim), f32),  # layers.3
        w(kh3, (hidden_dim, output_dim)), jnp.zeros((1, output_dim), f32),  # layers.6
    )
    return enc_params, head_params


# ------------------------------------ main ------------------------------------

if __name__ == "__main__":
    # Small, lane-aligned config consistent with the module:
    #   input_dim == config.hidden_size == D (since x[:, 0, :] has D features).
    B, S, D, H = 2, 8, 128, 4
    inter = 4 * D             # CLIP intermediate_size
    hidden_dim = 128
    output_dim = 128
    num_encoder_layers = 2

    key = jax.random.PRNGKey(0)
    kx, kp = jax.random.split(key)
    x = jax.random.normal(kx, (B, S, D), jnp.float32)

    enc_params, head_params = init_params(kp, num_encoder_layers, D, inter,
                                          hidden_dim, output_dim)

    out = inversion_adapter_forward(x, enc_params, head_params, H, output_dim)
    out = jax.block_until_ready(out)
    assert out.shape == (B, output_dim) and out.dtype == jnp.float32
    assert bool(jnp.all(jnp.isfinite(out)))
    print("KERNEL_OK")
</pallas_src>

<mosaic_0001>
module attributes {stable_mosaic.version = 11 : i64} {
  func.func @kernel(%arg0: i32, %arg1: i32, %arg2: memref<1x8x128xf32, #tpu.memory_space<vmem>>, %arg3: memref<1x1x128xf32, #tpu.memory_space<vmem>>, %arg4: memref<1x1x128xf32, #tpu.memory_space<vmem>>, %arg5: memref<1x128x384xbf16, #tpu.memory_space<vmem>>, %arg6: memref<1x1x384xf32, #tpu.memory_space<vmem>>, %arg7: memref<1x128x128xbf16, #tpu.memory_space<vmem>>, %arg8: memref<1x1x128xf32, #tpu.memory_space<vmem>>, %arg9: memref<1x1x128xf32, #tpu.memory_space<vmem>>, %arg10: memref<1x1x128xf32, #tpu.memory_space<vmem>>, %arg11: memref<1x128x512xbf16, #tpu.memory_space<vmem>>, %arg12: memref<1x1x512xf32, #tpu.memory_space<vmem>>, %arg13: memref<1x512x128xbf16, #tpu.memory_space<vmem>>, %arg14: memref<1x1x128xf32, #tpu.memory_space<vmem>>, %arg15: memref<1x128xf32, #tpu.memory_space<vmem>>, %arg16: memref<1x128xf32, #tpu.memory_space<vmem>>, %arg17: memref<128x128xbf16, #tpu.memory_space<vmem>>, %arg18: memref<1x128xf32, #tpu.memory_space<vmem>>, %arg19: memref<128x128xbf16, #tpu.memory_space<vmem>>, %arg20: memref<1x128xf32, #tpu.memory_space<vmem>>, %arg21: memref<128x128xbf16, #tpu.memory_space<vmem>>, %arg22: memref<1x128xf32, #tpu.memory_space<vmem>>, %arg23: memref<1x1x128xf32, #tpu.memory_space<vmem>>, %arg24: memref<8x128xf32, #tpu.memory_space<vmem>>, %arg25: memref<8x128xf32, #tpu.memory_space<vmem>>) attributes {dimension_semantics = [#tpu.dimension_semantics<parallel>, #tpu.dimension_semantics<arbitrary>], iteration_bounds = array<i64: 2, 2>, scalar_prefetch = 0 : i64, scratch_operands = 2 : i64, tpu.core_type = #tpu.core_type<tc>, window_params = [{transform_indices = @transform_0, window_bounds = array<i64: 1, 8, 128>}, {transform_indices = @transform_1, window_bounds = array<i64: 1, 1, 128>}, {transform_indices = @transform_2, window_bounds = array<i64: 1, 1, 128>}, {transform_indices = @transform_3, window_bounds = array<i64: 1, 128, 384>}, {transform_indices = @transform_4, window_bounds = array<i64: 1, 1, 384>}, {transform_indices = @transform_5, window_bounds = array<i64: 1, 128, 128>}, {transform_indices = @transform_6, window_bounds = array<i64: 1, 1, 128>}, {transform_indices = @transform_7, window_bounds = array<i64: 1, 1, 128>}, {transform_indices = @transform_8, window_bounds = array<i64: 1, 1, 128>}, {transform_indices = @transform_9, window_bounds = array<i64: 1, 128, 512>}, {transform_indices = @transform_10, window_bounds = array<i64: 1, 1, 512>}, {transform_indices = @transform_11, window_bounds = array<i64: 1, 512, 128>}, {transform_indices = @transform_12, window_bounds = array<i64: 1, 1, 128>}, {pipeline_mode = #tpu.pipeline_mode<synchronous>, transform_indices = @transform_13, window_bounds = array<i64: 1, 128>}, {pipeline_mode = #tpu.pipeline_mode<synchronous>, transform_indices = @transform_14, window_bounds = array<i64: 1, 128>}, {pipeline_mode = #tpu.pipeline_mode<synchronous>, transform_indices = @transform_15, window_bounds = array<i64: 128, 128>}, {pipeline_mode = #tpu.pipeline_mode<synchronous>, transform_indices = @transform_16, window_bounds = array<i64: 1, 128>}, {pipeline_mode = #tpu.pipeline_mode<synchronous>, transform_indices = @transform_17, window_bounds = array<i64: 128, 128>}, {pipeline_mode = #tpu.pipeline_mode<synchronous>, transform_indices = @transform_18, window_bounds = array<i64: 1, 128>}, {pipeline_mode = #tpu.pipeline_mode<synchronous>, transform_indices = @transform_19, window_bounds = array<i64: 128, 128>}, {pipeline_mode = #tpu.pipeline_mode<synchronous>, transform_indices = @transform_20, window_bounds = array<i64: 1, 128>}, {transform_indices = @transform_21, window_bounds = array<i64: 1, 1, 128>}]} {
    %c0_i32 = arith.constant 0 : i32
    %0 = arith.cmpi eq, %arg1, %c0_i32 : i32
    %1 = arith.extui %0 : i1 to i32
    %c0_i32_0 = arith.constant 0 : i32
    %2 = arith.cmpi ne, %1, %c0_i32_0 : i32
    scf.if %2 {
      %c0_80 = arith.constant 0 : index
      %c0_81 = arith.constant 0 : index
      %c0_82 = arith.constant 0 : index
      %187 = vector.load %arg2[%c0_80, %c0_81, %c0_82] : memref<1x8x128xf32, #tpu.memory_space<vmem>>, vector<1x8x128xf32>
      %188 = vector.shape_cast %187 : vector<1x8x128xf32> to vector<8x128xf32>
      %c0_83 = arith.constant 0 : index
      %c0_84 = arith.constant 0 : index
      %189 = vector.load %arg24[%c0_83, %c0_84] : memref<8x128xf32, #tpu.memory_space<vmem>>, vector<8x128xf32>
      tpu.vector_store %arg24[%c0_83, %c0_84], %188 {strides = array<i32>} : memref<8x128xf32, #tpu.memory_space<vmem>>, vector<8x128xf32>,
    } else {
    }
    %c0 = arith.constant 0 : index
    %c0_1 = arith.constant 0 : index
    %3 = vector.load %arg24[%c0, %c0_1] : memref<8x128xf32, #tpu.memory_space<vmem>>, vector<8x128xf32>
    %c0_2 = arith.constant 0 : index
    %c0_3 = arith.constant 0 : index
    %c0_4 = arith.constant 0 : index
    %4 = vector.load %arg3[%c0_2, %c0_3, %c0_4] : memref<1x1x128xf32, #tpu.memory_space<vmem>>, vector<1x1x128xf32>
    %5 = vector.shape_cast %4 : vector<1x1x128xf32> to vector<1x128xf32>
    %c0_5 = arith.constant 0 : index
    %c0_6 = arith.constant 0 : index
    %c0_7 = arith.constant 0 : index
    %6 = vector.load %arg4[%c0_5, %c0_6, %c0_7] : memref<1x1x128xf32, #tpu.memory_space<vmem>>, vector<1x1x128xf32>
    %7 = vector.shape_cast %6 : vector<1x1x128xf32> to vector<1x128xf32>
    %cst = arith.constant dense<0.000000e+00> : vector<8xf32>
    %8 = vector.multi_reduction <add>, %3, %cst [1] : vector<8x128xf32> to vector<8xf32>
    %9 = vector.shape_cast %8 : vector<8xf32> to vector<8x1xf32>
    %cst_8 = arith.constant 1.280000e+02 : f32
    %10 = vector.broadcast %cst_8 : f32 to vector<8x1xf32>
    %11 = arith.divf %9, %10 : vector<8x1xf32>
    %12 = vector.broadcast %11 : vector<8x1xf32> to vector<8x128xf32>
    %13 = arith.subf %3, %12 : vector<8x128xf32>
    %14 = arith.mulf %13, %13 : vector<8x128xf32>
    %cst_9 = arith.constant dense<0.000000e+00> : vector<8xf32>
    %15 = vector.multi_reduction <add>, %14, %cst_9 [1] : vector<8x128xf32> to vector<8xf32>
    %16 = vector.shape_cast %15 : vector<8xf32> to vector<8x1xf32>
    %cst_10 = arith.constant 1.280000e+02 : f32
    %17 = vector.broadcast %cst_10 : f32 to vector<8x1xf32>
    %18 = arith.divf %16, %17 : vector<8x1xf32>
    %19 = vector.broadcast %11 : vector<8x1xf32> to vector<8x128xf32>
    %20 = arith.subf %3, %19 : vector<8x128xf32>
    %cst_11 = arith.constant 9.99999974E-6 : f32
    %21 = vector.broadcast %cst_11 : f32 to vector<8x1xf32>
    %22 = arith.addf %18, %21 : vector<8x1xf32>
    %23 = math.rsqrt %22 : vector<8x1xf32>
    %24 = vector.broadcast %23 : vector<8x1xf32> to vector<8x128xf32>
    %25 = arith.mulf %20, %24 : vector<8x128xf32>
    %26 = vector.broadcast %5 : vector<1x128xf32> to vector<8x128xf32>
    %27 = arith.mulf %25, %26 : vector<8x128xf32>
    %28 = vector.broadcast %7 : vector<1x128xf32> to vector<8x128xf32>
    %29 = arith.addf %27, %28 : vector<8x128xf32>
    %30 = arith.truncf %29 : vector<8x128xf32> to vector<8x128xbf16>
    %c0_12 = arith.constant 0 : index
    %c0_13 = arith.constant 0 : index
    %c0_14 = arith.constant 0 : index
    %31 = vector.load %arg5[%c0_12, %c0_13, %c0_14] : memref<1x128x384xbf16, #tpu.memory_space<vmem>>, vector<1x128x384xbf16>
    %32 = vector.shape_cast %31 : vector<1x128x384xbf16> to vector<128x384xbf16>
    %cst_15 = arith.constant dense<0.000000e+00> : vector<8x384xf32>
    %33 = tpu.matmul %30, %32, %cst_15 {dimension_numbers = #tpu.dot_dimension_numbers<[1], [0], [0], [1], [0, 0, 1, 1], [], []>} : vector<8x128xbf16>, vector<128x384xbf16>, vector<8x384xf32> -> vector<8x384xf32>
    %c0_16 = arith.constant 0 : index
    %c0_17 = arith.constant 0 : index
    %c0_18 = arith.constant 0 : index
    %34 = vector.load %arg6[%c0_16, %c0_17, %c0_18] : memref<1x1x384xf32, #tpu.memory_space<vmem>>, vector<1x1x384xf32>
    %35 = vector.shape_cast %34 : vector<1x1x384xf32> to vector<1x384xf32>
    %36 = vector.broadcast %35 : vector<1x384xf32> to vector<8x384xf32>
    %37 = arith.addf %33, %36 : vector<8x384xf32>
    %38 = vector.extract_strided_slice %37 {offsets = [0, 0], sizes = [8, 128], strides = [1, 1]} : vector<8x384xf32> to vector<8x128xf32>
    %cst_19 = arith.constant 0.176776692 : f32
    %39 = vector.broadcast %cst_19 : f32 to vector<8x128xf32>
    %40 = arith.mulf %38, %39 : vector<8x128xf32>
    %41 = vector.extract_strided_slice %37 {offsets = [0, 128], sizes = [8, 128], strides = [1, 1]} : vector<8x384xf32> to vector<8x128xf32>
    %42 = vector.extract_strided_slice %37 {offsets = [0, 256], sizes = [8, 128], strides = [1, 1]} : vector<8x384xf32> to vector<8x128xf32>
    %43 = vector.extract_strided_slice %40 {offsets = [0, 0], sizes = [8, 32], strides = [1, 1]} : vector<8x128xf32> to vector<8x32xf32>
    %44 = arith.truncf %43 : vector<8x32xf32> to vector<8x32xbf16>
    %45 = vector.extract_strided_slice %41 {offsets = [0, 0], sizes = [8, 32], strides = [1, 1]} : vector<8x128xf32> to vector<8x32xf32>
    %46 = arith.truncf %45 : vector<8x32xf32> to vector<8x32xbf16>
    %47 = vector.extract_strided_slice %42 {offsets = [0, 0], sizes = [8, 32], strides = [1, 1]} : vector<8x128xf32> to vector<8x32xf32>
    %48 = arith.truncf %47 : vector<8x32xf32> to vector<8x32xbf16>
    %cst_20 = arith.constant dense<0.000000e+00> : vector<8x8xf32>
    %49 = tpu.matmul %44, %46, %cst_20 {dimension_numbers = #tpu.dot_dimension_numbers<[1], [1], [0], [0], [0, 0, 1, 0], [], []>} : vector<8x32xbf16>, vector<8x32xbf16>, vector<8x8xf32> -> vector<8x8xf32>
    %cst_21 = arith.constant dense<0xFF800000> : vector<8xf32>
    %50 = vector.multi_reduction <maximumf>, %49, %cst_21 [1] : vector<8x8xf32> to vector<8xf32>
    %51 = vector.shape_cast %50 : vector<8xf32> to vector<8x1xf32>
    %52 = vector.broadcast %51 : vector<8x1xf32> to vector<8x8xf32>
    %53 = arith.subf %49, %52 : vector<8x8xf32>
    %54 = math.exp %53 : vector<8x8xf32>
    %cst_22 = arith.constant dense<0.000000e+00> : vector<8xf32>
    %55 = vector.multi_reduction <add>, %54, %cst_22 [1] : vector<8x8xf32> to vector<8xf32>
    %56 = vector.shape_cast %55 : vector<8xf32> to vector<8x1xf32>
    %57 = tpu.reciprocal %56 {approx = true} : vector<8x1xf32> -> vector<8x1xf32>
    %58 = vector.broadcast %57 : vector<8x1xf32> to vector<8x8xf32>
    %59 = arith.mulf %54, %58 : vector<8x8xf32>
    %60 = arith.truncf %59 : vector<8x8xf32> to vector<8x8xbf16>
    %cst_23 = arith.constant dense<0.000000e+00> : vector<8x32xf32>
    %61 = tpu.matmul %60, %48, %cst_23 {dimension_numbers = #tpu.dot_dimension_numbers<[1], [0], [0], [1], [0, 0, 1, 1], [], []>} : vector<8x8xbf16>, vector<8x32xbf16>, vector<8x32xf32> -> vector<8x32xf32>
    %c0_24 = arith.constant 0 : index
    %c0_25 = arith.constant 0 : index
    %62 = vector.load %arg25[%c0_24, %c0_25] : memref<8x128xf32, #tpu.memory_space<vmem>>, vector<8x32xf32>
    tpu.vector_store %arg25[%c0_24, %c0_25], %61 {strides = array<i32>} : memref<8x128xf32, #tpu.memory_space<vmem>>, vector<8x32xf32>,
    %63 = vector.extract_strided_slice %40 {offsets = [0, 32], sizes = [8, 32], strides = [1, 1]} : vector<8x128xf32> to vector<8x32xf32>
    %64 = arith.truncf %63 : vector<8x32xf32> to vector<8x32xbf16>
    %65 = vector.extract_strided_slice %41 {offsets = [0, 32], sizes = [8, 32], strides = [1, 1]} : vector<8x128xf32> to vector<8x32xf32>
    %66 = arith.truncf %65 : vector<8x32xf32> to vector<8x32xbf16>
    %67 = vector.extract_strided_slice %42 {offsets = [0, 32], sizes = [8, 32], strides = [1, 1]} : vector<8x128xf32> to vector<8x32xf32>
    %68 = arith.truncf %67 : vector<8x32xf32> to vector<8x32xbf16>
    %cst_26 = arith.constant dense<0.000000e+00> : vector<8x8xf32>
    %69 = tpu.matmul %64, %66, %cst_26 {dimension_numbers = #tpu.dot_dimension_numbers<[1], [1], [0], [0], [0, 0, 1, 0], [], []>} : vector<8x32xbf16>, vector<8x32xbf16>, vector<8x8xf32> -> vector<8x8xf32>
    %cst_27 = arith.constant dense<0xFF800000> : vector<8xf32>
    %70 = vector.multi_reduction <maximumf>, %69, %cst_27 [1] : vector<8x8xf32> to vector<8xf32>
    %71 = vector.shape_cast %70 : vector<8xf32> to vector<8x1xf32>
    %72 = vector.broadcast %71 : vector<8x1xf32> to vector<8x8xf32>
    %73 = arith.subf %69, %72 : vector<8x8xf32>
    %74 = math.exp %73 : vector<8x8xf32>
    %cst_28 = arith.constant dense<0.000000e+00> : vector<8xf32>
    %75 = vector.multi_reduction <add>, %74, %cst_28 [1] : vector<8x8xf32> to vector<8xf32>
    %76 = vector.shape_cast %75 : vector<8xf32> to vector<8x1xf32>
    %77 = tpu.reciprocal %76 {approx = true} : vector<8x1xf32> -> vector<8x1xf32>
    %78 = vector.broadcast %77 : vector<8x1xf32> to vector<8x8xf32>
    %79 = arith.mulf %74, %78 : vector<8x8xf32>
    %80 = arith.truncf %79 : vector<8x8xf32> to vector<8x8xbf16>
    %cst_29 = arith.constant dense<0.000000e+00> : vector<8x32xf32>
    %81 = tpu.matmul %80, %68, %cst_29 {dimension_numbers = #tpu.dot_dimension_numbers<[1], [0], [0], [1], [0, 0, 1, 1], [], []>} : vector<8x8xbf16>, vector<8x32xbf16>, vector<8x32xf32> -> vector<8x32xf32>
    %c0_30 = arith.constant 0 : index
    %c32 = arith.constant 32 : index
    %82 = vector.load %arg25[%c0_30, %c32] : memref<8x128xf32, #tpu.memory_space<vmem>>, vector<8x32xf32>
    tpu.vector_store %arg25[%c0_30, %c32], %81 {strides = array<i32>} : memref<8x128xf32, #tpu.memory_space<vmem>>, vector<8x32xf32>,
    %83 = vector.extract_strided_slice %40 {offsets = [0, 64], sizes = [8, 32], strides = [1, 1]} : vector<8x128xf32> to vector<8x32xf32>
    %84 = arith.truncf %83 : vector<8x32xf32> to vector<8x32xbf16>
    %85 = vector.extract_strided_slice %41 {offsets = [0, 64], sizes = [8, 32], strides = [1, 1]} : vector<8x128xf32> to vector<8x32xf32>
    %86 = arith.truncf %85 : vector<8x32xf32> to vector<8x32xbf16>
    %87 = vector.extract_strided_slice %42 {offsets = [0, 64], sizes = [8, 32], strides = [1, 1]} : vector<8x128xf32> to vector<8x32xf32>
    %88 = arith.truncf %87 : vector<8x32xf32> to vector<8x32xbf16>
    %cst_31 = arith.constant dense<0.000000e+00> : vector<8x8xf32>
    %89 = tpu.matmul %84, %86, %cst_31 {dimension_numbers = #tpu.dot_dimension_numbers<[1], [1], [0], [0], [0, 0, 1, 0], [], []>} : vector<8x32xbf16>, vector<8x32xbf16>, vector<8x8xf32> -> vector<8x8xf32>
    %cst_32 = arith.constant dense<0xFF800000> : vector<8xf32>
    %90 = vector.multi_reduction <maximumf>, %89, %cst_32 [1] : vector<8x8xf32> to vector<8xf32>
    %91 = vector.shape_cast %90 : vector<8xf32> to vector<8x1xf32>
    %92 = vector.broadcast %91 : vector<8x1xf32> to vector<8x8xf32>
    %93 = arith.subf %89, %92 : vector<8x8xf32>
    %94 = math.exp %93 : vector<8x8xf32>
    %cst_33 = arith.constant dense<0.000000e+00> : vector<8xf32>
    %95 = vector.multi_reduction <add>, %94, %cst_33 [1] : vector<8x8xf32> to vector<8xf32>
    %96 = vector.shape_cast %95 : vector<8xf32> to vector<8x1xf32>
    %97 = tpu.reciprocal %96 {approx = true} : vector<8x1xf32> -> vector<8x1xf32>
    %98 = vector.broadcast %97 : vector<8x1xf32> to vector<8x8xf32>
    %99 = arith.mulf %94, %98 : vector<8x8xf32>
    %100 = arith.truncf %99 : vector<8x8xf32> to vector<8x8xbf16>
    %cst_34 = arith.constant dense<0.000000e+00> : vector<8x32xf32>
    %101 = tpu.matmul %100, %88, %cst_34 {dimension_numbers = #tpu.dot_dimension_numbers<[1], [0], [0], [1], [0, 0, 1, 1], [], []>} : vector<8x8xbf16>, vector<8x32xbf16>, vector<8x32xf32> -> vector<8x32xf32>
    %c0_35 = arith.constant 0 : index
    %c64 = arith.constant 64 : index
    %102 = vector.load %arg25[%c0_35, %c64] : memref<8x128xf32, #tpu.memory_space<vmem>>, vector<8x32xf32>
    tpu.vector_store %arg25[%c0_35, %c64], %101 {strides = array<i32>} : memref<8x128xf32, #tpu.memory_space<vmem>>, vector<8x32xf32>,
    %103 = vector.extract_strided_slice %40 {offsets = [0, 96], sizes = [8, 32], strides = [1, 1]} : vector<8x128xf32> to vector<8x32xf32>
    %104 = arith.truncf %103 : vector<8x32xf32> to vector<8x32xbf16>
    %105 = vector.extract_strided_slice %41 {offsets = [0, 96], sizes = [8, 32], strides = [1, 1]} : vector<8x128xf32> to vector<8x32xf32>
    %106 = arith.truncf %105 : vector<8x32xf32> to vector<8x32xbf16>
    %107 = vector.extract_strided_slice %42 {offsets = [0, 96], sizes = [8, 32], strides = [1, 1]} : vector<8x128xf32> to vector<8x32xf32>
    %108 = arith.truncf %107 : vector<8x32xf32> to vector<8x32xbf16>
    %cst_36 = arith.constant dense<0.000000e+00> : vector<8x8xf32>
    %109 = tpu.matmul %104, %106, %cst_36 {dimension_numbers = #tpu.dot_dimension_numbers<[1], [1], [0], [0], [0, 0, 1, 0], [], []>} : vector<8x32xbf16>, vector<8x32xbf16>, vector<8x8xf32> -> vector<8x8xf32>
    %cst_37 = arith.constant dense<0xFF800000> : vector<8xf32>
    %110 = vector.multi_reduction <maximumf>, %109, %cst_37 [1] : vector<8x8xf32> to vector<8xf32>
    %111 = vector.shape_cast %110 : vector<8xf32> to vector<8x1xf32>
    %112 = vector.broadcast %111 : vector<8x1xf32> to vector<8x8xf32>
    %113 = arith.subf %109, %112 : vector<8x8xf32>
    %114 = math.exp %113 : vector<8x8xf32>
    %cst_38 = arith.constant dense<0.000000e+00> : vector<8xf32>
    %115 = vector.multi_reduction <add>, %114, %cst_38 [1] : vector<8x8xf32> to vector<8xf32>
    %116 = vector.shape_cast %115 : vector<8xf32> to vector<8x1xf32>
    %117 = tpu.reciprocal %116 {approx = true} : vector<8x1xf32> -> vector<8x1xf32>
    %118 = vector.broadcast %117 : vector<8x1xf32> to vector<8x8xf32>
    %119 = arith.mulf %114, %118 : vector<8x8xf32>
    %120 = arith.truncf %119 : vector<8x8xf32> to vector<8x8xbf16>
    %cst_39 = arith.constant dense<0.000000e+00> : vector<8x32xf32>
    %121 = tpu.matmul %120, %108, %cst_39 {dimension_numbers = #tpu.dot_dimension_numbers<[1], [0], [0], [1], [0, 0, 1, 1], [], []>} : vector<8x8xbf16>, vector<8x32xbf16>, vector<8x32xf32> -> vector<8x32xf32>
    %c0_40 = arith.constant 0 : index
    %c96 = arith.constant 96 : index
    %122 = vector.load %arg25[%c0_40, %c96] : memref<8x128xf32, #tpu.memory_space<vmem>>, vector<8x32xf32>
    tpu.vector_store %arg25[%c0_40, %c96], %121 {strides = array<i32>} : memref<8x128xf32, #tpu.memory_space<vmem>>, vector<8x32xf32>,
    %c0_41 = arith.constant 0 : index
    %c0_42 = arith.constant 0 : index
    %123 = vector.load %arg25[%c0_41, %c0_42] : memref<8x128xf32, #tpu.memory_space<vmem>>, vector<8x128xf32>
    %124 = arith.truncf %123 : vector<8x128xf32> to vector<8x128xbf16>
    %c0_43 = arith.constant 0 : index
    %c0_44 = arith.constant 0 : index
    %c0_45 = arith.constant 0 : index
    %125 = vector.load %arg7[%c0_43, %c0_44, %c0_45] : memref<1x128x128xbf16, #tpu.memory_space<vmem>>, vector<1x128x128xbf16>
    %126 = vector.shape_cast %125 : vector<1x128x128xbf16> to vector<128x128xbf16>
    %cst_46 = arith.constant dense<0.000000e+00> : vector<8x128xf32>
    %127 = tpu.matmul %124, %126, %cst_46 {dimension_numbers = #tpu.dot_dimension_numbers<[1], [0], [0], [1], [0, 0, 1, 1], [], []>} : vector<8x128xbf16>, vector<128x128xbf16>, vector<8x128xf32> -> vector<8x128xf32>
    %c0_47 = arith.constant 0 : index
    %c0_48 = arith.constant 0 : index
    %c0_49 = arith.constant 0 : index
    %128 = vector.load %arg8[%c0_47, %c0_48, %c0_49] : memref<1x1x128xf32, #tpu.memory_space<vmem>>, vector<1x1x128xf32>
    %129 = vector.shape_cast %128 : vector<1x1x128xf32> to vector<1x128xf32>
    %130 = vector.broadcast %129 : vector<1x128xf32> to vector<8x128xf32>
    %131 = arith.addf %127, %130 : vector<8x128xf32>
    %132 = arith.addf %3, %131 : vector<8x128xf32>
    %c0_50 = arith.constant 0 : index
    %c0_51 = arith.constant 0 : index
    %c0_52 = arith.constant 0 : index
    %133 = vector.load %arg9[%c0_50, %c0_51, %c0_52] : memref<1x1x128xf32, #tpu.memory_space<vmem>>, vector<1x1x128xf32>
    %134 = vector.shape_cast %133 : vector<1x1x128xf32> to vector<1x128xf32>
    %c0_53 = arith.constant 0 : index
    %c0_54 = arith.constant 0 : index
    %c0_55 = arith.constant 0 : index
    %135 = vector.load %arg10[%c0_53, %c0_54, %c0_55] : memref<1x1x128xf32, #tpu.memory_space<vmem>>, vector<1x1x128xf32>
    %136 = vector.shape_cast %135 : vector<1x1x128xf32> to vector<1x128xf32>
    %cst_56 = arith.constant dense<0.000000e+00> : vector<8xf32>
    %137 = vector.multi_reduction <add>, %132, %cst_56 [1] : vector<8x128xf32> to vector<8xf32>
    %138 = vector.shape_cast %137 : vector<8xf32> to vector<8x1xf32>
    %cst_57 = arith.constant 1.280000e+02 : f32
    %139 = vector.broadcast %cst_57 : f32 to vector<8x1xf32>
    %140 = arith.divf %138, %139 : vector<8x1xf32>
    %141 = vector.broadcast %140 : vector<8x1xf32> to vector<8x128xf32>
    %142 = arith.subf %132, %141 : vector<8x128xf32>
    %143 = arith.mulf %142, %142 : vector<8x128xf32>
    %cst_58 = arith.constant dense<0.000000e+00> : vector<8xf32>
    %144 = vector.multi_reduction <add>, %143, %cst_58 [1] : vector<8x128xf32> to vector<8xf32>
    %145 = vector.shape_cast %144 : vector<8xf32> to vector<8x1xf32>
    %cst_59 = arith.constant 1.280000e+02 : f32
    %146 = vector.broadcast %cst_59 : f32 to vector<8x1xf32>
    %147 = arith.divf %145, %146 : vector<8x1xf32>
    %148 = vector.broadcast %140 : vector<8x1xf32> to vector<8x128xf32>
    %149 = arith.subf %132, %148 : vector<8x128xf32>
    %cst_60 = arith.constant 9.99999974E-6 : f32
    %150 = vector.broadcast %cst_60 : f32 to vector<8x1xf32>
    %151 = arith.addf %147, %150 : vector<8x1xf32>
    %152 = math.rsqrt %151 : vector<8x1xf32>
    %153 = vector.broadcast %152 : vector<8x1xf32> to vector<8x128xf32>
    %154 = arith.mulf %149, %153 : vector<8x128xf32>
    %155 = vector.broadcast %134 : vector<1x128xf32> to vector<8x128xf32>
    %156 = arith.mulf %154, %155 : vector<8x128xf32>
    %157 = vector.broadcast %136 : vector<1x128xf32> to vector<8x128xf32>
    %158 = arith.addf %156, %157 : vector<8x128xf32>
    %159 = arith.truncf %158 : vector<8x128xf32> to vector<8x128xbf16>
    %c0_61 = arith.constant 0 : index
    %c0_62 = arith.constant 0 : index
    %c0_63 = arith.constant 0 : index
    %160 = vector.load %arg11[%c0_61, %c0_62, %c0_63] : memref<1x128x512xbf16, #tpu.memory_space<vmem>>, vector<1x128x512xbf16>
    %161 = vector.shape_cast %160 : vector<1x128x512xbf16> to vector<128x512xbf16>
    %cst_64 = arith.constant dense<0.000000e+00> : vector<8x512xf32>
    %162 = tpu.matmul %159, %161, %cst_64 {dimension_numbers = #tpu.dot_dimension_numbers<[1], [0], [0], [1], [0, 0, 1, 1], [], []>} : vector<8x128xbf16>, vector<128x512xbf16>, vector<8x512xf32> -> vector<8x512xf32>
    %c0_65 = arith.constant 0 : index
    %c0_66 = arith.constant 0 : index
    %c0_67 = arith.constant 0 : index
    %163 = vector.load %arg12[%c0_65, %c0_66, %c0_67] : memref<1x1x512xf32, #tpu.memory_space<vmem>>, vector<1x1x512xf32>
    %164 = vector.shape_cast %163 : vector<1x1x512xf32> to vector<1x512xf32>
    %165 = vector.broadcast %164 : vector<1x512xf32> to vector<8x512xf32>
    %166 = arith.addf %162, %165 : vector<8x512xf32>
    %cst_68 = arith.constant -1.702000e+00 : f32
    %167 = vector.broadcast %cst_68 : f32 to vector<8x512xf32>
    %168 = arith.mulf %167, %166 : vector<8x512xf32>
    %169 = math.exp %168 : vector<8x512xf32>
    %cst_69 = arith.constant 1.000000e+00 : f32
    %170 = vector.broadcast %cst_69 : f32 to vector<8x512xf32>
    %171 = arith.addf %170, %169 : vector<8x512xf32>
    %172 = tpu.reciprocal %171 {approx = true} : vector<8x512xf32> -> vector<8x512xf32>
    %173 = arith.mulf %166, %172 : vector<8x512xf32>
    %174 = arith.truncf %173 : vector<8x512xf32> to vector<8x512xbf16>
    %c0_70 = arith.constant 0 : index
    %c0_71 = arith.constant 0 : index
    %c0_72 = arith.constant 0 : index
    %175 = vector.load %arg13[%c0_70, %c0_71, %c0_72] : memref<1x512x128xbf16, #tpu.memory_space<vmem>>, vector<1x512x128xbf16>
    %176 = vector.shape_cast %175 : vector<1x512x128xbf16> to vector<512x128xbf16>
    %cst_73 = arith.constant dense<0.000000e+00> : vector<8x128xf32>
    %177 = tpu.matmul %174, %176, %cst_73 {dimension_numbers = #tpu.dot_dimension_numbers<[1], [0], [0], [1], [0, 0, 1, 1], [], []>} : vector<8x512xbf16>, vector<512x128xbf16>, vector<8x128xf32> -> vector<8x128xf32>
    %c0_74 = arith.constant 0 : index
    %c0_75 = arith.constant 0 : index
    %c0_76 = arith.constant 0 : index
    %178 = vector.load %arg14[%c0_74, %c0_75, %c0_76] : memref<1x1x128xf32, #tpu.memory_space<vmem>>, vector<1x1x128xf32>
    %179 = vector.shape_cast %178 : vector<1x1x128xf32> to vector<1x128xf32>
    %180 = vector.broadcast %179 : vector<1x128xf32> to vector<8x128xf32>
    %181 = arith.addf %177, %180 : vector<8x128xf32>
    %182 = arith.addf %132, %181 : vector<8x128xf32>
    %c0_77 = arith.constant 0 : index
    %c0_78 = arith.constant 0 : index
    %183 = vector.load %arg24[%c0_77, %c0_78] : memref<8x128xf32, #tpu.memory_space<vmem>>, vector<8x128xf32>
    tpu.vector_store %arg24[%c0_77, %c0_78], %182 {strides = array<i32>} : memref<8x128xf32, #tpu.memory_space<vmem>>, vector<8x128xf32>,
    %c1_i32 = arith.constant 1 : i32
    %184 = arith.cmpi eq, %arg1, %c1_i32 : i32
    %185 = arith.extui %184 : i1 to i32
    %c0_i32_79 = arith.constant 0 : i32
    %186 = arith.cmpi ne, %185, %c0_i32_79 : i32
    scf.if %186 {
      %187 = vector.extract_strided_slice %182 {offsets = [0, 0], sizes = [1, 128], strides = [1, 1]} : vector<8x128xf32> to vector<1x128xf32>
      %c0_80 = arith.constant 0 : index
      %c0_81 = arith.constant 0 : index
      %188 = vector.load %arg15[%c0_80, %c0_81] : memref<1x128xf32, #tpu.memory_space<vmem>>, vector<1x128xf32>
      %c0_82 = arith.constant 0 : index
      %c0_83 = arith.constant 0 : index
      %189 = vector.load %arg16[%c0_82, %c0_83] : memref<1x128xf32, #tpu.memory_space<vmem>>, vector<1x128xf32>
      %cst_84 = arith.constant dense<0.000000e+00> : vector<1xf32>
      %190 = vector.multi_reduction <add>, %187, %cst_84 [1] : vector<1x128xf32> to vector<1xf32>
      %191 = vector.shape_cast %190 : vector<1xf32> to vector<1x1xf32>
      %cst_85 = arith.constant 1.280000e+02 : f32
      %192 = vector.broadcast %cst_85 : f32 to vector<1x1xf32>
      %193 = arith.divf %191, %192 : vector<1x1xf32>
      %194 = vector.broadcast %193 : vector<1x1xf32> to vector<1x128xf32>
      %195 = arith.subf %187, %194 : vector<1x128xf32>
      %196 = arith.mulf %195, %195 : vector<1x128xf32>
      %cst_86 = arith.constant dense<0.000000e+00> : vector<1xf32>
      %197 = vector.multi_reduction <add>, %196, %cst_86 [1] : vector<1x128xf32> to vector<1xf32>
      %198 = vector.shape_cast %197 : vector<1xf32> to vector<1x1xf32>
      %cst_87 = arith.constant 1.280000e+02 : f32
      %199 = vector.broadcast %cst_87 : f32 to vector<1x1xf32>
      %200 = arith.divf %198, %199 : vector<1x1xf32>
      %201 = vector.broadcast %193 : vector<1x1xf32> to vector<1x128xf32>
      %202 = arith.subf %187, %201 : vector<1x128xf32>
      %cst_88 = arith.constant 9.99999974E-6 : f32
      %203 = vector.broadcast %cst_88 : f32 to vector<1x1xf32>
      %204 = arith.addf %200, %203 : vector<1x1xf32>
      %205 = math.rsqrt %204 : vector<1x1xf32>
      %206 = vector.broadcast %205 : vector<1x1xf32> to vector<1x128xf32>
      %207 = arith.mulf %202, %206 : vector<1x128xf32>
      %208 = arith.mulf %207, %188 : vector<1x128xf32>
      %209 = arith.addf %208, %189 : vector<1x128xf32>
      %210 = arith.truncf %209 : vector<1x128xf32> to vector<1x128xbf16>
      %c0_89 = arith.constant 0 : index
      %c0_90 = arith.constant 0 : index
      %211 = vector.load %arg17[%c0_89, %c0_90] : memref<128x128xbf16, #tpu.memory_space<vmem>>, vector<128x128xbf16>
      %cst_91 = arith.constant dense<0.000000e+00> : vector<1x128xf32>
      %212 = tpu.matmul %210, %211, %cst_91 {dimension_numbers = #tpu.dot_dimension_numbers<[1], [0], [0], [1], [0, 0, 1, 1], [], []>} : vector<1x128xbf16>, vector<128x128xbf16>, vector<1x128xf32> -> vector<1x128xf32>
      %c0_92 = arith.constant 0 : index
      %c0_93 = arith.constant 0 : index
      %213 = vector.load %arg18[%c0_92, %c0_93] : memref<1x128xf32, #tpu.memory_space<vmem>>, vector<1x128xf32>
      %214 = arith.addf %212, %213 : vector<1x128xf32>
      %cst_94 = arith.constant 5.000000e-01 : f32
      %215 = vector.broadcast %cst_94 : f32 to vector<1x128xf32>
      %216 = arith.mulf %215, %214 : vector<1x128xf32>
      %cst_95 = arith.constant 4.471500e-02 : f32
      %217 = vector.broadcast %cst_95 : f32 to vector<1x128xf32>
      %218 = arith.mulf %217, %214 : vector<1x128xf32>
      %219 = arith.mulf %218, %214 : vector<1x128xf32>
      %220 = arith.mulf %219, %214 : vector<1x128xf32>
      %221 = arith.addf %214, %220 : vector<1x128xf32>
      %cst_96 = arith.constant 0.797884583 : f32
      %222 = vector.broadcast %cst_96 : f32 to vector<1x128xf32>
      %223 = arith.mulf %222, %221 : vector<1x128xf32>
      %224 = math.tanh %223 : vector<1x128xf32>
      %cst_97 = arith.constant 1.000000e+00 : f32
      %225 = vector.broadcast %cst_97 : f32 to vector<1x128xf32>
      %226 = arith.addf %225, %224 : vector<1x128xf32>
      %227 = arith.mulf %216, %226 : vector<1x128xf32>
      %228 = arith.truncf %227 : vector<1x128xf32> to vector<1x128xbf16>
      %c0_98 = arith.constant 0 : index
      %c0_99 = arith.constant 0 : index
      %229 = vector.load %arg19[%c0_98, %c0_99] : memref<128x128xbf16, #tpu.memory_space<vmem>>, vector<128x128xbf16>
      %cst_100 = arith.constant dense<0.000000e+00> : vector<1x128xf32>
      %230 = tpu.matmul %228, %229, %cst_100 {dimension_numbers = #tpu.dot_dimension_numbers<[1], [0], [0], [1], [0, 0, 1, 1], [], []>} : vector<1x128xbf16>, vector<128x128xbf16>, vector<1x128xf32> -> vector<1x128xf32>
      %c0_101 = arith.constant 0 : index
      %c0_102 = arith.constant 0 : index
      %231 = vector.load %arg20[%c0_101, %c0_102] : memref<1x128xf32, #tpu.memory_space<vmem>>, vector<1x128xf32>
      %232 = arith.addf %230, %231 : vector<1x128xf32>
      %cst_103 = arith.constant 5.000000e-01 : f32
      %233 = vector.broadcast %cst_103 : f32 to vector<1x128xf32>
      %234 = arith.mulf %233, %232 : vector<1x128xf32>
      %cst_104 = arith.constant 4.471500e-02 : f32
      %235 = vector.broadcast %cst_104 : f32 to vector<1x128xf32>
      %236 = arith.mulf %235, %232 : vector<1x128xf32>
      %237 = arith.mulf %236, %232 : vector<1x128xf32>
      %238 = arith.mulf %237, %232 : vector<1x128xf32>
      %239 = arith.addf %232, %238 : vector<1x128xf32>
      %cst_105 = arith.constant 0.797884583 : f32
      %240 = vector.broadcast %cst_105 : f32 to vector<1x128xf32>
      %241 = arith.mulf %240, %239 : vector<1x128xf32>
      %242 = math.tanh %241 : vector<1x128xf32>
      %cst_106 = arith.constant 1.000000e+00 : f32
      %243 = vector.broadcast %cst_106 : f32 to vector<1x128xf32>
      %244 = arith.addf %243, %242 : vector<1x128xf32>
      %245 = arith.mulf %234, %244 : vector<1x128xf32>
      %246 = arith.truncf %245 : vector<1x128xf32> to vector<1x128xbf16>
      %c0_107 = arith.constant 0 : index
      %c0_108 = arith.constant 0 : index
      %247 = vector.load %arg21[%c0_107, %c0_108] : memref<128x128xbf16, #tpu.memory_space<vmem>>, vector<128x128xbf16>
      %cst_109 = arith.constant dense<0.000000e+00> : vector<1x128xf32>
      %248 = tpu.matmul %246, %247, %cst_109 {dimension_numbers = #tpu.dot_dimension_numbers<[1], [0], [0], [1], [0, 0, 1, 1], [], []>} : vector<1x128xbf16>, vector<128x128xbf16>, vector<1x128xf32> -> vector<1x128xf32>
      %c0_110 = arith.constant 0 : index
      %c0_111 = arith.constant 0 : index
      %249 = vector.load %arg22[%c0_110, %c0_111] : memref<1x128xf32, #tpu.memory_space<vmem>>, vector<1x128xf32>
      %250 = arith.addf %248, %249 : vector<1x128xf32>
      %c0_112 = arith.constant 0 : index
      %c0_113 = arith.constant 0 : index
      %c0_114 = arith.constant 0 : index
      %251 = vector.load %arg23[%c0_112, %c0_113, %c0_114] : memref<1x1x128xf32, #tpu.memory_space<vmem>>, vector<1x1x128xf32>
      %252 = vector.shape_cast %251 : vector<1x1x128xf32> to vector<1x128xf32>
      %253 = vector.shape_cast %250 : vector<1x128xf32> to vector<1x1x128xf32>
      tpu.vector_store %arg23[%c0_112, %c0_113, %c0_114], %253 {strides = array<i32>} : memref<1x1x128xf32, #tpu.memory_space<vmem>>, vector<1x1x128xf32>,
    } else {
    }
    return
  }
  func.func @transform_0(%arg0: i32, %arg1: i32) -> (i32, i32, i32) {
    %c0_i32 = arith.constant 0 : i32
    %c0_i32_0 = arith.constant 0 : i32
    %c0_i32_1 = arith.constant 0 : i32
    return %arg0, %c0_i32, %c0_i32_0 : i32, i32, i32
  }
  func.func @transform_1(%arg0: i32, %arg1: i32) -> (i32, i32, i32) {
    %c0_i32 = arith.constant 0 : i32
    %c0_i32_0 = arith.constant 0 : i32
    %c0_i32_1 = arith.constant 0 : i32
    return %arg1, %c0_i32, %c0_i32_0 : i32, i32, i32
  }
  func.func @transform_2(%arg0: i32, %arg1: i32) -> (i32, i32, i32) {
    %c0_i32 = arith.constant 0 : i32
    %c0_i32_0 = arith.constant 0 : i32
    %c0_i32_1 = arith.constant 0 : i32
    return %arg1, %c0_i32, %c0_i32_0 : i32, i32, i32
  }
  func.func @transform_3(%arg0: i32, %arg1: i32) -> (i32, i32, i32) {
    %c0_i32 = arith.constant 0 : i32
    %c0_i32_0 = arith.constant 0 : i32
    %c0_i32_1 = arith.constant 0 : i32
    return %arg1, %c0_i32, %c0_i32_0 : i32, i32, i32
  }
  func.func @transform_4(%arg0: i32, %arg1: i32) -> (i32, i32, i32) {
    %c0_i32 = arith.constant 0 : i32
    %c0_i32_0 = arith.constant 0 : i32
    %c0_i32_1 = arith.constant 0 : i32
    return %arg1, %c0_i32, %c0_i32_0 : i32, i32, i32
  }
  func.func @transform_5(%arg0: i32, %arg1: i32) -> (i32, i32, i32) {
    %c0_i32 = arith.constant 0 : i32
    %c0_i32_0 = arith.constant 0 : i32
    %c0_i32_1 = arith.constant 0 : i32
    return %arg1, %c0_i32, %c0_i32_0 : i32, i32, i32
  }
  func.func @transform_6(%arg0: i32, %arg1: i32) -> (i32, i32, i32) {
    %c0_i32 = arith.constant 0 : i32
    %c0_i32_0 = arith.constant 0 : i32
    %c0_i32_1 = arith.constant 0 : i32
    return %arg1, %c0_i32, %c0_i32_0 : i32, i32, i32
  }
  func.func @transform_7(%arg0: i32, %arg1: i32) -> (i32, i32, i32) {
    %c0_i32 = arith.constant 0 : i32
    %c0_i32_0 = arith.constant 0 : i32
    %c0_i32_1 = arith.constant 0 : i32
    return %arg1, %c0_i32, %c0_i32_0 : i32, i32, i32
  }
  func.func @transform_8(%arg0: i32, %arg1: i32) -> (i32, i32, i32) {
    %c0_i32 = arith.constant 0 : i32
    %c0_i32_0 = arith.constant 0 : i32
    %c0_i32_1 = arith.constant 0 : i32
    return %arg1, %c0_i32, %c0_i32_0 : i32, i32, i32
  }
  func.func @transform_9(%arg0: i32, %arg1: i32) -> (i32, i32, i32) {
    %c0_i32 = arith.constant 0 : i32
    %c0_i32_0 = arith.constant 0 : i32
    %c0_i32_1 = arith.constant 0 : i32
    return %arg1, %c0_i32, %c0_i32_0 : i32, i32, i32
  }
  func.func @transform_10(%arg0: i32, %arg1: i32) -> (i32, i32, i32) {
    %c0_i32 = arith.constant 0 : i32
    %c0_i32_0 = arith.constant 0 : i32
    %c0_i32_1 = arith.constant 0 : i32
    return %arg1, %c0_i32, %c0_i32_0 : i32, i32, i32
  }
  func.func @transform_11(%arg0: i32, %arg1: i32) -> (i32, i32, i32) {
    %c0_i32 = arith.constant 0 : i32
    %c0_i32_0 = arith.constant 0 : i32
    %c0_i32_1 = arith.constant 0 : i32
    return %arg1, %c0_i32, %c0_i32_0 : i32, i32, i32
  }
  func.func @transform_12(%arg0: i32, %arg1: i32) -> (i32, i32, i32) {
    %c0_i32 = arith.constant 0 : i32
    %c0_i32_0 = arith.constant 0 : i32
    %c0_i32_1 = arith.constant 0 : i32
    return %arg1, %c0_i32, %c0_i32_0 : i32, i32, i32
  }
  func.func @transform_13(%arg0: i32, %arg1: i32) -> (i32, i32) {
    %c0_i32 = arith.constant 0 : i32
    %c0_i32_0 = arith.constant 0 : i32
    %c0_i32_1 = arith.constant 0 : i32
    return %c0_i32, %c0_i32_0 : i32, i32
  }
  func.func @transform_14(%arg0: i32, %arg1: i32) -> (i32, i32) {
    %c0_i32 = arith.constant 0 : i32
    %c0_i32_0 = arith.constant 0 : i32
    %c0_i32_1 = arith.constant 0 : i32
    return %c0_i32, %c0_i32_0 : i32, i32
  }
  func.func @transform_15(%arg0: i32, %arg1: i32) -> (i32, i32) {
    %c0_i32 = arith.constant 0 : i32
    %c0_i32_0 = arith.constant 0 : i32
    %c0_i32_1 = arith.constant 0 : i32
    return %c0_i32, %c0_i32_0 : i32, i32
  }
  func.func @transform_16(%arg0: i32, %arg1: i32) -> (i32, i32) {
    %c0_i32 = arith.constant 0 : i32
    %c0_i32_0 = arith.constant 0 : i32
    %c0_i32_1 = arith.constant 0 : i32
    return %c0_i32, %c0_i32_0 : i32, i32
  }
  func.func @transform_17(%arg0: i32, %arg1: i32) -> (i32, i32) {
    %c0_i32 = arith.constant 0 : i32
    %c0_i32_0 = arith.constant 0 : i32
    %c0_i32_1 = arith.constant 0 : i32
    return %c0_i32, %c0_i32_0 : i32, i32
  }
  func.func @transform_18(%arg0: i32, %arg1: i32) -> (i32, i32) {
    %c0_i32 = arith.constant 0 : i32
    %c0_i32_0 = arith.constant 0 : i32
    %c0_i32_1 = arith.constant 0 : i32
    return %c0_i32, %c0_i32_0 : i32, i32
  }
  func.func @transform_19(%arg0: i32, %arg1: i32) -> (i32, i32) {
    %c0_i32 = arith.constant 0 : i32
    %c0_i32_0 = arith.constant 0 : i32
    %c0_i32_1 = arith.constant 0 : i32
    return %c0_i32, %c0_i32_0 : i32, i32
  }
  func.func @transform_20(%arg0: i32, %arg1: i32) -> (i32, i32) {
    %c0_i32 = arith.constant 0 : i32
    %c0_i32_0 = arith.constant 0 : i32
    %c0_i32_1 = arith.constant 0 : i32
    return %c0_i32, %c0_i32_0 : i32, i32
  }
  func.func @transform_21(%arg0: i32, %arg1: i32) -> (i32, i32, i32) {
    %c0_i32 = arith.constant 0 : i32
    %c0_i32_0 = arith.constant 0 : i32
    %c0_i32_1 = arith.constant 0 : i32
    return %arg0, %c0_i32, %c0_i32_0 : i32, i32, i32
  }
}

</mosaic_0001>

<llo_original>
// kernel: tpu_custom_call.1
$region0: #{tpu_custom_call.1}
  #allocation0 [shape = 'u32[]', space=smem, size = 0x4, offset = 0x4, fixed_abs, tag = 'smem constant byte address 0x4 - core index']
  #allocation1 [shape = 'u32[144,128]{1,0:T(1,128)}', space=vmem, size = 0x12000, scoped, tag = 'internal scratch']
  #allocation2 [shape = 'f32[8,128]{1,0:T(8,128)}', space=vmem, size = 0x1000, scoped, tag = 'scratch operand']
  #allocation3 [shape = 'f32[8,128]{1,0:T(8,128)}', space=vmem, size = 0x1000, scoped, tag = 'scratch operand']
  %s0 = inlined_call_operand.hbm [shape: f32[2,8,128], index: 0, kind: input, shape index: {}]
  %s1 = inlined_call_operand.hbm [shape: f32[2,1,128], index: 1, kind: input, shape index: {}]
  %s2 = inlined_call_operand.hbm [shape: f32[2,1,128], index: 2, kind: input, shape index: {}]
  %s3 = inlined_call_operand.hbm [shape: bf16[2,128,384], index: 3, kind: input, shape index: {}]
  %s4 = inlined_call_operand.vmem [shape: f32[2,1,384], index: 4, kind: input, shape index: {}]
  %s5 = inlined_call_operand.hbm [shape: bf16[2,128,128], index: 5, kind: input, shape index: {}]
  %s6 = inlined_call_operand.vmem [shape: f32[2,1,128], index: 6, kind: input, shape index: {}]
  %s7 = inlined_call_operand.hbm [shape: f32[2,1,128], index: 7, kind: input, shape index: {}]
  %s8 = inlined_call_operand.hbm [shape: f32[2,1,128], index: 8, kind: input, shape index: {}]
  %s9 = inlined_call_operand.hbm [shape: bf16[2,128,512], index: 9, kind: input, shape index: {}]
  %s10 = inlined_call_operand.vmem [shape: f32[2,1,512], index: 10, kind: input, shape index: {}]
  %s11 = inlined_call_operand.hbm [shape: bf16[2,512,128], index: 11, kind: input, shape index: {}]
  %s12 = inlined_call_operand.vmem [shape: f32[2,1,128], index: 12, kind: input, shape index: {}]
  %s13 = inlined_call_operand.vmem [shape: f32[1,128], index: 13, kind: input, shape index: {}]
  %s14 = inlined_call_operand.vmem [shape: f32[1,128], index: 14, kind: input, shape index: {}]
  %s15 = inlined_call_operand.hbm [shape: bf16[128,128], index: 15, kind: input, shape index: {}]
  %s16 = inlined_call_operand.vmem [shape: f32[1,128], index: 16, kind: input, shape index: {}]
  %s17 = inlined_call_operand.hbm [shape: bf16[128,128], index: 17, kind: input, shape index: {}]
  %s18 = inlined_call_operand.vmem [shape: f32[1,128], index: 18, kind: input, shape index: {}]
  %s19 = inlined_call_operand.hbm [shape: bf16[128,128], index: 19, kind: input, shape index: {}]
  %s20 = inlined_call_operand.vmem [shape: f32[1,128], index: 20, kind: input, shape index: {}]
  %s21 = inlined_call_operand.hbm [shape: f32[2,1,128], index: 21, kind: output, shape index: {}]
  %s22 = sld [smem:[#allocation0]]
  $region173: #{tpu_custom_call.1} parent=0
    _
  %s24 = ssub.s32 1, %s22
  %s25 = scalar_select 0, %s24, %s22
  $region1: #{tpu_custom_call.1} parent=0
    #allocation4 [shape = 'u8[8192]{0}', space=vmem, size = 0x2000, scoped, tag = 'input window, operand 0']
    #allocation5 [shape = 's32[2]{0}', space=sflag, size = 0x8, scoped, tag = 'scoped memory for tpu_custom_call.1']
    #allocation6 [shape = 's32[2]{0}', space=sflag, size = 0x8, scoped, tag = 'scoped memory for tpu_custom_call.1']
    #allocation7 [shape = 'u8[1024]{0}', space=vmem, size = 0x400, scoped, tag = 'input window, operand 1']
    #allocation8 [shape = 's32[2]{0}', space=sflag, size = 0x8, scoped, tag = 'scoped memory for tpu_custom_call.1']
    #allocation9 [shape = 'u8[1024]{0}', space=vmem, size = 0x400, scoped, tag = 'input window, operand 2']
    #allocation10 [shape = 'u8[196608]{0}', space=vmem, size = 0x30000, scoped, tag = 'input window, operand 3']
    #allocation11 [shape = 's32[2]{0}', space=sflag, size = 0x8, scoped, tag = 'scoped memory for tpu_custom_call.1']
    #allocation12 [shape = 'u8[65536]{0}', space=vmem, size = 0x10000, scoped, tag = 'input window, operand 5']
    #allocation13 [shape = 'u8[1024]{0}', space=vmem, size = 0x400, scoped, tag = 'input window, operand 7']
    #allocation14 [shape = 's32[2]{0}', space=sflag, size = 0x8, scoped, tag = 'scoped memory for tpu_custom_call.1']
    #allocation15 [shape = 'u8[1024]{0}', space=vmem, size = 0x400, scoped, tag = 'input window, operand 8']
    #allocation16 [shape = 'u8[262144]{0}', space=vmem, size = 0x40000, scoped, tag = 'input window, operand 9']
    #allocation17 [shape = 's32[2]{0}', space=sflag, size = 0x8, scoped, tag = 'scoped memory for tpu_custom_call.1']
    #allocation18 [shape = 'u8[262144]{0}', space=vmem, size = 0x40000, scoped, tag = 'input window, operand 11']
    #allocation19 [shape = 'u8[32768]{0}', space=vmem, size = 0x8000, scoped, tag = 'input window, operand 15, single buffered']
    #allocation20 [shape = 's32[1]{0}', space=sflag, size = 0x4, scoped, tag = 'scoped memory for tpu_custom_call.1']
    #allocation21 [shape = 'u8[32768]{0}', space=vmem, size = 0x8000, scoped, tag = 'input window, operand 17, single buffered']
    #allocation22 [shape = 'u8[32768]{0}', space=vmem, size = 0x8000, scoped, tag = 'input window, operand 19, single buffered']
    #allocation23 [shape = 's32[1]{0}', space=sflag, size = 0x4, scoped, tag = 'scoped memory for tpu_custom_call.1']
    #allocation24 [shape = 'u8[1024]{0}', space=vmem, size = 0x400, scoped, tag = 'output window, operand 0']
    %26 = vsyncpa [#allocation5], 0
    %s27 = scalar_lea.sflag [#allocation5], 1
    %28 = vsyncpa %s27, 0
    %29 = vsyncpa [#allocation8], 0
    %s30 = scalar_lea.sflag [#allocation8], 1
    %31 = vsyncpa %s30, 0
    %32 = vsyncpa [#allocation11], 0
    %s33 = scalar_lea.sflag [#allocation11], 1
    %34 = vsyncpa %s33, 0
    %35 = vsyncpa [#allocation14], 0
    %s36 = scalar_lea.sflag [#allocation14], 1
    %37 = vsyncpa %s36, 0
    %38 = vsyncpa [#allocation17], 0
    %s39 = scalar_lea.sflag [#allocation17], 1
    %40 = vsyncpa %s39, 0
    %41 = vsyncpa [#allocation20], 0
    %42 = vsyncpa [#allocation23], 0
    %43 = vsyncpa [#allocation6], 0
    %s44 = scalar_lea.sflag [#allocation6], 1
    %45 = vsyncpa %s44, 0
    loop: start=0, step=1, limit=6
    $region2: #{tpu_custom_call.1} parent=1 // loop_pre_header
      _
    $region3: #{tpu_custom_call.1} parent=1 // loop_header
      %s47 = sphi 0, %s51
      %p48 = scmp.ge.s32.totalorder %s47, 6
      %s54 = sphi 0, %s66
      %s55 = sphi 0, %s62
      %s56 = sphi 0, %s54
      %s57 = sphi 0, %s55
      %s58 = sphi 0, %s56
      %s59 = sphi 0, %s57
      %s69 = sphi 0, %s71
      %s72 = sphi 0, %s69
      %s73 = sphi 0, %s72
      %s89 = sphi 0, %s73
      %s95 = sphi 0, %s97
      %s98 = sphi 0, %s95
      %s99 = sphi 0, %s98
      %s115 = sphi 0, %s99
      %s121 = sphi 0, %s123
      %s124 = sphi 0, %s121
      %s125 = sphi 0, %s124
      %s141 = sphi 0, %s125
      %s147 = sphi 0, %s149
      %s150 = sphi 0, %s147
      %s151 = sphi 0, %s150
      %s167 = sphi 0, %s151
      %s173 = sphi 0, %s175
      %s176 = sphi 0, %s173
      %s177 = sphi 0, %s176
      %s193 = sphi 0, %s177
      %s199 = sphi 0, %s201
      %s202 = sphi 0, %s199
      %s203 = sphi 0, %s202
      %s219 = sphi 0, %s203
      %s225 = sphi 0, %s227
      %s228 = sphi 0, %s225
      %s229 = sphi 0, %s228
      %s245 = sphi 0, %s229
      %s251 = sphi 0, %s253
      %s254 = sphi 0, %s251
      %s255 = sphi 0, %s254
      %s271 = sphi 0, %s255
      %s277 = sphi 0, %s279
      %s280 = sphi 0, %s277
      %s281 = sphi 0, %s280
      %s297 = sphi 0, %s281
      %s303 = sphi 0, %s305
      %s306 = sphi 0, %s303
      %s307 = sphi 0, %s306
      %s323 = sphi 0, %s307
      %s329 = sphi 0, %s331
      %s332 = sphi 0, %s329
      %s333 = sphi 0, %s332
      %s349 = sphi 0, %s333
      %s355 = sphi 0, %s357
      %s358 = sphi 0, %s355
      %s359 = sphi 0, %s358
      %s375 = sphi 0, %s359
      %s381 = sphi 0, %s383
      %s384 = sphi 0, %s381
      %s385 = sphi 0, %s384
      %s401 = sphi 0, %s385
      %s405 = sphi 0, %s405
      %s407 = sphi 0, %s405
      %s408 = sphi 0, %s407
      %s422 = sphi 0, %s408
      %s426 = sphi 0, %s426
      %s428 = sphi 0, %s426
      %s429 = sphi 0, %s428
      %s443 = sphi 0, %s429
      %s447 = sphi 0, %s447
      %s449 = sphi 0, %s447
      %s450 = sphi 0, %s449
      %s464 = sphi 0, %s450
      %s468 = sphi 0, %s468
      %s470 = sphi 0, %s468
      %s471 = sphi 0, %s470
      %s485 = sphi 0, %s471
      %s489 = sphi 0, %s489
      %s491 = sphi 0, %s489
      %s492 = sphi 0, %s491
      %s506 = sphi 0, %s492
      %s510 = sphi 0, %s510
      %s512 = sphi 0, %s510
      %s513 = sphi 0, %s512
      %s527 = sphi 0, %s513
      %s531 = sphi 0, %s531
      %s533 = sphi 0, %s531
      %s534 = sphi 0, %s533
      %s548 = sphi 0, %s534
      %s552 = sphi 0, %s552
      %s554 = sphi 0, %s552
      %s555 = sphi 0, %s554
      %s569 = sphi 0, %s555
      %s575 = sphi 0, %s577
      %s578 = sphi 0, %s575
      %s579 = sphi 0, %s578
      %s595 = sphi 0, %s579
    $region4: #{tpu_custom_call.1} parent=1 // loop_header_branch
      %50 = sbr.rel (%p48) target = $region8
    $region5: #{tpu_custom_call.1} parent=1 // loop_body
      %s52 = ssub.s32 %s47, 1
      %s53 = ssub.s32 %s47, 2
      %s60 = sadd.s32 1, %s55
      %p61 = scmp.ge.s32.totalorder %s60, 2
      %s62 = scalar_select %p61, 0, %s60
      %s63 = sadd.s32 1, %s54
      %s64 = scalar_select %p61, %s63, %s54
      %p65 = scmp.ge.s32.totalorder %s64, 2
      %s66 = scalar_select %p65, 0, %s64
      %s67 = ssub.s32 %s54, %s66
      %p68 = scmp.eq.s32.totalorder %s67, 0
      %s70 = sadd.s32 %s69, 1
      %s71 = scalar_select %p68, %s69, %s70
      %p74 = pneg %p68
      %p75 = scmp.eq.s32.totalorder %s47, 3
      %p76 = por %p74, %p75
      %p77 = scmp.ne.s32.totalorder %s69, %s72
      %p78 = scmp.eq.s32.totalorder %s47, 0
      %p79 = por %p77, %p78
      %p80 = scmp.ne.s32.totalorder %s69, %s72
      %p81 = scmp.eq.s32.totalorder %s52, 3
      %p82 = por %p80, %p81
      %p83 = scmp.ne.s32.totalorder %s72, %s73
      %p84 = scmp.eq.s32.totalorder %s52, 0
      %p85 = por %p83, %p84
      %p86 = scmp.ne.s32.totalorder %s72, %s73
      %p87 = scmp.eq.s32.totalorder %s53, 3
      %p88 = por %p86, %p87
      %p90 = scmp.ne.s32.totalorder %s73, %s89
      %p91 = scmp.eq.s32.totalorder %s53, 0
      %p92 = por %p90, %p91
      %s93 = ssub.s32 %s55, %s62
      %p94 = scmp.eq.s32.totalorder %s93, 0
      %s96 = sadd.s32 %s95, 1
      %s97 = scalar_select %p94, %s95, %s96
      %p100 = pneg %p94
      %p101 = scmp.eq.s32.totalorder %s47, 3
      %p102 = por %p100, %p101
      %p103 = scmp.ne.s32.totalorder %s95, %s98
      %p104 = scmp.eq.s32.totalorder %s47, 0
      %p105 = por %p103, %p104
      %p106 = scmp.ne.s32.totalorder %s95, %s98
      %p107 = scmp.eq.s32.totalorder %s52, 3
      %p108 = por %p106, %p107
      %p109 = scmp.ne.s32.totalorder %s98, %s99
      %p110 = scmp.eq.s32.totalorder %s52, 0
      %p111 = por %p109, %p110
      %p112 = scmp.ne.s32.totalorder %s98, %s99
      %p113 = scmp.eq.s32.totalorder %s53, 3
      %p114 = por %p112, %p113
      %p116 = scmp.ne.s32.totalorder %s99, %s115
      %p117 = scmp.eq.s32.totalorder %s53, 0
      %p118 = por %p116, %p117
      %s119 = ssub.s32 %s55, %s62
      %p120 = scmp.eq.s32.totalorder %s119, 0
      %s122 = sadd.s32 %s121, 1
      %s123 = scalar_select %p120, %s121, %s122
      %p126 = pneg %p120
      %p127 = scmp.eq.s32.totalorder %s47, 3
      %p128 = por %p126, %p127
      %p129 = scmp.ne.s32.totalorder %s121, %s124
      %p130 = scmp.eq.s32.totalorder %s47, 0
      %p131 = por %p129, %p130
      %p132 = scmp.ne.s32.totalorder %s121, %s124
      %p133 = scmp.eq.s32.totalorder %s52, 3
      %p134 = por %p132, %p133
      %p135 = scmp.ne.s32.totalorder %s124, %s125
      %p136 = scmp.eq.s32.totalorder %s52, 0
      %p137 = por %p135, %p136
      %p138 = scmp.ne.s32.totalorder %s124, %s125
      %p139 = scmp.eq.s32.totalorder %s53, 3
      %p140 = por %p138, %p139
      %p142 = scmp.ne.s32.totalorder %s125, %s141
      %p143 = scmp.eq.s32.totalorder %s53, 0
      %p144 = por %p142, %p143
      %s145 = ssub.s32 %s55, %s62
      %p146 = scmp.eq.s32.totalorder %s145, 0
      %s148 = sadd.s32 %s147, 1
      %s149 = scalar_select %p146, %s147, %s148
      %p152 = pneg %p146
      %p153 = scmp.eq.s32.totalorder %s47, 3
      %p154 = por %p152, %p153
      %p155 = scmp.ne.s32.totalorder %s147, %s150
      %p156 = scmp.eq.s32.totalorder %s47, 0
      %p157 = por %p155, %p156
      %p158 = scmp.ne.s32.totalorder %s147, %s150
      %p159 = scmp.eq.s32.totalorder %s52, 3
      %p160 = por %p158, %p159
      %p161 = scmp.ne.s32.totalorder %s150, %s151
      %p162 = scmp.eq.s32.totalorder %s52, 0
      %p163 = por %p161, %p162
      %p164 = scmp.ne.s32.totalorder %s150, %s151
      %p165 = scmp.eq.s32.totalorder %s53, 3
      %p166 = por %p164, %p165
      %p168 = scmp.ne.s32.totalorder %s151, %s167
      %p169 = scmp.eq.s32.totalorder %s53, 0
      %p170 = por %p168, %p169
      %s171 = ssub.s32 %s55, %s62
      %p172 = scmp.eq.s32.totalorder %s171, 0
      %s174 = sadd.s32 %s173, 1
      %s175 = scalar_select %p172, %s173, %s174
      %p178 = pneg %p172
      %p179 = scmp.eq.s32.totalorder %s47, 3
      %p180 = por %p178, %p179
      %p181 = scmp.ne.s32.totalorder %s173, %s176
      %p182 = scmp.eq.s32.totalorder %s47, 0
      %p183 = por %p181, %p182
      %p184 = scmp.ne.s32.totalorder %s173, %s176
      %p185 = scmp.eq.s32.totalorder %s52, 3
      %p186 = por %p184, %p185
      %p187 = scmp.ne.s32.totalorder %s176, %s177
      %p188 = scmp.eq.s32.totalorder %s52, 0
      %p189 = por %p187, %p188
      %p190 = scmp.ne.s32.totalorder %s176, %s177
      %p191 = scmp.eq.s32.totalorder %s53, 3
      %p192 = por %p190, %p191
      %p194 = scmp.ne.s32.totalorder %s177, %s193
      %p195 = scmp.eq.s32.totalorder %s53, 0
      %p196 = por %p194, %p195
      %s197 = ssub.s32 %s55, %s62
      %p198 = scmp.eq.s32.totalorder %s197, 0
      %s200 = sadd.s32 %s199, 1
      %s201 = scalar_select %p198, %s199, %s200
      %p204 = pneg %p198
      %p205 = scmp.eq.s32.totalorder %s47, 3
      %p206 = por %p204, %p205
      %p207 = scmp.ne.s32.totalorder %s199, %s202
      %p208 = scmp.eq.s32.totalorder %s47, 0
      %p209 = por %p207, %p208
      %p210 = scmp.ne.s32.totalorder %s199, %s202
      %p211 = scmp.eq.s32.totalorder %s52, 3
      %p212 = por %p210, %p211
      %p213 = scmp.ne.s32.totalorder %s202, %s203
      %p214 = scmp.eq.s32.totalorder %s52, 0
      %p215 = por %p213, %p214
      %p216 = scmp.ne.s32.totalorder %s202, %s203
      %p217 = scmp.eq.s32.totalorder %s53, 3
      %p218 = por %p216, %p217
      %p220 = scmp.ne.s32.totalorder %s203, %s219
      %p221 = scmp.eq.s32.totalorder %s53, 0
      %p222 = por %p220, %p221
      %s223 = ssub.s32 %s55, %s62
      %p224 = scmp.eq.s32.totalorder %s223, 0
      %s226 = sadd.s32 %s225, 1
      %s227 = scalar_select %p224, %s225, %s226
      %p230 = pneg %p224
      %p231 = scmp.eq.s32.totalorder %s47, 3
      %p232 = por %p230, %p231
      %p233 = scmp.ne.s32.totalorder %s225, %s228
      %p234 = scmp.eq.s32.totalorder %s47, 0
      %p235 = por %p233, %p234
      %p236 = scmp.ne.s32.totalorder %s225, %s228
      %p237 = scmp.eq.s32.totalorder %s52, 3
      %p238 = por %p236, %p237
      %p239 = scmp.ne.s32.totalorder %s228, %s229
      %p240 = scmp.eq.s32.totalorder %s52, 0
      %p241 = por %p239, %p240
      %p242 = scmp.ne.s32.totalorder %s228, %s229
      %p243 = scmp.eq.s32.totalorder %s53, 3
      %p244 = por %p242, %p243
      %p246 = scmp.ne.s32.totalorder %s229, %s245
      %p247 = scmp.eq.s32.totalorder %s53, 0
      %p248 = por %p246, %p247
      %s249 = ssub.s32 %s55, %s62
      %p250 = scmp.eq.s32.totalorder %s249, 0
      %s252 = sadd.s32 %s251, 1
      %s253 = scalar_select %p250, %s251, %s252
      %p256 = pneg %p250
      %p257 = scmp.eq.s32.totalorder %s47, 3
      %p258 = por %p256, %p257
      %p259 = scmp.ne.s32.totalorder %s251, %s254
      %p260 = scmp.eq.s32.totalorder %s47, 0
      %p261 = por %p259, %p260
      %p262 = scmp.ne.s32.totalorder %s251, %s254
      %p263 = scmp.eq.s32.totalorder %s52, 3
      %p264 = por %p262, %p263
      %p265 = scmp.ne.s32.totalorder %s254, %s255
      %p266 = scmp.eq.s32.totalorder %s52, 0
      %p267 = por %p265, %p266
      %p268 = scmp.ne.s32.totalorder %s254, %s255
      %p269 = scmp.eq.s32.totalorder %s53, 3
      %p270 = por %p268, %p269
      %p272 = scmp.ne.s32.totalorder %s255, %s271
      %p273 = scmp.eq.s32.totalorder %s53, 0
      %p274 = por %p272, %p273
      %s275 = ssub.s32 %s55, %s62
      %p276 = scmp.eq.s32.totalorder %s275, 0
      %s278 = sadd.s32 %s277, 1
      %s279 = scalar_select %p276, %s277, %s278
      %p282 = pneg %p276
      %p283 = scmp.eq.s32.totalorder %s47, 3
      %p284 = por %p282, %p283
      %p285 = scmp.ne.s32.totalorder %s277, %s280
      %p286 = scmp.eq.s32.totalorder %s47, 0
      %p287 = por %p285, %p286
      %p288 = scmp.ne.s32.totalorder %s277, %s280
      %p289 = scmp.eq.s32.totalorder %s52, 3
      %p290 = por %p288, %p289
      %p291 = scmp.ne.s32.totalorder %s280, %s281
      %p292 = scmp.eq.s32.totalorder %s52, 0
      %p293 = por %p291, %p292
      %p294 = scmp.ne.s32.totalorder %s280, %s281
      %p295 = scmp.eq.s32.totalorder %s53, 3
      %p296 = por %p294, %p295
      %p298 = scmp.ne.s32.totalorder %s281, %s297
      %p299 = scmp.eq.s32.totalorder %s53, 0
      %p300 = por %p298, %p299
      %s301 = ssub.s32 %s55, %s62
      %p302 = scmp.eq.s32.totalorder %s301, 0
      %s304 = sadd.s32 %s303, 1
      %s305 = scalar_select %p302, %s303, %s304
      %p308 = pneg %p302
      %p309 = scmp.eq.s32.totalorder %s47, 3
      %p310 = por %p308, %p309
      %p311 = scmp.ne.s32.totalorder %s303, %s306
      %p312 = scmp.eq.s32.totalorder %s47, 0
      %p313 = por %p311, %p312
      %p314 = scmp.ne.s32.totalorder %s303, %s306
      %p315 = scmp.eq.s32.totalorder %s52, 3
      %p316 = por %p314, %p315
      %p317 = scmp.ne.s32.totalorder %s306, %s307
      %p318 = scmp.eq.s32.totalorder %s52, 0
      %p319 = por %p317, %p318
      %p320 = scmp.ne.s32.totalorder %s306, %s307
      %p321 = scmp.eq.s32.totalorder %s53, 3
      %p322 = por %p320, %p321
      %p324 = scmp.ne.s32.totalorder %s307, %s323
      %p325 = scmp.eq.s32.totalorder %s53, 0
      %p326 = por %p324, %p325
      %s327 = ssub.s32 %s55, %s62
      %p328 = scmp.eq.s32.totalorder %s327, 0
      %s330 = sadd.s32 %s329, 1
      %s331 = scalar_select %p328, %s329, %s330
      %p334 = pneg %p328
      %p335 = scmp.eq.s32.totalorder %s47, 3
      %p336 = por %p334, %p335
      %p337 = scmp.ne.s32.totalorder %s329, %s332
      %p338 = scmp.eq.s32.totalorder %s47, 0
      %p339 = por %p337, %p338
      %p340 = scmp.ne.s32.totalorder %s329, %s332
      %p341 = scmp.eq.s32.totalorder %s52, 3
      %p342 = por %p340, %p341
      %p343 = scmp.ne.s32.totalorder %s332, %s333
      %p344 = scmp.eq.s32.totalorder %s52, 0
      %p345 = por %p343, %p344
      %p346 = scmp.ne.s32.totalorder %s332, %s333
      %p347 = scmp.eq.s32.totalorder %s53, 3
      %p348 = por %p346, %p347
      %p350 = scmp.ne.s32.totalorder %s333, %s349
      %p351 = scmp.eq.s32.totalorder %s53, 0
      %p352 = por %p350, %p351
      %s353 = ssub.s32 %s55, %s62
      %p354 = scmp.eq.s32.totalorder %s353, 0
      %s356 = sadd.s32 %s355, 1
      %s357 = scalar_select %p354, %s355, %s356
      %p360 = pneg %p354
      %p361 = scmp.eq.s32.totalorder %s47, 3
      %p362 = por %p360, %p361
      %p363 = scmp.ne.s32.totalorder %s355, %s358
      %p364 = scmp.eq.s32.totalorder %s47, 0
      %p365 = por %p363, %p364
      %p366 = scmp.ne.s32.totalorder %s355, %s358
      %p367 = scmp.eq.s32.totalorder %s52, 3
      %p368 = por %p366, %p367
      %p369 = scmp.ne.s32.totalorder %s358, %s359
      %p370 = scmp.eq.s32.totalorder %s52, 0
      %p371 = por %p369, %p370
      %p372 = scmp.ne.s32.totalorder %s358, %s359
      %p373 = scmp.eq.s32.totalorder %s53, 3
      %p374 = por %p372, %p373
      %p376 = scmp.ne.s32.totalorder %s359, %s375
      %p377 = scmp.eq.s32.totalorder %s53, 0
      %p378 = por %p376, %p377
      %s379 = ssub.s32 %s55, %s62
      %p380 = scmp.eq.s32.totalorder %s379, 0
      %s382 = sadd.s32 %s381, 1
      %s383 = scalar_select %p380, %s381, %s382
      %p386 = pneg %p380
      %p387 = scmp.eq.s32.totalorder %s47, 3
      %p388 = por %p386, %p387
      %p389 = scmp.ne.s32.totalorder %s381, %s384
      %p390 = scmp.eq.s32.totalorder %s47, 0
      %p391 = por %p389, %p390
      %p392 = scmp.ne.s32.totalorder %s381, %s384
      %p393 = scmp.eq.s32.totalorder %s52, 3
      %p394 = por %p392, %p393
      %p395 = scmp.ne.s32.totalorder %s384, %s385
      %p396 = scmp.eq.s32.totalorder %s52, 0
      %p397 = por %p395, %p396
      %p398 = scmp.ne.s32.totalorder %s384, %s385
      %p399 = scmp.eq.s32.totalorder %s53, 3
      %p400 = por %p398, %p399
      %p402 = scmp.ne.s32.totalorder %s385, %s401
      %p403 = scmp.eq.s32.totalorder %s53, 0
      %p404 = por %p402, %p403
      %s406 = sadd.s32 %s405, 1
      %p409 = scmp.eq.s32.totalorder %s47, 3
      %p410 = scmp.ne.s32.totalorder %s405, %s407
      %p411 = scmp.eq.s32.totalorder %s47, 0
      %p412 = por %p410, %p411
      %p413 = scmp.ne.s32.totalorder %s405, %s407
      %p414 = scmp.eq.s32.totalorder %s52, 3
      %p415 = por %p413, %p414
      %p416 = scmp.ne.s32.totalorder %s407, %s408
      %p417 = scmp.eq.s32.totalorder %s52, 0
      %p418 = por %p416, %p417
      %p419 = scmp.ne.s32.totalorder %s407, %s408
      %p420 = scmp.eq.s32.totalorder %s53, 3
      %p421 = por %p419, %p420
      %p423 = scmp.ne.s32.totalorder %s408, %s422
      %p424 = scmp.eq.s32.totalorder %s53, 0
      %p425 = por %p423, %p424
      %s427 = sadd.s32 %s426, 1
      %p430 = scmp.eq.s32.totalorder %s47, 3
      %p431 = scmp.ne.s32.totalorder %s426, %s428
      %p432 = scmp.eq.s32.totalorder %s47, 0
      %p433 = por %p431, %p432
      %p434 = scmp.ne.s32.totalorder %s426, %s428
      %p435 = scmp.eq.s32.totalorder %s52, 3
      %p436 = por %p434, %p435
      %p437 = scmp.ne.s32.totalorder %s428, %s429
      %p438 = scmp.eq.s32.totalorder %s52, 0
      %p439 = por %p437, %p438
      %p440 = scmp.ne.s32.totalorder %s428, %s429
      %p441 = scmp.eq.s32.totalorder %s53, 3
      %p442 = por %p440, %p441
      %p444 = scmp.ne.s32.totalorder %s429, %s443
      %p445 = scmp.eq.s32.totalorder %s53, 0
      %p446 = por %p444, %p445
      %s448 = sadd.s32 %s447, 1
      %p451 = scmp.eq.s32.totalorder %s47, 3
      %p452 = scmp.ne.s32.totalorder %s447, %s449
      %p453 = scmp.eq.s32.totalorder %s47, 0
      %p454 = por %p452, %p453
      %p455 = scmp.ne.s32.totalorder %s447, %s449
      %p456 = scmp.eq.s32.totalorder %s52, 3
      %p457 = por %p455, %p456
      %p458 = scmp.ne.s32.totalorder %s449, %s450
      %p459 = scmp.eq.s32.totalorder %s52, 0
      %p460 = por %p458, %p459
      %p461 = scmp.ne.s32.totalorder %s449, %s450
      %p462 = scmp.eq.s32.totalorder %s53, 3
      %p463 = por %p461, %p462
      %p465 = scmp.ne.s32.totalorder %s450, %s464
      %p466 = scmp.eq.s32.totalorder %s53, 0
      %p467 = por %p465, %p466
      %s469 = sadd.s32 %s468, 1
      %p472 = scmp.eq.s32.totalorder %s47, 3
      %p473 = scmp.ne.s32.totalorder %s468, %s470
      %p474 = scmp.eq.s32.totalorder %s47, 0
      %p475 = por %p473, %p474
      %p476 = scmp.ne.s32.totalorder %s468, %s470
      %p477 = scmp.eq.s32.totalorder %s52, 3
      %p478 = por %p476, %p477
      %p479 = scmp.ne.s32.totalorder %s470, %s471
      %p480 = scmp.eq.s32.totalorder %s52, 0
      %p481 = por %p479, %p480
      %p482 = scmp.ne.s32.totalorder %s470, %s471
      %p483 = scmp.eq.s32.totalorder %s53, 3
      %p484 = por %p482, %p483
      %p486 = scmp.ne.s32.totalorder %s471, %s485
      %p487 = scmp.eq.s32.totalorder %s53, 0
      %p488 = por %p486, %p487
      %s490 = sadd.s32 %s489, 1
      %p493 = scmp.eq.s32.totalorder %s47, 3
      %p494 = scmp.ne.s32.totalorder %s489, %s491
      %p495 = scmp.eq.s32.totalorder %s47, 0
      %p496 = por %p494, %p495
      %p497 = scmp.ne.s32.totalorder %s489, %s491
      %p498 = scmp.eq.s32.totalorder %s52, 3
      %p499 = por %p497, %p498
      %p500 = scmp.ne.s32.totalorder %s491, %s492
      %p501 = scmp.eq.s32.totalorder %s52, 0
      %p502 = por %p500, %p501
      %p503 = scmp.ne.s32.totalorder %s491, %s492
      %p504 = scmp.eq.s32.totalorder %s53, 3
      %p505 = por %p503, %p504
      %p507 = scmp.ne.s32.totalorder %s492, %s506
      %p508 = scmp.eq.s32.totalorder %s53, 0
      %p509 = por %p507, %p508
      %s511 = sadd.s32 %s510, 1
      %p514 = scmp.eq.s32.totalorder %s47, 3
      %p515 = scmp.ne.s32.totalorder %s510, %s512
      %p516 = scmp.eq.s32.totalorder %s47, 0
      %p517 = por %p515, %p516
      %p518 = scmp.ne.s32.totalorder %s510, %s512
      %p519 = scmp.eq.s32.totalorder %s52, 3
      %p520 = por %p518, %p519
      %p521 = scmp.ne.s32.totalorder %s512, %s513
      %p522 = scmp.eq.s32.totalorder %s52, 0
      %p523 = por %p521, %p522
      %p524 = scmp.ne.s32.totalorder %s512, %s513
      %p525 = scmp.eq.s32.totalorder %s53, 3
      %p526 = por %p524, %p525
      %p528 = scmp.ne.s32.totalorder %s513, %s527
      %p529 = scmp.eq.s32.totalorder %s53, 0
      %p530 = por %p528, %p529
      %s532 = sadd.s32 %s531, 1
      %p535 = scmp.eq.s32.totalorder %s47, 3
      %p536 = scmp.ne.s32.totalorder %s531, %s533
      %p537 = scmp.eq.s32.totalorder %s47, 0
      %p538 = por %p536, %p537
      %p539 = scmp.ne.s32.totalorder %s531, %s533
      %p540 = scmp.eq.s32.totalorder %s52, 3
      %p541 = por %p539, %p540
      %p542 = scmp.ne.s32.totalorder %s533, %s534
      %p543 = scmp.eq.s32.totalorder %s52, 0
      %p544 = por %p542, %p543
      %p545 = scmp.ne.s32.totalorder %s533, %s534
      %p546 = scmp.eq.s32.totalorder %s53, 3
      %p547 = por %p545, %p546
      %p549 = scmp.ne.s32.totalorder %s534, %s548
      %p550 = scmp.eq.s32.totalorder %s53, 0
      %p551 = por %p549, %p550
      %s553 = sadd.s32 %s552, 1
      %p556 = scmp.eq.s32.totalorder %s47, 3
      %p557 = scmp.ne.s32.totalorder %s552, %s554
      %p558 = scmp.eq.s32.totalorder %s47, 0
      %p559 = por %p557, %p558
      %p560 = scmp.ne.s32.totalorder %s552, %s554
      %p561 = scmp.eq.s32.totalorder %s52, 3
      %p562 = por %p560, %p561
      %p563 = scmp.ne.s32.totalorder %s554, %s555
      %p564 = scmp.eq.s32.totalorder %s52, 0
      %p565 = por %p563, %p564
      %p566 = scmp.ne.s32.totalorder %s554, %s555
      %p567 = scmp.eq.s32.totalorder %s53, 3
      %p568 = por %p566, %p567
      %p570 = scmp.ne.s32.totalorder %s555, %s569
      %p571 = scmp.eq.s32.totalorder %s53, 0
      %p572 = por %p570, %p571
      %s573 = ssub.s32 %s54, %s66
      %p574 = scmp.eq.s32.totalorder %s573, 0
      %s576 = sadd.s32 %s575, 1
      %s577 = scalar_select %p574, %s575, %s576
      %p580 = pneg %p574
      %p581 = scmp.eq.s32.totalorder %s47, 3
      %p582 = por %p580, %p581
      %p583 = scmp.ne.s32.totalorder %s575, %s578
      %p584 = scmp.eq.s32.totalorder %s47, 0
      %p585 = por %p583, %p584
      %p586 = scmp.ne.s32.totalorder %s575, %s578
      %p587 = scmp.eq.s32.totalorder %s52, 3
      %p588 = por %p586, %p587
      %p589 = scmp.ne.s32.totalorder %s578, %s579
      %p590 = scmp.eq.s32.totalorder %s52, 0
      %p591 = por %p589, %p590
      %p592 = scmp.ne.s32.totalorder %s578, %s579
      %p593 = scmp.eq.s32.totalorder %s53, 3
      %p594 = por %p592, %p593
      %p596 = scmp.ne.s32.totalorder %s579, %s595
      %p597 = scmp.eq.s32.totalorder %s53, 0
      %p598 = por %p596, %p597
      %p599 = scmp.le.s32.totalorder 1, %s47
      %p600 = scmp.lt.s32.totalorder %s47, 5
      %p601 = pnand %p599, %p600
      %p602 = pneg %p601
      // Predicated region
      $region9: #{tpu_custom_call.1} parent=5 // pred_check
        _
      $region10: #{tpu_custom_call.1} parent=5 // pred_check_branch
        %604 = sbr.rel (%p601) target = $region12
      $region11: #{tpu_custom_call.1} parent=5 // pred_region
        %s605 = ssub.s32 %s47, 1
        // Predicated region
        $region13: #{tpu_custom_call.1} parent=11 // pred_check
          %p606 = pneg %p418
        $region14: #{tpu_custom_call.1} parent=11 // pred_check_branch
          %608 = sbr.rel (%p606) target = $region16
        $region15: #{tpu_custom_call.1} parent=11 // pred_region
          _
        $region16: #{tpu_custom_call.1} parent=11 // pred_fallthru
          _
        // Predicated region
        $region17: #{tpu_custom_call.1} parent=11 // pred_check
          %p609 = pneg %p439
        $region18: #{tpu_custom_call.1} parent=11 // pred_check_branch
          %611 = sbr.rel (%p609) target = $region20
        $region19: #{tpu_custom_call.1} parent=11 // pred_region
          _
        $region20: #{tpu_custom_call.1} parent=11 // pred_fallthru
          _
        // Predicated region
        $region21: #{tpu_custom_call.1} parent=11 // pred_check
          %p612 = pneg %p460
        $region22: #{tpu_custom_call.1} parent=11 // pred_check_branch
          %614 = sbr.rel (%p612) target = $region24
        $region23: #{tpu_custom_call.1} parent=11 // pred_region
          %s616 = ssub.s32 1024, 1024
          %617 = vsyncadd [#allocation20], %s616
          %s618 = sshll.u32 [#allocation19], 4
          %s619 = int_to_ptr.vmem [resolvable:$true] %s618
          %624 = dma.hbm_to_vmem [thread:$0]  %s15, 1024, %s619, [#allocation20], 64, 64, 4
        $region24: #{tpu_custom_call.1} parent=11 // pred_fallthru
          _
        // Predicated region
        $region25: #{tpu_custom_call.1} parent=11 // pred_check
          %p625 = pneg %p481
        $region26: #{tpu_custom_call.1} parent=11 // pred_check_branch
          %627 = sbr.rel (%p625) target = $region28
        $region27: #{tpu_custom_call.1} parent=11 // pred_region
          _
        $region28: #{tpu_custom_call.1} parent=11 // pred_fallthru
          _
        // Predicated region
        $region29: #{tpu_custom_call.1} parent=11 // pred_check
          %p628 = pneg %p502
        $region30: #{tpu_custom_call.1} parent=11 // pred_check_branch
          %630 = sbr.rel (%p628) target = $region32
        $region31: #{tpu_custom_call.1} parent=11 // pred_region
          %s632 = ssub.s32 1024, 1024
          %633 = vsyncadd [#allocation20], %s632
          %s634 = sshll.u32 [#allocation21], 4
          %s635 = int_to_ptr.vmem [resolvable:$true] %s634
          %640 = dma.hbm_to_vmem [thread:$0]  %s17, 1024, %s635, [#allocation20], 64, 64, 4
        $region32: #{tpu_custom_call.1} parent=11 // pred_fallthru
          _
        // Predicated region
        $region33: #{tpu_custom_call.1} parent=11 // pred_check
          %p641 = pneg %p523
        $region34: #{tpu_custom_call.1} parent=11 // pred_check_branch
          %643 = sbr.rel (%p641) target = $region36
        $region35: #{tpu_custom_call.1} parent=11 // pred_region
          _
        $region36: #{tpu_custom_call.1} parent=11 // pred_fallthru
          _
        // Predicated region
        $region37: #{tpu_custom_call.1} parent=11 // pred_check
          %p644 = pneg %p544
        $region38: #{tpu_custom_call.1} parent=11 // pred_check_branch
          %646 = sbr.rel (%p644) target = $region40
        $region39: #{tpu_custom_call.1} parent=11 // pred_region
          %s648 = ssub.s32 1024, 1024
          %649 = vsyncadd [#allocation23], %s648
          %s650 = sshll.u32 [#allocation22], 4
          %s651 = int_to_ptr.vmem [resolvable:$true] %s650
          %656 = dma.hbm_to_vmem [thread:$0]  %s19, 1024, %s651, [#allocation23], 64, 64, 4
        $region40: #{tpu_custom_call.1} parent=11 // pred_fallthru
          _
        // Predicated region
        $region41: #{tpu_custom_call.1} parent=11 // pred_check
          %p657 = pneg %p565
        $region42: #{tpu_custom_call.1} parent=11 // pred_check_branch
          %659 = sbr.rel (%p657) target = $region44
        $region43: #{tpu_custom_call.1} parent=11 // pred_region
          _
        $region44: #{tpu_custom_call.1} parent=11 // pred_fallthru
          _
      $region12: #{tpu_custom_call.1} parent=5 // pred_fallthru
        _
      %p660 = scmp.lt.s32.totalorder %s47, 4
      // Predicated region
      $region45: #{tpu_custom_call.1} parent=5 // pred_check
        %p661 = pneg %p660
      $region46: #{tpu_custom_call.1} parent=5 // pred_check_branch
        %663 = sbr.rel (%p661) target = $region48
      $region47: #{tpu_custom_call.1} parent=5 // pred_region
        // Predicated region
        $region49: #{tpu_custom_call.1} parent=47 // pred_check
          %p664 = pneg %p79
        $region50: #{tpu_custom_call.1} parent=47 // pred_check_branch
          %666 = sbr.rel (%p664) target = $region52
        $region51: #{tpu_custom_call.1} parent=47 // pred_region
          %s667 = sand.u32 %s69, 1
          %s668 = scalar_lea.sflag [#allocation5], %s667
          %s669 = sand.u32 %s69, 1
          %s670 = smul.addr %s669, 8
          %s671 = scalar_lea.vmem [#allocation4], %s670
          %s673 = ssub.s32 128, 128
          %674 = vsyncadd %s668, %s673
          %s675 = smul.addr %s54, 128
          %s676 = scalar_lea.hbm %s0, %s675
          %s678 = sshll.u32 %s671, 4
          %s679 = int_to_ptr.vmem [resolvable:$true] %s678
          %681 = dma.hbm_to_vmem [thread:$0]  %s676, 128, %s679, %s668
        $region52: #{tpu_custom_call.1} parent=47 // pred_fallthru
          _
        // Predicated region
        $region53: #{tpu_custom_call.1} parent=47 // pred_check
          %p682 = pneg %p105
        $region54: #{tpu_custom_call.1} parent=47 // pred_check_branch
          %684 = sbr.rel (%p682) target = $region56
        $region55: #{tpu_custom_call.1} parent=47 // pred_region
          %s685 = sand.u32 %s47, 1
          %s686 = scalar_lea.sflag [#allocation8], %s685
          %s687 = sand.u32 %s95, 1
          %s688 = scalar_lea.vmem [#allocation7], %s687
          %s690 = ssub.s32 16, 16
          %691 = vsyncadd %s686, %s690
          %s692 = smul.addr %s55, 16
          %s693 = scalar_lea.hbm %s1, %s692
          %s695 = sshll.u32 %s688, 4
          %s696 = int_to_ptr.vmem [resolvable:$true] %s695
          %698 = dma.hbm_to_vmem [thread:$0]  %s693, 16, %s696, %s686
        $region56: #{tpu_custom_call.1} parent=47 // pred_fallthru
          _
        // Predicated region
        $region57: #{tpu_custom_call.1} parent=47 // pred_check
          %p699 = pneg %p131
        $region58: #{tpu_custom_call.1} parent=47 // pred_check_branch
          %701 = sbr.rel (%p699) target = $region60
        $region59: #{tpu_custom_call.1} parent=47 // pred_region
          %s702 = sand.u32 %s47, 1
          %s703 = scalar_lea.sflag [#allocation8], %s702
          %s704 = sand.u32 %s121, 1
          %s705 = scalar_lea.vmem [#allocation9], %s704
          %s707 = ssub.s32 16, 16
          %708 = vsyncadd %s703, %s707
          %s709 = smul.addr %s55, 16
          %s710 = scalar_lea.hbm %s2, %s709
          %s712 = sshll.u32 %s705, 4
          %s713 = int_to_ptr.vmem [resolvable:$true] %s712
          %715 = dma.hbm_to_vmem [thread:$0]  %s710, 16, %s713, %s703
        $region60: #{tpu_custom_call.1} parent=47 // pred_fallthru
          _
        // Predicated region
        $region61: #{tpu_custom_call.1} parent=47 // pred_check
          %p716 = pneg %p157
        $region62: #{tpu_custom_call.1} parent=47 // pred_check_branch
          %718 = sbr.rel (%p716) target = $region64
        $region63: #{tpu_custom_call.1} parent=47 // pred_region
          %s719 = sand.u32 %s47, 1
          %s720 = scalar_lea.sflag [#allocation11], %s719
          %s721 = sand.u32 %s147, 1
          %s722 = smul.addr %s721, 192
          %s723 = scalar_lea.vmem [#allocation10], %s722
          %s725 = ssub.s32 3072, 3072
          %726 = vsyncadd %s720, %s725
          %s727 = smul.addr %s55, 48
          %s728 = smul.addr %s727, 64
          %s729 = scalar_lea.hbm %s3, %s728
          %s730 = sshll.u32 %s723, 4
          %s731 = int_to_ptr.vmem [resolvable:$true] %s730
          %736 = dma.hbm_to_vmem [thread:$0]  %s729, 3072, %s731, %s720, 192, 192, 12
        $region64: #{tpu_custom_call.1} parent=47 // pred_fallthru
          _
        // Predicated region
        $region65: #{tpu_custom_call.1} parent=47 // pred_check
          %p737 = pneg %p183
        $region66: #{tpu_custom_call.1} parent=47 // pred_check_branch
          %739 = sbr.rel (%p737) target = $region68
        $region67: #{tpu_custom_call.1} parent=47 // pred_region
          %p740 = scmp.lt.s32.totalorder %s55, 1
          %s741 = scalar_select %p740, %s55, 1
          %s742 = smul.addr %s741, 3
          %s743 = scalar_lea.vmem %s4, %s742
        $region68: #{tpu_custom_call.1} parent=47 // pred_fallthru
          _
        // Predicated region
        $region69: #{tpu_custom_call.1} parent=47 // pred_check
          %p744 = pneg %p209
        $region70: #{tpu_custom_call.1} parent=47 // pred_check_branch
          %746 = sbr.rel (%p744) target = $region72
        $region71: #{tpu_custom_call.1} parent=47 // pred_region
          %s747 = sand.u32 %s47, 1
          %s748 = scalar_lea.sflag [#allocation11], %s747
          %s749 = sand.u32 %s199, 1
          %s750 = smul.addr %s749, 64
          %s751 = scalar_lea.vmem [#allocation12], %s750
          %s753 = ssub.s32 1024, 1024
          %754 = vsyncadd %s748, %s753
          %s755 = smul.addr %s55, 16
          %s756 = smul.addr %s755, 64
          %s757 = scalar_lea.hbm %s5, %s756
          %s758 = sshll.u32 %s751, 4
          %s759 = int_to_ptr.vmem [resolvable:$true] %s758
          %764 = dma.hbm_to_vmem [thread:$0]  %s757, 1024, %s759, %s748, 64, 64, 4
        $region72: #{tpu_custom_call.1} parent=47 // pred_fallthru
          _
        // Predicated region
        $region73: #{tpu_custom_call.1} parent=47 // pred_check
          %p765 = pneg %p235
        $region74: #{tpu_custom_call.1} parent=47 // pred_check_branch
          %767 = sbr.rel (%p765) target = $region76
        $region75: #{tpu_custom_call.1} parent=47 // pred_region
          %p768 = scmp.lt.s32.totalorder %s55, 1
          %s769 = scalar_select %p768, %s55, 1
          %s770 = scalar_lea.vmem %s6, %s769
        $region76: #{tpu_custom_call.1} parent=47 // pred_fallthru
          _
        // Predicated region
        $region77: #{tpu_custom_call.1} parent=47 // pred_check
          %p771 = pneg %p261
        $region78: #{tpu_custom_call.1} parent=47 // pred_check_branch
          %773 = sbr.rel (%p771) target = $region80
        $region79: #{tpu_custom_call.1} parent=47 // pred_region
          %s774 = sand.u32 %s47, 1
          %s775 = scalar_lea.sflag [#allocation14], %s774
          %s776 = sand.u32 %s251, 1
          %s777 = scalar_lea.vmem [#allocation13], %s776
          %s779 = ssub.s32 16, 16
          %780 = vsyncadd %s775, %s779
          %s781 = smul.addr %s55, 16
          %s782 = scalar_lea.hbm %s7, %s781
          %s784 = sshll.u32 %s777, 4
          %s785 = int_to_ptr.vmem [resolvable:$true] %s784
          %787 = dma.hbm_to_vmem [thread:$0]  %s782, 16, %s785, %s775
        $region80: #{tpu_custom_call.1} parent=47 // pred_fallthru
          _
        // Predicated region
        $region81: #{tpu_custom_call.1} parent=47 // pred_check
          %p788 = pneg %p287
        $region82: #{tpu_custom_call.1} parent=47 // pred_check_branch
          %790 = sbr.rel (%p788) target = $region84
        $region83: #{tpu_custom_call.1} parent=47 // pred_region
          %s791 = sand.u32 %s47, 1
          %s792 = scalar_lea.sflag [#allocation14], %s791
          %s793 = sand.u32 %s277, 1
          %s794 = scalar_lea.vmem [#allocation15], %s793
          %s796 = ssub.s32 16, 16
          %797 = vsyncadd %s792, %s796
          %s798 = smul.addr %s55, 16
          %s799 = scalar_lea.hbm %s8, %s798
          %s801 = sshll.u32 %s794, 4
          %s802 = int_to_ptr.vmem [resolvable:$true] %s801
          %804 = dma.hbm_to_vmem [thread:$0]  %s799, 16, %s802, %s792
        $region84: #{tpu_custom_call.1} parent=47 // pred_fallthru
          _
        // Predicated region
        $region85: #{tpu_custom_call.1} parent=47 // pred_check
          %p805 = pneg %p313
        $region86: #{tpu_custom_call.1} parent=47 // pred_check_branch
          %807 = sbr.rel (%p805) target = $region88
        $region87: #{tpu_custom_call.1} parent=47 // pred_region
          %s808 = sand.u32 %s47, 1
          %s809 = scalar_lea.sflag [#allocation17], %s808
          %s810 = sand.u32 %s303, 1
          %s811 = smul.addr %s810, 256
          %s812 = scalar_lea.vmem [#allocation16], %s811
          %s814 = ssub.s32 4096, 4096
          %815 = vsyncadd %s809, %s814
          %s816 = smul.addr %s55, 64
          %s817 = smul.addr %s816, 64
          %s818 = scalar_lea.hbm %s9, %s817
          %s819 = sshll.u32 %s812, 4
          %s820 = int_to_ptr.vmem [resolvable:$true] %s819
          %825 = dma.hbm_to_vmem [thread:$0]  %s818, 4096, %s820, %s809, 256, 256, 16
        $region88: #{tpu_custom_call.1} parent=47 // pred_fallthru
          _
        // Predicated region
        $region89: #{tpu_custom_call.1} parent=47 // pred_check
          %p826 = pneg %p339
        $region90: #{tpu_custom_call.1} parent=47 // pred_check_branch
          %828 = sbr.rel (%p826) target = $region92
        $region91: #{tpu_custom_call.1} parent=47 // pred_region
          %p829 = scmp.lt.s32.totalorder %s55, 1
          %s830 = scalar_select %p829, %s55, 1
          %s831 = smul.addr %s830, 4
          %s832 = scalar_lea.vmem %s10, %s831
        $region92: #{tpu_custom_call.1} parent=47 // pred_fallthru
          _
        // Predicated region
        $region93: #{tpu_custom_call.1} parent=47 // pred_check
          %p833 = pneg %p365
        $region94: #{tpu_custom_call.1} parent=47 // pred_check_branch
          %835 = sbr.rel (%p833) target = $region96
        $region95: #{tpu_custom_call.1} parent=47 // pred_region
          %s836 = sand.u32 %s47, 1
          %s837 = scalar_lea.sflag [#allocation17], %s836
          %s838 = sand.u32 %s355, 1
          %s839 = smul.addr %s838, 256
          %s840 = scalar_lea.vmem [#allocation18], %s839
          %s842 = ssub.s32 4096, 4096
          %843 = vsyncadd %s837, %s842
          %s844 = smul.addr %s55, 64
          %s845 = smul.addr %s844, 64
          %s846 = scalar_lea.hbm %s11, %s845
          %s847 = sshll.u32 %s840, 4
          %s848 = int_to_ptr.vmem [resolvable:$true] %s847
          %853 = dma.hbm_to_vmem [thread:$0]  %s846, 4096, %s848, %s837, 64, 64, 4
        $region96: #{tpu_custom_call.1} parent=47 // pred_fallthru
          _
        // Predicated region
        $region97: #{tpu_custom_call.1} parent=47 // pred_check
          %p854 = pneg %p391
        $region98: #{tpu_custom_call.1} parent=47 // pred_check_branch
          %856 = sbr.rel (%p854) target = $region100
        $region99: #{tpu_custom_call.1} parent=47 // pred_region
          %p857 = scmp.lt.s32.totalorder %s55, 1
          %s858 = scalar_select %p857, %s55, 1
          %s859 = scalar_lea.vmem %s12, %s858
        $region100: #{tpu_custom_call.1} parent=47 // pred_fallthru
          _
      $region48: #{tpu_custom_call.1} parent=5 // pred_fallthru
        _
      %p860 = scmp.le.s32.totalorder 1, %s47
      %p861 = scmp.lt.s32.totalorder %s47, 5
      %p862 = pnand %p860, %p861
      %p863 = pneg %p862
      // Predicated region
      $region101: #{tpu_custom_call.1} parent=5 // pred_check
        _
      $region102: #{tpu_custom_call.1} parent=5 // pred_check_branch
        %865 = sbr.rel (%p862) target = $region104
      $region103: #{tpu_custom_call.1} parent=5 // pred_region
        %s866 = ssub.s32 %s47, 1
        %s867 = sand.u32 %s72, 1
        %s868 = scalar_lea.sflag [#allocation5], %s867
        %s869 = sand.u32 %s72, 1
        %s870 = smul.addr %s869, 8
        %s871 = scalar_lea.vmem [#allocation4], %s870
        // Predicated region
        $region105: #{tpu_custom_call.1} parent=103 // pred_check
          %p872 = pneg %p85
        $region106: #{tpu_custom_call.1} parent=103 // pred_check_branch
          %874 = sbr.rel (%p872) target = $region108
        $region107: #{tpu_custom_call.1} parent=103 // pred_region
          %875 = dma.done %s868, 128
        $region108: #{tpu_custom_call.1} parent=103 // pred_fallthru
          _
        %s876 = sand.u32 %s52, 1
        %s877 = scalar_lea.sflag [#allocation8], %s876
        %s878 = sand.u32 %s98, 1
        %s879 = scalar_lea.vmem [#allocation7], %s878
        // Predicated region
        $region109: #{tpu_custom_call.1} parent=103 // pred_check
          %p880 = pneg %p111
        $region110: #{tpu_custom_call.1} parent=103 // pred_check_branch
          %882 = sbr.rel (%p880) target = $region112
        $region111: #{tpu_custom_call.1} parent=103 // pred_region
          %883 = dma.done %s877, 16
        $region112: #{tpu_custom_call.1} parent=103 // pred_fallthru
          _
        %s884 = sand.u32 %s52, 1
        %s885 = scalar_lea.sflag [#allocation8], %s884
        %s886 = sand.u32 %s124, 1
        %s887 = scalar_lea.vmem [#allocation9], %s886
        // Predicated region
        $region113: #{tpu_custom_call.1} parent=103 // pred_check
          %p888 = pneg %p137
        $region114: #{tpu_custom_call.1} parent=103 // pred_check_branch
          %890 = sbr.rel (%p888) target = $region116
        $region115: #{tpu_custom_call.1} parent=103 // pred_region
          %891 = dma.done %s885, 16
        $region116: #{tpu_custom_call.1} parent=103 // pred_fallthru
          _
        %s892 = sand.u32 %s52, 1
        %s893 = scalar_lea.sflag [#allocation11], %s892
        %s894 = sand.u32 %s150, 1
        %s895 = smul.addr %s894, 192
        %s896 = scalar_lea.vmem [#allocation10], %s895
        // Predicated region
        $region117: #{tpu_custom_call.1} parent=103 // pred_check
          %p897 = pneg %p163
        $region118: #{tpu_custom_call.1} parent=103 // pred_check_branch
          %899 = sbr.rel (%p897) target = $region120
        $region119: #{tpu_custom_call.1} parent=103 // pred_region
          %900 = dma.done %s893, 3072
        $region120: #{tpu_custom_call.1} parent=103 // pred_fallthru
          _
        %s901 = sand.u32 %s52, 1
        %s902 = scalar_lea.sflag [#allocation11], %s901
        %s903 = sand.u32 %s202, 1
        %s904 = smul.addr %s903, 64
        %s905 = scalar_lea.vmem [#allocation12], %s904
        // Predicated region
        $region121: #{tpu_custom_call.1} parent=103 // pred_check
          %p906 = pneg %p215
        $region122: #{tpu_custom_call.1} parent=103 // pred_check_branch
          %908 = sbr.rel (%p906) target = $region124
        $region123: #{tpu_custom_call.1} parent=103 // pred_region
          %909 = dma.done %s902, 1024
        $region124: #{tpu_custom_call.1} parent=103 // pred_fallthru
          _
        %s910 = sand.u32 %s52, 1
        %s911 = scalar_lea.sflag [#allocation14], %s910
        %s912 = sand.u32 %s254, 1
        %s913 = scalar_lea.vmem [#allocation13], %s912
        // Predicated region
        $region125: #{tpu_custom_call.1} parent=103 // pred_check
          %p914 = pneg %p267
        $region126: #{tpu_custom_call.1} parent=103 // pred_check_branch
          %916 = sbr.rel (%p914) target = $region128
        $region127: #{tpu_custom_call.1} parent=103 // pred_region
          %917 = dma.done %s911, 16
        $region128: #{tpu_custom_call.1} parent=103 // pred_fallthru
          _
        %s918 = sand.u32 %s52, 1
        %s919 = scalar_lea.sflag [#allocation14], %s918
        %s920 = sand.u32 %s280, 1
        %s921 = scalar_lea.vmem [#allocation15], %s920
        // Predicated region
        $region129: #{tpu_custom_call.1} parent=103 // pred_check
          %p922 = pneg %p293
        $region130: #{tpu_custom_call.1} parent=103 // pred_check_branch
          %924 = sbr.rel (%p922) target = $region132
        $region131: #{tpu_custom_call.1} parent=103 // pred_region
          %925 = dma.done %s919, 16
        $region132: #{tpu_custom_call.1} parent=103 // pred_fallthru
          _
        %s926 = sand.u32 %s52, 1
        %s927 = scalar_lea.sflag [#allocation17], %s926
        %s928 = sand.u32 %s306, 1
        %s929 = smul.addr %s928, 256
        %s930 = scalar_lea.vmem [#allocation16], %s929
        // Predicated region
        $region133: #{tpu_custom_call.1} parent=103 // pred_check
          %p931 = pneg %p319
        $region134: #{tpu_custom_call.1} parent=103 // pred_check_branch
          %933 = sbr.rel (%p931) target = $region136
        $region135: #{tpu_custom_call.1} parent=103 // pred_region
          %934 = dma.done %s927, 4096
        $region136: #{tpu_custom_call.1} parent=103 // pred_fallthru
          _
        %s935 = sand.u32 %s52, 1
        %s936 = scalar_lea.sflag [#allocation17], %s935
        %s937 = sand.u32 %s358, 1
        %s938 = smul.addr %s937, 256
        %s939 = scalar_lea.vmem [#allocation18], %s938
        // Predicated region
        $region137: #{tpu_custom_call.1} parent=103 // pred_check
          %p940 = pneg %p371
        $region138: #{tpu_custom_call.1} parent=103 // pred_check_branch
          %942 = sbr.rel (%p940) target = $region140
        $region139: #{tpu_custom_call.1} parent=103 // pred_region
          %943 = dma.done %s936, 4096
        $region140: #{tpu_custom_call.1} parent=103 // pred_fallthru
          _
        // Predicated region
        $region141: #{tpu_custom_call.1} parent=103 // pred_check
          %p944 = pneg %p460
        $region142: #{tpu_custom_call.1} parent=103 // pred_check_branch
          %946 = sbr.rel (%p944) target = $region144
        $region143: #{tpu_custom_call.1} parent=103 // pred_region
          %947 = dma.done [#allocation20], 1024
        $region144: #{tpu_custom_call.1} parent=103 // pred_fallthru
          _
        // Predicated region
        $region145: #{tpu_custom_call.1} parent=103 // pred_check
          %p948 = pneg %p502
        $region146: #{tpu_custom_call.1} parent=103 // pred_check_branch
          %950 = sbr.rel (%p948) target = $region148
        $region147: #{tpu_custom_call.1} parent=103 // pred_region
          %951 = dma.done [#allocation20], 1024
        $region148: #{tpu_custom_call.1} parent=103 // pred_fallthru
          _
        // Predicated region
        $region149: #{tpu_custom_call.1} parent=103 // pred_check
          %p952 = pneg %p544
        $region150: #{tpu_custom_call.1} parent=103 // pred_check_branch
          %954 = sbr.rel (%p952) target = $region152
        $region151: #{tpu_custom_call.1} parent=103 // pred_region
          %955 = dma.done [#allocation23], 1024
        $region152: #{tpu_custom_call.1} parent=103 // pred_fallthru
          _
        %s956 = sand.u32 %s72, 1
        %s957 = scalar_lea.sflag [#allocation5], %s956
        %s958 = sand.u32 %s72, 1
        %s959 = smul.addr %s958, 8
        %s960 = scalar_lea.vmem [#allocation4], %s959
        %p961 = pneg %p85
        %p962 = pneg %p82
        %s963 = sand.u32 %s52, 1
        %s964 = scalar_lea.sflag [#allocation8], %s963
        %s965 = sand.u32 %s98, 1
        %s966 = scalar_lea.vmem [#allocation7], %s965
        %p967 = pneg %p111
        %p968 = pneg %p108
        %s969 = sand.u32 %s52, 1
        %s970 = scalar_lea.sflag [#allocation8], %s969
        %s971 = sand.u32 %s124, 1
        %s972 = scalar_lea.vmem [#allocation9], %s971
        %p973 = pneg %p137
        %p974 = pneg %p134
        %s975 = sand.u32 %s52, 1
        %s976 = scalar_lea.sflag [#allocation11], %s975
        %s977 = sand.u32 %s150, 1
        %s978 = smul.addr %s977, 192
        %s979 = scalar_lea.vmem [#allocation10], %s978
        %p980 = pneg %p163
        %p981 = pneg %p160
        %p982 = scmp.lt.s32.totalorder %s57, 1
        %s983 = scalar_select %p982, %s57, 1
        %s984 = smul.addr %s983, 3
        %s985 = scalar_lea.vmem %s4, %s984
        %p986 = pneg %p189
        %p987 = pneg %p186
        %s988 = sand.u32 %s52, 1
        %s989 = scalar_lea.sflag [#allocation11], %s988
        %s990 = sand.u32 %s202, 1
        %s991 = smul.addr %s990, 64
        %s992 = scalar_lea.vmem [#allocation12], %s991
        %p993 = pneg %p215
        %p994 = pneg %p212
        %p995 = scmp.lt.s32.totalorder %s57, 1
        %s996 = scalar_select %p995, %s57, 1
        %s997 = scalar_lea.vmem %s6, %s996
        %p998 = pneg %p241
        %p999 = pneg %p238
        %s1000 = sand.u32 %s52, 1
        %s1001 = scalar_lea.sflag [#allocation14], %s1000
        %s1002 = sand.u32 %s254, 1
        %s1003 = scalar_lea.vmem [#allocation13], %s1002
        %p1004 = pneg %p267
        %p1005 = pneg %p264
        %s1006 = sand.u32 %s52, 1
        %s1007 = scalar_lea.sflag [#allocation14], %s1006
        %s1008 = sand.u32 %s280, 1
        %s1009 = scalar_lea.vmem [#allocation15], %s1008
        %p1010 = pneg %p293
        %p1011 = pneg %p290
        %s1012 = sand.u32 %s52, 1
        %s1013 = scalar_lea.sflag [#allocation17], %s1012
        %s1014 = sand.u32 %s306, 1
        %s1015 = smul.addr %s1014, 256
        %s1016 = scalar_lea.vmem [#allocation16], %s1015
        %p1017 = pneg %p319
        %p1018 = pneg %p316
        %p1019 = scmp.lt.s32.totalorder %s57, 1
        %s1020 = scalar_select %p1019, %s57, 1
        %s1021 = smul.addr %s1020, 4
        %s1022 = scalar_lea.vmem %s10, %s1021
        %p1023 = pneg %p345
        %p1024 = pneg %p342
        %s1025 = sand.u32 %s52, 1
        %s1026 = scalar_lea.sflag [#allocation17], %s1025
        %s1027 = sand.u32 %s358, 1
        %s1028 = smul.addr %s1027, 256
        %s1029 = scalar_lea.vmem [#allocation18], %s1028
        %p1030 = pneg %p371
        %p1031 = pneg %p368
        %p1032 = scmp.lt.s32.totalorder %s57, 1
        %s1033 = scalar_select %p1032, %s57, 1
        %s1034 = scalar_lea.vmem %s12, %s1033
        %p1035 = pneg %p397
        %p1036 = pneg %p394
        %p1037 = pneg %p418
        %p1038 = pneg %p415
        %p1039 = pneg %p439
        %p1040 = pneg %p436
        %p1041 = pneg %p460
        %p1042 = pneg %p457
        %p1043 = pneg %p481
        %p1044 = pneg %p478
        %p1045 = pneg %p502
        %p1046 = pneg %p499
        %p1047 = pneg %p523
        %p1048 = pneg %p520
        %p1049 = pneg %p544
        %p1050 = pneg %p541
        %p1051 = pneg %p565
        %p1052 = pneg %p562
        %p1053 = pneg %p591
        %p1054 = pneg %p588
        %s1055 = sand.u32 %s578, 1
        %s1056 = scalar_lea.sflag [#allocation6], %s1055
        %s1057 = sand.u32 %s578, 1
        %s1058 = scalar_lea.vmem [#allocation24], %s1057
        %p1059 = scmp.lt.s32.totalorder %s57, 1
        %s1060 = scalar_select %p1059, %s57, 1
        %s1061 = smul.addr %s1060, 3
        %s1062 = scalar_lea.vmem %s4, %s1061
        %p1063 = scmp.lt.s32.totalorder %s57, 1
        %s1064 = scalar_select %p1063, %s57, 1
        %s1065 = scalar_lea.vmem %s6, %s1064
        %p1066 = scmp.lt.s32.totalorder %s57, 1
        %s1067 = scalar_select %p1066, %s57, 1
        %s1068 = smul.addr %s1067, 4
        %s1069 = scalar_lea.vmem %s10, %s1068
        %p1070 = scmp.lt.s32.totalorder %s57, 1
        %s1071 = scalar_select %p1070, %s57, 1
        %s1072 = scalar_lea.vmem %s12, %s1071
        %p1074 = scmp.eq.s32.totalorder %s57, 0
        // Predicated region
        $region153: #{tpu_custom_call.1} parent=103 // pred_check
          %p1075 = pneg %p1074
        $region154: #{tpu_custom_call.1} parent=103 // pred_check_branch
          %1077 = sbr.rel (%p1075) target = $region156
        $region155: #{tpu_custom_call.1} parent=103 // pred_region
          %v1078 = vld [vmem:[%s871] sm:$0xff]
          %1079 = vst [vmem:[#allocation2] sm:$0xff] %v1078
        $region156: #{tpu_custom_call.1} parent=103 // pred_fallthru
          _
        %v1080 = vld [vmem:[#allocation2] sm:$0xff]
        %v1081 = vld [vmem:[%s879] sm:$0x1]
        %v1082 = vld [vmem:[%s887] sm:$0x1]
        %1083 = vadd.xlane.f32.xlu0 %v1080
        %v1084 = vpop.xlane.xlu0 %1083
        %v1085 = vrcp.pop 128.0
        %v1086 = vmul.f32 %v1084, %v1085
        %v1087 = vsub.f32 %v1080, %v1086
        %v1088 = vmul.f32 %v1087, %v1087
        %1089 = vadd.xlane.f32.xlu0 %v1088
        %v1090 = vpop.xlane.xlu0 %1089
        %v1091 = vmul.f32 %v1090, %v1085
        %v1092 = vadd.f32 %v1091, 1e-05
        %v1093 = vrsqrt.pop %v1092
        %v1094 = vmul.f32 %v1087, %v1093
        %v1096 = vlaneseq
        %v1097 = vshrl.u32 %v1096, 7
        %v1098 = vsub.s32 0, %v1097
        %v1099 = vrot.slane %v1081, %v1098
        %v1101 = vmul.f32 %v1094, %v1099
        %v1103 = vlaneseq
        %v1104 = vshrl.u32 %v1103, 7
        %v1105 = vsub.s32 0, %v1104
        %v1106 = vrot.slane %v1082, %v1105
        %v1108 = vadd.f32 %v1101, %v1106
        %v1109 = vpack.c.bf16 %v1108, %v1108
        %v1110 = vld [vmem:[%s896] sm:$0xff]
        %v1111 = vld [vmem:[%s896 + $0x8] sm:$0xf]
        %v1112 = vld [vmem:[%s896 + $0xc] sm:$0xff]
        %v1113 = vld [vmem:[%s896 + $0x14] sm:$0xf]
        %v1114 = vld [vmem:[%s896 + $0x18] sm:$0xff]
        %v1115 = vld [vmem:[%s896 + $0x20] sm:$0xf]
        %v1116 = vld [vmem:[%s896 + $0x24] sm:$0xff]
        %v1117 = vld [vmem:[%s896 + $0x2c] sm:$0xf]
        %v1118 = vld [vmem:[%s896 + $0x30] sm:$0xff]
        %v1119 = vld [vmem:[%s896 + $0x38] sm:$0xf]
        %v1120 = vld [vmem:[%s896 + $0x3c] sm:$0xff]
        %v1121 = vld [vmem:[%s896 + $0x44] sm:$0xf]
        %v1122 = vld [vmem:[%s896 + $0x48] sm:$0xff]
        %v1123 = vld [vmem:[%s896 + $0x50] sm:$0xf]
        %v1124 = vld [vmem:[%s896 + $0x54] sm:$0xff]
        %v1125 = vld [vmem:[%s896 + $0x5c] sm:$0xf]
        %v1126 = vld [vmem:[%s896 + $0x60] sm:$0xff]
        %v1127 = vld [vmem:[%s896 + $0x68] sm:$0xf]
        %v1128 = vld [vmem:[%s896 + $0x6c] sm:$0xff]
        %v1129 = vld [vmem:[%s896 + $0x74] sm:$0xf]
        %v1130 = vld [vmem:[%s896 + $0x78] sm:$0xff]
        %v1131 = vld [vmem:[%s896 + $0x80] sm:$0xf]
        %v1132 = vld [vmem:[%s896 + $0x84] sm:$0xff]
        %v1133 = vld [vmem:[%s896 + $0x8c] sm:$0xf]
        %v1134 = vld [vmem:[%s896 + $0x90] sm:$0xff]
        %v1135 = vld [vmem:[%s896 + $0x98] sm:$0xf]
        %v1136 = vld [vmem:[%s896 + $0x9c] sm:$0xff]
        %v1137 = vld [vmem:[%s896 + $0xa4] sm:$0xf]
        %v1138 = vld [vmem:[%s896 + $0xa8] sm:$0xff]
        %v1139 = vld [vmem:[%s896 + $0xb0] sm:$0xf]
        %v1140 = vld [vmem:[%s896 + $0xb4] sm:$0xff]
        %v1141 = vld [vmem:[%s896 + $0xbc] sm:$0xf]
        %v1142 = vld [vmem:[%s1062] sm:$0x7]
        %v1144 = vlaneseq
        %v1145 = vshrl.u32 %v1144, 7
        %v1146 = vsub.s32 0, %v1145
        %v1147 = vrot.slane %v1142, %v1146
        %v1148 = vlaneseq
        %v1149 = vshrl.u32 %v1148, 7
        %v1150 = vsub.s32 1, %v1149
        %v1151 = vrot.slane %v1142, %v1150
        %v1152 = vlaneseq
        %v1153 = vshrl.u32 %v1152, 7
        %v1154 = vsub.s32 2, %v1153
        %v1155 = vrot.slane %v1142, %v1154
        %v1191 = vunpack.c.l.b16 %v1110
        %v1192 = vunpack.c.h.b16 %v1110
        %v1193 = vunpack.c.l.b16 %v1111
        %v1194 = vunpack.c.l.b16 %v1112
        %v1195 = vunpack.c.h.b16 %v1112
        %v1196 = vunpack.c.l.b16 %v1113
        %v1197 = vunpack.c.l.b16 %v1114
        %v1198 = vunpack.c.h.b16 %v1114
        %v1199 = vunpack.c.l.b16 %v1115
        %v1200 = vunpack.c.l.b16 %v1116
        %v1201 = vunpack.c.h.b16 %v1116
        %v1202 = vunpack.c.l.b16 %v1117
        %v1203 = vunpack.c.l.b16 %v1118
        %v1204 = vunpack.c.h.b16 %v1118
        %v1205 = vunpack.c.l.b16 %v1119
        %v1206 = vunpack.c.l.b16 %v1120
        %v1207 = vunpack.c.h.b16 %v1120
        %v1208 = vunpack.c.l.b16 %v1121
        %v1209 = vunpack.c.l.b16 %v1122
        %v1210 = vunpack.c.h.b16 %v1122
        %v1211 = vunpack.c.l.b16 %v1123
        %v1212 = vunpack.c.l.b16 %v1124
        %v1213 = vunpack.c.h.b16 %v1124
        %v1214 = vunpack.c.l.b16 %v1125
        %v1215 = vunpack.c.l.b16 %v1126
        %v1216 = vunpack.c.h.b16 %v1126
        %v1217 = vunpack.c.l.b16 %v1127
        %v1218 = vunpack.c.l.b16 %v1128
        %v1219 = vunpack.c.h.b16 %v1128
        %v1220 = vunpack.c.l.b16 %v1129
        %v1221 = vunpack.c.l.b16 %v1130
        %v1222 = vunpack.c.h.b16 %v1130
        %v1223 = vunpack.c.l.b16 %v1131
        %v1224 = vunpack.c.l.b16 %v1132
        %v1225 = vunpack.c.h.b16 %v1132
        %v1226 = vunpack.c.l.b16 %v1133
        %v1227 = vunpack.c.l.b16 %v1134
        %v1228 = vunpack.c.h.b16 %v1134
        %v1229 = vunpack.c.l.b16 %v1135
        %v1230 = vunpack.c.l.b16 %v1136
        %v1231 = vunpack.c.h.b16 %v1136
        %v1232 = vunpack.c.l.b16 %v1137
        %v1233 = vunpack.c.l.b16 %v1138
        %v1234 = vunpack.c.h.b16 %v1138
        %v1235 = vunpack.c.l.b16 %v1139
        %v1236 = vunpack.c.l.b16 %v1140
        %v1237 = vunpack.c.h.b16 %v1140
        %v1238 = vunpack.c.l.b16 %v1141
        %v1239 = vpack.c.b16 %v1194, %v1191
        %v1240 = vpack.c.b16 %v1195, %v1192
        %v1241 = vpack.c.b16 %v1196, %v1193
        %v1242 = vpack.c.b16 %v1200, %v1197
        %v1243 = vpack.c.b16 %v1201, %v1198
        %v1244 = vpack.c.b16 %v1202, %v1199
        %v1245 = vpack.c.b16 %v1206, %v1203
        %v1246 = vpack.c.b16 %v1207, %v1204
        %v1247 = vpack.c.b16 %v1208, %v1205
        %v1248 = vpack.c.b16 %v1212, %v1209
        %v1249 = vpack.c.b16 %v1213, %v1210
        %v1250 = vpack.c.b16 %v1214, %v1211
        %v1251 = vpack.c.b16 %v1218, %v1215
        %v1252 = vpack.c.b16 %v1219, %v1216
        %v1253 = vpack.c.b16 %v1220, %v1217
        %v1254 = vpack.c.b16 %v1224, %v1221
        %v1255 = vpack.c.b16 %v1225, %v1222
        %v1256 = vpack.c.b16 %v1226, %v1223
        %v1257 = vpack.c.b16 %v1230, %v1227
        %v1258 = vpack.c.b16 %v1231, %v1228
        %v1259 = vpack.c.b16 %v1232, %v1229
        %v1260 = vpack.c.b16 %v1236, %v1233
        %v1261 = vpack.c.b16 %v1237, %v1234
        %v1262 = vpack.c.b16 %v1238, %v1235
        %1287 = vmatprep.subr.bf16.mxu0 %v1261
        %1288 = vmatpush1.bf16.msra.mxu0 %v1260
        %1289 = vmatprep.subr.bf16.mxu0 %v1258
        %1290 = vmatpush1.bf16.msra.mxu0 %v1257
        %1291 = vmatprep.subr.bf16.mxu0 %v1255
        %1292 = vmatpush1.bf16.msra.mxu0 %v1254
        %1293 = vmatprep.subr.bf16.mxu0 %v1252
        %1294 = vmatpush1.bf16.msra.mxu0 %v1251
        %1295 = vmatprep.subr.bf16.mxu0 %v1249
        %1296 = vmatpush1.bf16.msra.mxu0 %v1248
        %1297 = vmatprep.subr.bf16.mxu0 %v1246
        %1298 = vmatpush1.bf16.msra.mxu0 %v1245
        %1299 = vmatprep.subr.bf16.mxu0 %v1243
        %1300 = vmatpush1.bf16.msra.mxu0 %v1242
        %1301 = vmatprep.subr.bf16.mxu0 %v1240
        %1302 = vmatpush1.bf16.msra.mxu0 %v1239
        %1303 = vmatprep.subr.bf16.mxu0 0
        %1304 = vmatpush2.bf16.msra.mxu0 0
        %1305 = vmatprep.subr.bf16.mxu0 0
        %1306 = vmatpush2.bf16.msra.mxu0 0
        %1307 = vmatprep.subr.bf16.mxu0 0
        %1308 = vmatpush2.bf16.msra.mxu0 0
        %1309 = vmatprep.subr.bf16.mxu0 0
        %1310 = vmatpush2.bf16.msra.mxu0 0
        %1311 = vmatprep.subr.bf16.mxu0 0
        %1312 = vmatpush2.bf16.msra.mxu0 0
        %1313 = vmatprep.subr.bf16.mxu0 0
        %1314 = vmatpush2.bf16.msra.mxu0 0
        %1315 = vmatprep.subr.bf16.mxu0 0
        %1316 = vmatpush2.bf16.msra.mxu0 0
        %1317 = vmatprep.subr.bf16.mxu0 0
        %1318 = vmatpush2.bf16.msra.mxu0 0
        %1319 = vmatprep.mubr.bf16.mxu0 0
        %1320 = vmatmul.mubr.bf16.gmra.mxu0 %v1109
        %v1321 = vpop.f32.mrf.mxu0
        %v1322 = vadd.f32 %v1147, %v1321
        %v1323 = vpop.f32.mrf.mxu0
        %v1324 = vadd.f32 %v1151, %v1323
        %v1325 = vpop.f32.mrf.mxu0
        %v1326 = vpop.f32.mrf.mxu0
        %1327 = vdwg.mxu0
        %1328 = vmatprep.subr.bf16.mxu0 0
        %1329 = vmatpush1.bf16.msra.mxu0 %v1262
        %1330 = vmatprep.subr.bf16.mxu0 0
        %1331 = vmatpush1.bf16.msra.mxu0 %v1259
        %1332 = vmatprep.subr.bf16.mxu0 0
        %1333 = vmatpush1.bf16.msra.mxu0 %v1256
        %1334 = vmatprep.subr.bf16.mxu0 0
        %1335 = vmatpush1.bf16.msra.mxu0 %v1253
        %1336 = vmatprep.subr.bf16.mxu0 0
        %1337 = vmatpush1.bf16.msra.mxu0 %v1250
        %1338 = vmatprep.subr.bf16.mxu0 0
        %1339 = vmatpush1.bf16.msra.mxu0 %v1247
        %1340 = vmatprep.subr.bf16.mxu0 0
        %1341 = vmatpush1.bf16.msra.mxu0 %v1244
        %1342 = vmatprep.subr.bf16.mxu0 0
        %1343 = vmatpush1.bf16.msra.mxu0 %v1241
        %1344 = vmatprep.subr.bf16.mxu0 0
        %1345 = vmatpush2.bf16.msra.mxu0 0
        %1346 = vmatprep.subr.bf16.mxu0 0
        %1347 = vmatpush2.bf16.msra.mxu0 0
        %1348 = vmatprep.subr.bf16.mxu0 0
        %1349 = vmatpush2.bf16.msra.mxu0 0
        %1350 = vmatprep.subr.bf16.mxu0 0
        %1351 = vmatpush2.bf16.msra.mxu0 0
        %1352 = vmatprep.subr.bf16.mxu0 0
        %1353 = vmatpush2.bf16.msra.mxu0 0
        %1354 = vmatprep.subr.bf16.mxu0 0
        %1355 = vmatpush2.bf16.msra.mxu0 0
        %1356 = vmatprep.subr.bf16.mxu0 0
        %1357 = vmatpush2.bf16.msra.mxu0 0
        %1358 = vmatprep.subr.bf16.mxu0 0
        %1359 = vmatpush2.bf16.msra.mxu0 0
        %1360 = vmatprep.mubr.bf16.mxu0 0
        %1361 = vmatmul.mubr.bf16.gmra.mxu0 %v1109
        %v1362 = vpop.f32.mrf.mxu0
        %v1363 = vadd.f32 %v1155, %v1362
        %v1364 = vpop.f32.mrf.mxu0
        %v1365 = vpop.f32.mrf.mxu0
        %v1366 = vpop.f32.mrf.mxu0
        %1367 = vdwg.mxu0
        %v1368 = vmul.f32 %v1322, 0.17677669
        %v1369 = vpack.c.bf16 %v1368, %v1368
        %v1370 = vpack.c.bf16 %v1324, %v1324
        %v1371 = vpack.c.bf16 %v1363, %v1363
        %vm1372 = vcmask 261120
        %v1374 = vsel %vm1372, %v1369, 0
        %v1377 = vsel %vm1372, %v1370, 0
        %1379 = vmatprep.subr.bf16.mxu0 0
        %1380 = vmatpush1.bf16.xpose.msra.mxu0 0
        %1381 = vmatprep.subr.bf16.mxu0 0
        %1382 = vmatpush1.bf16.xpose.msra.mxu0 0
        %1383 = vmatprep.subr.bf16.mxu0 0
        %1384 = vmatpush1.bf16.xpose.msra.mxu0 0
        %1385 = vmatprep.subr.bf16.mxu0 0
        %1386 = vmatpush1.bf16.xpose.msra.mxu0 0
        %1387 = vmatprep.subr.bf16.mxu0 0
        %1388 = vmatpush1.bf16.xpose.msra.mxu0 0
        %1389 = vmatprep.subr.bf16.mxu0 0
        %1390 = vmatpush1.bf16.xpose.msra.mxu0 0
        %1391 = vmatprep.subr.bf16.mxu0 0
        %1392 = vmatpush1.bf16.xpose.msra.mxu0 0
        %1393 = vmatprep.subr.bf16.mxu0 0
        %1394 = vmatpush1.bf16.xpose.msra.mxu0 %v1377
        %1395 = vmatprep.subr.bf16.mxu0 0
        %1396 = vmatpush2.bf16.xpose.msra.mxu0 0
        %1397 = vmatprep.subr.bf16.mxu0 0
        %1398 = vmatpush2.bf16.xpose.msra.mxu0 0
        %1399 = vmatprep.subr.bf16.mxu0 0
        %1400 = vmatpush2.bf16.xpose.msra.mxu0 0
        %1401 = vmatprep.subr.bf16.mxu0 0
        %1402 = vmatpush2.bf16.xpose.msra.mxu0 0
        %1403 = vmatprep.subr.bf16.mxu0 0
        %1404 = vmatpush2.bf16.xpose.msra.mxu0 0
        %1405 = vmatprep.subr.bf16.mxu0 0
        %1406 = vmatpush2.bf16.xpose.msra.mxu0 0
        %1407 = vmatprep.subr.bf16.mxu0 0
        %1408 = vmatpush2.bf16.xpose.msra.mxu0 0
        %1409 = vmatprep.subr.bf16.mxu0 0
        %1410 = vmatpush2.bf16.xpose.msra.mxu0 0
        %1411 = vmatprep.mubr.bf16.mxu0 0
        %1412 = vmatmul.mubr.bf16.gmra.mxu0 %v1374
        %v1413 = vpop.f32.mrf.mxu0
        %v1414 = vadd.f32 0.0, %v1413
        %v1415 = vpop.f32.mrf.mxu0
        %v1416 = vpop.f32.mrf.mxu0
        %v1417 = vpop.f32.mrf.mxu0
        %1418 = vdwg.mxu0
        %vm1419 = vcmask 64512
        %v1420 = vsel %vm1419, %v1414, -inf
        %1421 = vmax.xlane.f32.xlu0 %v1420
        %v1422 = vpop.xlane.xlu0 %1421
        %v1423 = vsub.f32 %v1414, %v1422
        %v1424 = vmul.f32 %v1423, 1.442695
        %v1425 = vpow.pop %v1424
        %v1426 = vsel %vm1419, %v1425, 0.0
        %1427 = vadd.xlane.f32.xlu0 %v1426
        %v1428 = vpop.xlane.xlu0 %1427
        %v1429 = vrcp.pop %v1428
        %v1430 = vmul.f32 %v1425, %v1429
        %v1431 = vpack.c.bf16 %v1430, %v1430
        %v1433 = vsel %vm1419, %v1431, 0
        %vm1435 = vcmask 1043456
        %v1437 = vsel %vm1435, %v1371, 0
        %1439 = vmatprep.subr.bf16.mxu0 0
        %1440 = vmatpush1.bf16.msra.mxu0 0
        %1441 = vmatprep.subr.bf16.mxu0 0
        %1442 = vmatpush1.bf16.msra.mxu0 0
        %1443 = vmatprep.subr.bf16.mxu0 0
        %1444 = vmatpush1.bf16.msra.mxu0 0
        %1445 = vmatprep.subr.bf16.mxu0 0
        %1446 = vmatpush1.bf16.msra.mxu0 0
        %1447 = vmatprep.subr.bf16.mxu0 0
        %1448 = vmatpush1.bf16.msra.mxu0 0
        %1449 = vmatprep.subr.bf16.mxu0 0
        %1450 = vmatpush1.bf16.msra.mxu0 0
        %1451 = vmatprep.subr.bf16.mxu0 0
        %1452 = vmatpush1.bf16.msra.mxu0 0
        %1453 = vmatprep.subr.bf16.mxu0 0
        %1454 = vmatpush1.bf16.msra.mxu0 %v1437
        %1455 = vmatprep.subr.bf16.mxu0 0
        %1456 = vmatpush2.bf16.msra.mxu0 0
        %1457 = vmatprep.subr.bf16.mxu0 0
        %1458 = vmatpush2.bf16.msra.mxu0 0
        %1459 = vmatprep.subr.bf16.mxu0 0
        %1460 = vmatpush2.bf16.msra.mxu0 0
        %1461 = vmatprep.subr.bf16.mxu0 0
        %1462 = vmatpush2.bf16.msra.mxu0 0
        %1463 = vmatprep.subr.bf16.mxu0 0
        %1464 = vmatpush2.bf16.msra.mxu0 0
        %1465 = vmatprep.subr.bf16.mxu0 0
        %1466 = vmatpush2.bf16.msra.mxu0 0
        %1467 = vmatprep.subr.bf16.mxu0 0
        %1468 = vmatpush2.bf16.msra.mxu0 0
        %1469 = vmatprep.subr.bf16.mxu0 0
        %1470 = vmatpush2.bf16.msra.mxu0 0
        %1471 = vmatprep.mubr.bf16.mxu0 0
        %1472 = vmatmul.mubr.bf16.gmra.mxu0 %v1433
        %v1473 = vpop.f32.mrf.mxu0
        %v1474 = vadd.f32 0.0, %v1473
        %v1475 = vpop.f32.mrf.mxu0
        %v1476 = vpop.f32.mrf.mxu0
        %v1477 = vpop.f32.mrf.mxu0
        %1478 = vdwg.mxu0
        %1479 = vst.msk [vmem:[#allocation3] sm:$0xff] %vm1372, %v1474
        %1481 = vrot.lane.b32.xlu0 %v1369, 96
        %v1482 = vpop.permute.xlu0 %1481
        %1484 = vrot.lane.b32.xlu0 %v1370, 96
        %v1485 = vpop.permute.xlu0 %1484
        %v1487 = vsel %vm1372, %v1482, 0
        %v1490 = vsel %vm1372, %v1485, 0
        %1492 = vmatprep.subr.bf16.mxu0 0
        %1493 = vmatpush1.bf16.xpose.msra.mxu0 0
        %1494 = vmatprep.subr.bf16.mxu0 0
        %1495 = vmatpush1.bf16.xpose.msra.mxu0 0
        %1496 = vmatprep.subr.bf16.mxu0 0
        %1497 = vmatpush1.bf16.xpose.msra.mxu0 0
        %1498 = vmatprep.subr.bf16.mxu0 0
        %1499 = vmatpush1.bf16.xpose.msra.mxu0 0
        %1500 = vmatprep.subr.bf16.mxu0 0
        %1501 = vmatpush1.bf16.xpose.msra.mxu0 0
        %1502 = vmatprep.subr.bf16.mxu0 0
        %1503 = vmatpush1.bf16.xpose.msra.mxu0 0
        %1504 = vmatprep.subr.bf16.mxu0 0
        %1505 = vmatpush1.bf16.xpose.msra.mxu0 0
        %1506 = vmatprep.subr.bf16.mxu0 0
        %1507 = vmatpush1.bf16.xpose.msra.mxu0 %v1490
        %1508 = vmatprep.subr.bf16.mxu0 0
        %1509 = vmatpush2.bf16.xpose.msra.mxu0 0
        %1510 = vmatprep.subr.bf16.mxu0 0
        %1511 = vmatpush2.bf16.xpose.msra.mxu0 0
        %1512 = vmatprep.subr.bf16.mxu0 0
        %1513 = vmatpush2.bf16.xpose.msra.mxu0 0
        %1514 = vmatprep.subr.bf16.mxu0 0
        %1515 = vmatpush2.bf16.xpose.msra.mxu0 0
        %1516 = vmatprep.subr.bf16.mxu0 0
        %1517 = vmatpush2.bf16.xpose.msra.mxu0 0
        %1518 = vmatprep.subr.bf16.mxu0 0
        %1519 = vmatpush2.bf16.xpose.msra.mxu0 0
        %1520 = vmatprep.subr.bf16.mxu0 0
        %1521 = vmatpush2.bf16.xpose.msra.mxu0 0
        %1522 = vmatprep.subr.bf16.mxu0 0
        %1523 = vmatpush2.bf16.xpose.msra.mxu0 0
        %1524 = vmatprep.mubr.bf16.mxu0 0
        %1525 = vmatmul.mubr.bf16.gmra.mxu0 %v1487
        %v1526 = vpop.f32.mrf.mxu0
        %v1527 = vadd.f32 0.0, %v1526
        %v1528 = vpop.f32.mrf.mxu0
        %v1529 = vpop.f32.mrf.mxu0
        %v1530 = vpop.f32.mrf.mxu0
        %1531 = vdwg.mxu0
        %v1532 = vsel %vm1419, %v1527, -inf
        %1533 = vmax.xlane.f32.xlu0 %v1532
        %v1534 = vpop.xlane.xlu0 %1533
        %v1535 = vsub.f32 %v1527, %v1534
        %v1536 = vmul.f32 %v1535, 1.442695
        %v1537 = vpow.pop %v1536
        %v1538 = vsel %vm1419, %v1537, 0.0
        %1539 = vadd.xlane.f32.xlu0 %v1538
        %v1540 = vpop.xlane.xlu0 %1539
        %v1541 = vrcp.pop %v1540
        %v1542 = vmul.f32 %v1537, %v1541
        %v1543 = vpack.c.bf16 %v1542, %v1542
        %1545 = vrot.lane.b32.xlu0 %v1371, 96
        %v1546 = vpop.permute.xlu0 %1545
        %v1548 = vsel %vm1419, %v1543, 0
        %v1551 = vsel %vm1435, %v1546, 0
        %1553 = vmatprep.subr.bf16.mxu0 0
        %1554 = vmatpush1.bf16.msra.mxu0 0
        %1555 = vmatprep.subr.bf16.mxu0 0
        %1556 = vmatpush1.bf16.msra.mxu0 0
        %1557 = vmatprep.subr.bf16.mxu0 0
        %1558 = vmatpush1.bf16.msra.mxu0 0
        %1559 = vmatprep.subr.bf16.mxu0 0
        %1560 = vmatpush1.bf16.msra.mxu0 0
        %1561 = vmatprep.subr.bf16.mxu0 0
        %1562 = vmatpush1.bf16.msra.mxu0 0
        %1563 = vmatprep.subr.bf16.mxu0 0
        %1564 = vmatpush1.bf16.msra.mxu0 0
        %1565 = vmatprep.subr.bf16.mxu0 0
        %1566 = vmatpush1.bf16.msra.mxu0 0
        %1567 = vmatprep.subr.bf16.mxu0 0
        %1568 = vmatpush1.bf16.msra.mxu0 %v1551
        %1569 = vmatprep.subr.bf16.mxu0 0
        %1570 = vmatpush2.bf16.msra.mxu0 0
        %1571 = vmatprep.subr.bf16.mxu0 0
        %1572 = vmatpush2.bf16.msra.mxu0 0
        %1573 = vmatprep.subr.bf16.mxu0 0
        %1574 = vmatpush2.bf16.msra.mxu0 0
        %1575 = vmatprep.subr.bf16.mxu0 0
        %1576 = vmatpush2.bf16.msra.mxu0 0
        %1577 = vmatprep.subr.bf16.mxu0 0
        %1578 = vmatpush2.bf16.msra.mxu0 0
        %1579 = vmatprep.subr.bf16.mxu0 0
        %1580 = vmatpush2.bf16.msra.mxu0 0
        %1581 = vmatprep.subr.bf16.mxu0 0
        %1582 = vmatpush2.bf16.msra.mxu0 0
        %1583 = vmatprep.subr.bf16.mxu0 0
        %1584 = vmatpush2.bf16.msra.mxu0 0
        %1585 = vmatprep.mubr.bf16.mxu0 0
        %1586 = vmatmul.mubr.bf16.gmra.mxu0 %v1548
        %v1587 = vpop.f32.mrf.mxu0
        %v1588 = vadd.f32 0.0, %v1587
        %v1589 = vpop.f32.mrf.mxu0
        %v1590 = vpop.f32.mrf.mxu0
        %v1591 = vpop.f32.mrf.mxu0
        %1592 = vdwg.mxu0
        %1594 = vrot.lane.b32.xlu0 %v1588, 32
        %v1595 = vpop.permute.xlu0 %1594
        %vm1597 = vcmask 523520
        %1598 = vst.msk [vmem:[#allocation3] sm:$0xff] %vm1597, %v1595
        %1599 = vrot.lane.b32.xlu0 %v1369, 64
        %v1600 = vpop.permute.xlu0 %1599
        %1601 = vrot.lane.b32.xlu0 %v1370, 64
        %v1602 = vpop.permute.xlu0 %1601
        %v1604 = vsel %vm1372, %v1600, 0
        %v1607 = vsel %vm1372, %v1602, 0
        %1609 = vmatprep.subr.bf16.mxu0 0
        %1610 = vmatpush1.bf16.xpose.msra.mxu0 0
        %1611 = vmatprep.subr.bf16.mxu0 0
        %1612 = vmatpush1.bf16.xpose.msra.mxu0 0
        %1613 = vmatprep.subr.bf16.mxu0 0
        %1614 = vmatpush1.bf16.xpose.msra.mxu0 0
        %1615 = vmatprep.subr.bf16.mxu0 0
        %1616 = vmatpush1.bf16.xpose.msra.mxu0 0
        %1617 = vmatprep.subr.bf16.mxu0 0
        %1618 = vmatpush1.bf16.xpose.msra.mxu0 0
        %1619 = vmatprep.subr.bf16.mxu0 0
        %1620 = vmatpush1.bf16.xpose.msra.mxu0 0
        %1621 = vmatprep.subr.bf16.mxu0 0
        %1622 = vmatpush1.bf16.xpose.msra.mxu0 0
        %1623 = vmatprep.subr.bf16.mxu0 0
        %1624 = vmatpush1.bf16.xpose.msra.mxu0 %v1607
        %1625 = vmatprep.subr.bf16.mxu0 0
        %1626 = vmatpush2.bf16.xpose.msra.mxu0 0
        %1627 = vmatprep.subr.bf16.mxu0 0
        %1628 = vmatpush2.bf16.xpose.msra.mxu0 0
        %1629 = vmatprep.subr.bf16.mxu0 0
        %1630 = vmatpush2.bf16.xpose.msra.mxu0 0
        %1631 = vmatprep.subr.bf16.mxu0 0
        %1632 = vmatpush2.bf16.xpose.msra.mxu0 0
        %1633 = vmatprep.subr.bf16.mxu0 0
        %1634 = vmatpush2.bf16.xpose.msra.mxu0 0
        %1635 = vmatprep.subr.bf16.mxu0 0
        %1636 = vmatpush2.bf16.xpose.msra.mxu0 0
        %1637 = vmatprep.subr.bf16.mxu0 0
        %1638 = vmatpush2.bf16.xpose.msra.mxu0 0
        %1639 = vmatprep.subr.bf16.mxu0 0
        %1640 = vmatpush2.bf16.xpose.msra.mxu0 0
        %1641 = vmatprep.mubr.bf16.mxu0 0
        %1642 = vmatmul.mubr.bf16.gmra.mxu0 %v1604
        %v1643 = vpop.f32.mrf.mxu0
        %v1644 = vadd.f32 0.0, %v1643
        %v1645 = vpop.f32.mrf.mxu0
        %v1646 = vpop.f32.mrf.mxu0
        %v1647 = vpop.f32.mrf.mxu0
        %1648 = vdwg.mxu0
        %v1649 = vsel %vm1419, %v1644, -inf
        %1650 = vmax.xlane.f32.xlu0 %v1649
        %v1651 = vpop.xlane.xlu0 %1650
        %v1652 = vsub.f32 %v1644, %v1651
        %v1653 = vmul.f32 %v1652, 1.442695
        %v1654 = vpow.pop %v1653
        %v1655 = vsel %vm1419, %v1654, 0.0
        %1656 = vadd.xlane.f32.xlu0 %v1655
        %v1657 = vpop.xlane.xlu0 %1656
        %v1658 = vrcp.pop %v1657
        %v1659 = vmul.f32 %v1654, %v1658
        %v1660 = vpack.c.bf16 %v1659, %v1659
        %1661 = vrot.lane.b32.xlu0 %v1371, 64
        %v1662 = vpop.permute.xlu0 %1661
        %v1664 = vsel %vm1419, %v1660, 0
        %v1667 = vsel %vm1435, %v1662, 0
        %1669 = vmatprep.subr.bf16.mxu0 0
        %1670 = vmatpush1.bf16.msra.mxu0 0
        %1671 = vmatprep.subr.bf16.mxu0 0
        %1672 = vmatpush1.bf16.msra.mxu0 0
        %1673 = vmatprep.subr.bf16.mxu0 0
        %1674 = vmatpush1.bf16.msra.mxu0 0
        %1675 = vmatprep.subr.bf16.mxu0 0
        %1676 = vmatpush1.bf16.msra.mxu0 0
        %1677 = vmatprep.subr.bf16.mxu0 0
        %1678 = vmatpush1.bf16.msra.mxu0 0
        %1679 = vmatprep.subr.bf16.mxu0 0
        %1680 = vmatpush1.bf16.msra.mxu0 0
        %1681 = vmatprep.subr.bf16.mxu0 0
        %1682 = vmatpush1.bf16.msra.mxu0 0
        %1683 = vmatprep.subr.bf16.mxu0 0
        %1684 = vmatpush1.bf16.msra.mxu0 %v1667
        %1685 = vmatprep.subr.bf16.mxu0 0
        %1686 = vmatpush2.bf16.msra.mxu0 0
        %1687 = vmatprep.subr.bf16.mxu0 0
        %1688 = vmatpush2.bf16.msra.mxu0 0
        %1689 = vmatprep.subr.bf16.mxu0 0
        %1690 = vmatpush2.bf16.msra.mxu0 0
        %1691 = vmatprep.subr.bf16.mxu0 0
        %1692 = vmatpush2.bf16.msra.mxu0 0
        %1693 = vmatprep.subr.bf16.mxu0 0
        %1694 = vmatpush2.bf16.msra.mxu0 0
        %1695 = vmatprep.subr.bf16.mxu0 0
        %1696 = vmatpush2.bf16.msra.mxu0 0
        %1697 = vmatprep.subr.bf16.mxu0 0
        %1698 = vmatpush2.bf16.msra.mxu0 0
        %1699 = vmatprep.subr.bf16.mxu0 0
        %1700 = vmatpush2.bf16.msra.mxu0 0
        %1701 = vmatprep.mubr.bf16.mxu0 0
        %1702 = vmatmul.mubr.bf16.gmra.mxu0 %v1664
        %v1703 = vpop.f32.mrf.mxu0
        %v1704 = vadd.f32 0.0, %v1703
        %v1705 = vpop.f32.mrf.mxu0
        %v1706 = vpop.f32.mrf.mxu0
        %v1707 = vpop.f32.mrf.mxu0
        %1708 = vdwg.mxu0
        %1710 = vrot.lane.b32.xlu0 %v1704, 64
        %v1711 = vpop.permute.xlu0 %1710
        %vm1713 = vcmask 785920
        %1714 = vst.msk [vmem:[#allocation3] sm:$0xff] %vm1713, %v1711
        %1715 = vrot.lane.b32.xlu0 %v1369, 32
        %v1716 = vpop.permute.xlu0 %1715
        %1717 = vrot.lane.b32.xlu0 %v1370, 32
        %v1718 = vpop.permute.xlu0 %1717
        %v1720 = vsel %vm1372, %v1716, 0
        %v1723 = vsel %vm1372, %v1718, 0
        %1725 = vmatprep.subr.bf16.mxu0 0
        %1726 = vmatpush1.bf16.xpose.msra.mxu0 0
        %1727 = vmatprep.subr.bf16.mxu0 0
        %1728 = vmatpush1.bf16.xpose.msra.mxu0 0
        %1729 = vmatprep.subr.bf16.mxu0 0
        %1730 = vmatpush1.bf16.xpose.msra.mxu0 0
        %1731 = vmatprep.subr.bf16.mxu0 0
        %1732 = vmatpush1.bf16.xpose.msra.mxu0 0
        %1733 = vmatprep.subr.bf16.mxu0 0
        %1734 = vmatpush1.bf16.xpose.msra.mxu0 0
        %1735 = vmatprep.subr.bf16.mxu0 0
        %1736 = vmatpush1.bf16.xpose.msra.mxu0 0
        %1737 = vmatprep.subr.bf16.mxu0 0
        %1738 = vmatpush1.bf16.xpose.msra.mxu0 0
        %1739 = vmatprep.subr.bf16.mxu0 0
        %1740 = vmatpush1.bf16.xpose.msra.mxu0 %v1723
        %1741 = vmatprep.subr.bf16.mxu0 0
        %1742 = vmatpush2.bf16.xpose.msra.mxu0 0
        %1743 = vmatprep.subr.bf16.mxu0 0
        %1744 = vmatpush2.bf16.xpose.msra.mxu0 0
        %1745 = vmatprep.subr.bf16.mxu0 0
        %1746 = vmatpush2.bf16.xpose.msra.mxu0 0
        %1747 = vmatprep.subr.bf16.mxu0 0
        %1748 = vmatpush2.bf16.xpose.msra.mxu0 0
        %1749 = vmatprep.subr.bf16.mxu0 0
        %1750 = vmatpush2.bf16.xpose.msra.mxu0 0
        %1751 = vmatprep.subr.bf16.mxu0 0
        %1752 = vmatpush2.bf16.xpose.msra.mxu0 0
        %1753 = vmatprep.subr.bf16.mxu0 0
        %1754 = vmatpush2.bf16.xpose.msra.mxu0 0
        %1755 = vmatprep.subr.bf16.mxu0 0
        %1756 = vmatpush2.bf16.xpose.msra.mxu0 0
        %1757 = vmatprep.mubr.bf16.mxu0 0
        %1758 = vmatmul.mubr.bf16.gmra.mxu0 %v1720
        %v1759 = vpop.f32.mrf.mxu0
        %v1760 = vadd.f32 0.0, %v1759
        %v1761 = vpop.f32.mrf.mxu0
        %v1762 = vpop.f32.mrf.mxu0
        %v1763 = vpop.f32.mrf.mxu0
        %1764 = vdwg.mxu0
        %v1765 = vsel %vm1419, %v1760, -inf
        %1766 = vmax.xlane.f32.xlu0 %v1765
        %v1767 = vpop.xlane.xlu0 %1766
        %v1768 = vsub.f32 %v1760, %v1767
        %v1769 = vmul.f32 %v1768, 1.442695
        %v1770 = vpow.pop %v1769
        %v1771 = vsel %vm1419, %v1770, 0.0
        %1772 = vadd.xlane.f32.xlu0 %v1771
        %v1773 = vpop.xlane.xlu0 %1772
        %v1774 = vrcp.pop %v1773
        %v1775 = vmul.f32 %v1770, %v1774
        %v1776 = vpack.c.bf16 %v1775, %v1775
        %1777 = vrot.lane.b32.xlu0 %v1371, 32
        %v1778 = vpop.permute.xlu0 %1777
        %v1780 = vsel %vm1419, %v1776, 0
        %v1783 = vsel %vm1435, %v1778, 0
        %1785 = vmatprep.subr.bf16.mxu0 0
        %1786 = vmatpush1.bf16.msra.mxu0 0
        %1787 = vmatprep.subr.bf16.mxu0 0
        %1788 = vmatpush1.bf16.msra.mxu0 0
        %1789 = vmatprep.subr.bf16.mxu0 0
        %1790 = vmatpush1.bf16.msra.mxu0 0
        %1791 = vmatprep.subr.bf16.mxu0 0
        %1792 = vmatpush1.bf16.msra.mxu0 0
        %1793 = vmatprep.subr.bf16.mxu0 0
        %1794 = vmatpush1.bf16.msra.mxu0 0
        %1795 = vmatprep.subr.bf16.mxu0 0
        %1796 = vmatpush1.bf16.msra.mxu0 0
        %1797 = vmatprep.subr.bf16.mxu0 0
        %1798 = vmatpush1.bf16.msra.mxu0 0
        %1799 = vmatprep.subr.bf16.mxu0 0
        %1800 = vmatpush1.bf16.msra.mxu0 %v1783
        %1801 = vmatprep.subr.bf16.mxu0 0
        %1802 = vmatpush2.bf16.msra.mxu0 0
        %1803 = vmatprep.subr.bf16.mxu0 0
        %1804 = vmatpush2.bf16.msra.mxu0 0
        %1805 = vmatprep.subr.bf16.mxu0 0
        %1806 = vmatpush2.bf16.msra.mxu0 0
        %1807 = vmatprep.subr.bf16.mxu0 0
        %1808 = vmatpush2.bf16.msra.mxu0 0
        %1809 = vmatprep.subr.bf16.mxu0 0
        %1810 = vmatpush2.bf16.msra.mxu0 0
        %1811 = vmatprep.subr.bf16.mxu0 0
        %1812 = vmatpush2.bf16.msra.mxu0 0
        %1813 = vmatprep.subr.bf16.mxu0 0
        %1814 = vmatpush2.bf16.msra.mxu0 0
        %1815 = vmatprep.subr.bf16.mxu0 0
        %1816 = vmatpush2.bf16.msra.mxu0 0
        %1817 = vmatprep.mubr.bf16.mxu0 0
        %1818 = vmatmul.mubr.bf16.gmra.mxu0 %v1780
        %v1819 = vpop.f32.mrf.mxu0
        %v1820 = vadd.f32 0.0, %v1819
        %v1821 = vpop.f32.mrf.mxu0
        %v1822 = vpop.f32.mrf.mxu0
        %v1823 = vpop.f32.mrf.mxu0
        %1824 = vdwg.mxu0
        %1826 = vrot.lane.b32.xlu0 %v1820, 96
        %v1827 = vpop.permute.xlu0 %1826
        %vm1829 = vcmask 1048320
        %1830 = vst.msk [vmem:[#allocation3] sm:$0xff] %vm1829, %v1827
        %v1831 = vld [vmem:[#allocation3] sm:$0xff]
        %v1832 = vpack.c.bf16 %v1831, %v1831
        %v1833 = vld [vmem:[%s905] sm:$0xf]
        %v1834 = vld [vmem:[%s905 + $0x4] sm:$0xf]
        %v1835 = vld [vmem:[%s905 + $0x8] sm:$0xf]
        %v1836 = vld [vmem:[%s905 + $0xc] sm:$0xf]
        %v1837 = vld [vmem:[%s905 + $0x10] sm:$0xf]
        %v1838 = vld [vmem:[%s905 + $0x14] sm:$0xf]
        %v1839 = vld [vmem:[%s905 + $0x18] sm:$0xf]
        %v1840 = vld [vmem:[%s905 + $0x1c] sm:$0xf]
        %v1841 = vld [vmem:[%s905 + $0x20] sm:$0xf]
        %v1842 = vld [vmem:[%s905 + $0x24] sm:$0xf]
        %v1843 = vld [vmem:[%s905 + $0x28] sm:$0xf]
        %v1844 = vld [vmem:[%s905 + $0x2c] sm:$0xf]
        %v1845 = vld [vmem:[%s905 + $0x30] sm:$0xf]
        %v1846 = vld [vmem:[%s905 + $0x34] sm:$0xf]
        %v1847 = vld [vmem:[%s905 + $0x38] sm:$0xf]
        %v1848 = vld [vmem:[%s905 + $0x3c] sm:$0xf]
        %v1849 = vld [vmem:[%s1065] sm:$0x1]
        %v1851 = vlaneseq
        %v1852 = vshrl.u32 %v1851, 7
        %v1853 = vsub.s32 0, %v1852
        %v1854 = vrot.slane %v1849, %v1853
        %v1872 = vunpack.c.l.b16 %v1833
        %v1873 = vunpack.c.l.b16 %v1834
        %v1874 = vunpack.c.l.b16 %v1835
        %v1875 = vunpack.c.l.b16 %v1836
        %v1876 = vunpack.c.l.b16 %v1837
        %v1877 = vunpack.c.l.b16 %v1838
        %v1878 = vunpack.c.l.b16 %v1839
        %v1879 = vunpack.c.l.b16 %v1840
        %v1880 = vunpack.c.l.b16 %v1841
        %v1881 = vunpack.c.l.b16 %v1842
        %v1882 = vunpack.c.l.b16 %v1843
        %v1883 = vunpack.c.l.b16 %v1844
        %v1884 = vunpack.c.l.b16 %v1845
        %v1885 = vunpack.c.l.b16 %v1846
        %v1886 = vunpack.c.l.b16 %v1847
        %v1887 = vunpack.c.l.b16 %v1848
        %v1888 = vpack.c.b16 %v1873, %v1872
        %v1889 = vpack.c.b16 %v1875, %v1874
        %v1890 = vpack.c.b16 %v1877, %v1876
        %v1891 = vpack.c.b16 %v1879, %v1878
        %v1892 = vpack.c.b16 %v1881, %v1880
        %v1893 = vpack.c.b16 %v1883, %v1882
        %v1894 = vpack.c.b16 %v1885, %v1884
        %v1895 = vpack.c.b16 %v1887, %v1886
        %1904 = vmatprep.subr.bf16.mxu0 0
        %1905 = vmatpush1.bf16.msra.mxu0 %v1895
        %1906 = vmatprep.subr.bf16.mxu0 0
        %1907 = vmatpush1.bf16.msra.mxu0 %v1894
        %1908 = vmatprep.subr.bf16.mxu0 0
        %1909 = vmatpush1.bf16.msra.mxu0 %v1893
        %1910 = vmatprep.subr.bf16.mxu0 0
        %1911 = vmatpush1.bf16.msra.mxu0 %v1892
        %1912 = vmatprep.subr.bf16.mxu0 0
        %1913 = vmatpush1.bf16.msra.mxu0 %v1891
        %1914 = vmatprep.subr.bf16.mxu0 0
        %1915 = vmatpush1.bf16.msra.mxu0 %v1890
        %1916 = vmatprep.subr.bf16.mxu0 0
        %1917 = vmatpush1.bf16.msra.mxu0 %v1889
        %1918 = vmatprep.subr.bf16.mxu0 0
        %1919 = vmatpush1.bf16.msra.mxu0 %v1888
        %1920 = vmatprep.subr.bf16.mxu0 0
        %1921 = vmatpush2.bf16.msra.mxu0 0
        %1922 = vmatprep.subr.bf16.mxu0 0
        %1923 = vmatpush2.bf16.msra.mxu0 0
        %1924 = vmatprep.subr.bf16.mxu0 0
        %1925 = vmatpush2.bf16.msra.mxu0 0
        %1926 = vmatprep.subr.bf16.mxu0 0
        %1927 = vmatpush2.bf16.msra.mxu0 0
        %1928 = vmatprep.subr.bf16.mxu0 0
        %1929 = vmatpush2.bf16.msra.mxu0 0
        %1930 = vmatprep.subr.bf16.mxu0 0
        %1931 = vmatpush2.bf16.msra.mxu0 0
        %1932 = vmatprep.subr.bf16.mxu0 0
        %1933 = vmatpush2.bf16.msra.mxu0 0
        %1934 = vmatprep.subr.bf16.mxu0 0
        %1935 = vmatpush2.bf16.msra.mxu0 0
        %1936 = vmatprep.mubr.bf16.mxu0 0
        %1937 = vmatmul.mubr.bf16.gmra.mxu0 %v1832
        %v1938 = vpop.f32.mrf.mxu0
        %v1939 = vadd.f32 %v1854, %v1938
        %v1940 = vpop.f32.mrf.mxu0
        %v1941 = vpop.f32.mrf.mxu0
        %v1942 = vpop.f32.mrf.mxu0
        %1943 = vdwg.mxu0
        %v1944 = vadd.f32 %v1080, %v1939
        %v1945 = vld [vmem:[%s913] sm:$0x1]
        %v1946 = vld [vmem:[%s921] sm:$0x1]
        %1947 = vadd.xlane.f32.xlu0 %v1944
        %v1948 = vpop.xlane.xlu0 %1947
        %v1949 = vmul.f32 %v1948, %v1085
        %v1950 = vsub.f32 %v1944, %v1949
        %v1951 = vmul.f32 %v1950, %v1950
        %1952 = vadd.xlane.f32.xlu0 %v1951
        %v1953 = vpop.xlane.xlu0 %1952
        %v1954 = vmul.f32 %v1953, %v1085
        %v1955 = vadd.f32 %v1954, 1e-05
        %v1956 = vrsqrt.pop %v1955
        %v1957 = vmul.f32 %v1950, %v1956
        %v1959 = vlaneseq
        %v1960 = vshrl.u32 %v1959, 7
        %v1961 = vsub.s32 0, %v1960
        %v1962 = vrot.slane %v1945, %v1961
        %v1964 = vmul.f32 %v1957, %v1962
        %v1966 = vlaneseq
        %v1967 = vshrl.u32 %v1966, 7
        %v1968 = vsub.s32 0, %v1967
        %v1969 = vrot.slane %v1946, %v1968
        %v1971 = vadd.f32 %v1964, %v1969
        %v1972 = vpack.c.bf16 %v1971, %v1971
        %v1973 = vld [vmem:[%s930] sm:$0xff]
        %v1974 = vld [vmem:[%s930 + $0x8] sm:$0xff]
        %v1975 = vld [vmem:[%s930 + $0x10] sm:$0xff]
        %v1976 = vld [vmem:[%s930 + $0x18] sm:$0xff]
        %v1977 = vld [vmem:[%s930 + $0x20] sm:$0xff]
        %v1978 = vld [vmem:[%s930 + $0x28] sm:$0xff]
        %v1979 = vld [vmem:[%s930 + $0x30] sm:$0xff]
        %v1980 = vld [vmem:[%s930 + $0x38] sm:$0xff]
        %v1981 = vld [vmem:[%s930 + $0x40] sm:$0xff]
        %v1982 = vld [vmem:[%s930 + $0x48] sm:$0xff]
        %v1983 = vld [vmem:[%s930 + $0x50] sm:$0xff]
        %v1984 = vld [vmem:[%s930 + $0x58] sm:$0xff]
        %v1985 = vld [vmem:[%s930 + $0x60] sm:$0xff]
        %v1986 = vld [vmem:[%s930 + $0x68] sm:$0xff]
        %v1987 = vld [vmem:[%s930 + $0x70] sm:$0xff]
        %v1988 = vld [vmem:[%s930 + $0x78] sm:$0xff]
        %v1989 = vld [vmem:[%s930 + $0x80] sm:$0xff]
        %v1990 = vld [vmem:[%s930 + $0x88] sm:$0xff]
        %v1991 = vld [vmem:[%s930 + $0x90] sm:$0xff]
        %v1992 = vld [vmem:[%s930 + $0x98] sm:$0xff]
        %v1993 = vld [vmem:[%s930 + $0xa0] sm:$0xff]
        %v1994 = vld [vmem:[%s930 + $0xa8] sm:$0xff]
        %v1995 = vld [vmem:[%s930 + $0xb0] sm:$0xff]
        %v1996 = vld [vmem:[%s930 + $0xb8] sm:$0xff]
        %v1997 = vld [vmem:[%s930 + $0xc0] sm:$0xff]
        %v1998 = vld [vmem:[%s930 + $0xc8] sm:$0xff]
        %v1999 = vld [vmem:[%s930 + $0xd0] sm:$0xff]
        %v2000 = vld [vmem:[%s930 + $0xd8] sm:$0xff]
        %v2001 = vld [vmem:[%s930 + $0xe0] sm:$0xff]
        %v2002 = vld [vmem:[%s930 + $0xe8] sm:$0xff]
        %v2003 = vld [vmem:[%s930 + $0xf0] sm:$0xff]
        %v2004 = vld [vmem:[%s930 + $0xf8] sm:$0xff]
        %v2005 = vld [vmem:[%s1069] sm:$0xf]
        %v2007 = vlaneseq
        %v2008 = vshrl.u32 %v2007, 7
        %v2009 = vsub.s32 0, %v2008
        %v2010 = vrot.slane %v2005, %v2009
        %v2011 = vlaneseq
        %v2012 = vshrl.u32 %v2011, 7
        %v2013 = vsub.s32 1, %v2012
        %v2014 = vrot.slane %v2005, %v2013
        %v2015 = vlaneseq
        %v2016 = vshrl.u32 %v2015, 7
        %v2017 = vsub.s32 2, %v2016
        %v2018 = vrot.slane %v2005, %v2017
        %v2019 = vlaneseq
        %v2020 = vshrl.u32 %v2019, 7
        %v2021 = vsub.s32 3, %v2020
        %v2022 = vrot.slane %v2005, %v2021
        %v2059 = vunpack.c.l.b16 %v1973
        %v2060 = vunpack.c.h.b16 %v1973
        %v2061 = vunpack.c.l.b16 %v1974
        %v2062 = vunpack.c.h.b16 %v1974
        %v2063 = vunpack.c.l.b16 %v1975
        %v2064 = vunpack.c.h.b16 %v1975
        %v2065 = vunpack.c.l.b16 %v1976
        %v2066 = vunpack.c.h.b16 %v1976
        %v2067 = vunpack.c.l.b16 %v1977
        %v2068 = vunpack.c.h.b16 %v1977
        %v2069 = vunpack.c.l.b16 %v1978
        %v2070 = vunpack.c.h.b16 %v1978
        %v2071 = vunpack.c.l.b16 %v1979
        %v2072 = vunpack.c.h.b16 %v1979
        %v2073 = vunpack.c.l.b16 %v1980
        %v2074 = vunpack.c.h.b16 %v1980
        %v2075 = vunpack.c.l.b16 %v1981
        %v2076 = vunpack.c.h.b16 %v1981
        %v2077 = vunpack.c.l.b16 %v1982
        %v2078 = vunpack.c.h.b16 %v1982
        %v2079 = vunpack.c.l.b16 %v1983
        %v2080 = vunpack.c.h.b16 %v1983
        %v2081 = vunpack.c.l.b16 %v1984
        %v2082 = vunpack.c.h.b16 %v1984
        %v2083 = vunpack.c.l.b16 %v1985
        %v2084 = vunpack.c.h.b16 %v1985
        %v2085 = vunpack.c.l.b16 %v1986
        %v2086 = vunpack.c.h.b16 %v1986
        %v2087 = vunpack.c.l.b16 %v1987
        %v2088 = vunpack.c.h.b16 %v1987
        %v2089 = vunpack.c.l.b16 %v1988
        %v2090 = vunpack.c.h.b16 %v1988
        %v2091 = vunpack.c.l.b16 %v1989
        %v2092 = vunpack.c.h.b16 %v1989
        %v2093 = vunpack.c.l.b16 %v1990
        %v2094 = vunpack.c.h.b16 %v1990
        %v2095 = vunpack.c.l.b16 %v1991
        %v2096 = vunpack.c.h.b16 %v1991
        %v2097 = vunpack.c.l.b16 %v1992
        %v2098 = vunpack.c.h.b16 %v1992
        %v2099 = vunpack.c.l.b16 %v1993
        %v2100 = vunpack.c.h.b16 %v1993
        %v2101 = vunpack.c.l.b16 %v1994
        %v2102 = vunpack.c.h.b16 %v1994
        %v2103 = vunpack.c.l.b16 %v1995
        %v2104 = vunpack.c.h.b16 %v1995
        %v2105 = vunpack.c.l.b16 %v1996
        %v2106 = vunpack.c.h.b16 %v1996
        %v2107 = vunpack.c.l.b16 %v1997
        %v2108 = vunpack.c.h.b16 %v1997
        %v2109 = vunpack.c.l.b16 %v1998
        %v2110 = vunpack.c.h.b16 %v1998
        %v2111 = vunpack.c.l.b16 %v1999
        %v2112 = vunpack.c.h.b16 %v1999
        %v2113 = vunpack.c.l.b16 %v2000
        %v2114 = vunpack.c.h.b16 %v2000
        %v2115 = vunpack.c.l.b16 %v2001
        %v2116 = vunpack.c.h.b16 %v2001
        %v2117 = vunpack.c.l.b16 %v2002
        %v2118 = vunpack.c.h.b16 %v2002
        %v2119 = vunpack.c.l.b16 %v2003
        %v2120 = vunpack.c.h.b16 %v2003
        %v2121 = vunpack.c.l.b16 %v2004
        %v2122 = vunpack.c.h.b16 %v2004
        %v2123 = vpack.c.b16 %v2063, %v2059
        %v2124 = vpack.c.b16 %v2064, %v2060
        %v2125 = vpack.c.b16 %v2065, %v2061
        %v2126 = vpack.c.b16 %v2066, %v2062
        %v2127 = vpack.c.b16 %v2071, %v2067
        %v2128 = vpack.c.b16 %v2072, %v2068
        %v2129 = vpack.c.b16 %v2073, %v2069
        %v2130 = vpack.c.b16 %v2074, %v2070
        %v2131 = vpack.c.b16 %v2079, %v2075
        %v2132 = vpack.c.b16 %v2080, %v2076
        %v2133 = vpack.c.b16 %v2081, %v2077
        %v2134 = vpack.c.b16 %v2082, %v2078
        %v2135 = vpack.c.b16 %v2087, %v2083
        %v2136 = vpack.c.b16 %v2088, %v2084
        %v2137 = vpack.c.b16 %v2089, %v2085
        %v2138 = vpack.c.b16 %v2090, %v2086
        %v2139 = vpack.c.b16 %v2095, %v2091
        %v2140 = vpack.c.b16 %v2096, %v2092
        %v2141 = vpack.c.b16 %v2097, %v2093
        %v2142 = vpack.c.b16 %v2098, %v2094
        %v2143 = vpack.c.b16 %v2103, %v2099
        %v2144 = vpack.c.b16 %v2104, %v2100
        %v2145 = vpack.c.b16 %v2105, %v2101
        %v2146 = vpack.c.b16 %v2106, %v2102
        %v2147 = vpack.c.b16 %v2111, %v2107
        %v2148 = vpack.c.b16 %v2112, %v2108
        %v2149 = vpack.c.b16 %v2113, %v2109
        %v2150 = vpack.c.b16 %v2114, %v2110
        %v2151 = vpack.c.b16 %v2119, %v2115
        %v2152 = vpack.c.b16 %v2120, %v2116
        %v2153 = vpack.c.b16 %v2121, %v2117
        %v2154 = vpack.c.b16 %v2122, %v2118
        %2187 = vmatprep.subr.bf16.mxu0 %v2152
        %2188 = vmatpush1.bf16.msra.mxu0 %v2151
        %2189 = vmatprep.subr.bf16.mxu0 %v2148
        %2190 = vmatpush1.bf16.msra.mxu0 %v2147
        %2191 = vmatprep.subr.bf16.mxu0 %v2144
        %2192 = vmatpush1.bf16.msra.mxu0 %v2143
        %2193 = vmatprep.subr.bf16.mxu0 %v2140
        %2194 = vmatpush1.bf16.msra.mxu0 %v2139
        %2195 = vmatprep.subr.bf16.mxu0 %v2136
        %2196 = vmatpush1.bf16.msra.mxu0 %v2135
        %2197 = vmatprep.subr.bf16.mxu0 %v2132
        %2198 = vmatpush1.bf16.msra.mxu0 %v2131
        %2199 = vmatprep.subr.bf16.mxu0 %v2128
        %2200 = vmatpush1.bf16.msra.mxu0 %v2127
        %2201 = vmatprep.subr.bf16.mxu0 %v2124
        %2202 = vmatpush1.bf16.msra.mxu0 %v2123
        %2203 = vmatprep.subr.bf16.mxu0 0
        %2204 = vmatpush2.bf16.msra.mxu0 0
        %2205 = vmatprep.subr.bf16.mxu0 0
        %2206 = vmatpush2.bf16.msra.mxu0 0
        %2207 = vmatprep.subr.bf16.mxu0 0
        %2208 = vmatpush2.bf16.msra.mxu0 0
        %2209 = vmatprep.subr.bf16.mxu0 0
        %2210 = vmatpush2.bf16.msra.mxu0 0
        %2211 = vmatprep.subr.bf16.mxu0 0
        %2212 = vmatpush2.bf16.msra.mxu0 0
        %2213 = vmatprep.subr.bf16.mxu0 0
        %2214 = vmatpush2.bf16.msra.mxu0 0
        %2215 = vmatprep.subr.bf16.mxu0 0
        %2216 = vmatpush2.bf16.msra.mxu0 0
        %2217 = vmatprep.subr.bf16.mxu0 0
        %2218 = vmatpush2.bf16.msra.mxu0 0
        %2219 = vmatprep.mubr.bf16.mxu0 0
        %2220 = vmatmul.mubr.bf16.gmra.mxu0 %v1972
        %v2221 = vpop.f32.mrf.mxu0
        %v2222 = vadd.f32 %v2010, %v2221
        %v2223 = vpop.f32.mrf.mxu0
        %v2224 = vadd.f32 %v2014, %v2223
        %v2225 = vpop.f32.mrf.mxu0
        %v2226 = vpop.f32.mrf.mxu0
        %2227 = vdwg.mxu0
        %2228 = vmatprep.subr.bf16.mxu0 %v2154
        %2229 = vmatpush1.bf16.msra.mxu0 %v2153
        %2230 = vmatprep.subr.bf16.mxu0 %v2150
        %2231 = vmatpush1.bf16.msra.mxu0 %v2149
        %2232 = vmatprep.subr.bf16.mxu0 %v2146
        %2233 = vmatpush1.bf16.msra.mxu0 %v2145
        %2234 = vmatprep.subr.bf16.mxu0 %v2142
        %2235 = vmatpush1.bf16.msra.mxu0 %v2141
        %2236 = vmatprep.subr.bf16.mxu0 %v2138
        %2237 = vmatpush1.bf16.msra.mxu0 %v2137
        %2238 = vmatprep.subr.bf16.mxu0 %v2134
        %2239 = vmatpush1.bf16.msra.mxu0 %v2133
        %2240 = vmatprep.subr.bf16.mxu0 %v2130
        %2241 = vmatpush1.bf16.msra.mxu0 %v2129
        %2242 = vmatprep.subr.bf16.mxu0 %v2126
        %2243 = vmatpush1.bf16.msra.mxu0 %v2125
        %2244 = vmatprep.subr.bf16.mxu0 0
        %2245 = vmatpush2.bf16.msra.mxu0 0
        %2246 = vmatprep.subr.bf16.mxu0 0
        %2247 = vmatpush2.bf16.msra.mxu0 0
        %2248 = vmatprep.subr.bf16.mxu0 0
        %2249 = vmatpush2.bf16.msra.mxu0 0
        %2250 = vmatprep.subr.bf16.mxu0 0
        %2251 = vmatpush2.bf16.msra.mxu0 0
        %2252 = vmatprep.subr.bf16.mxu0 0
        %2253 = vmatpush2.bf16.msra.mxu0 0
        %2254 = vmatprep.subr.bf16.mxu0 0
        %2255 = vmatpush2.bf16.msra.mxu0 0
        %2256 = vmatprep.subr.bf16.mxu0 0
        %2257 = vmatpush2.bf16.msra.mxu0 0
        %2258 = vmatprep.subr.bf16.mxu0 0
        %2259 = vmatpush2.bf16.msra.mxu0 0
        %2260 = vmatprep.mubr.bf16.mxu0 0
        %2261 = vmatmul.mubr.bf16.gmra.mxu0 %v1972
        %v2262 = vpop.f32.mrf.mxu0
        %v2263 = vadd.f32 %v2018, %v2262
        %v2264 = vpop.f32.mrf.mxu0
        %v2265 = vadd.f32 %v2022, %v2264
        %v2266 = vpop.f32.mrf.mxu0
        %v2267 = vpop.f32.mrf.mxu0
        %2268 = vdwg.mxu0
        %v2269 = vmul.f32 %v2222, -1.702
        %v2270 = vmul.f32 %v2224, -1.702
        %v2271 = vmul.f32 %v2263, -1.702
        %v2272 = vmul.f32 %v2265, -1.702
        %v2273 = vmul.f32 %v2269, 1.442695
        %v2274 = vpow.pop %v2273
        %v2275 = vmul.f32 %v2270, 1.442695
        %v2276 = vpow.pop %v2275
        %v2277 = vmul.f32 %v2271, 1.442695
        %v2278 = vpow.pop %v2277
        %v2279 = vmul.f32 %v2272, 1.442695
        %v2280 = vpow.pop %v2279
        %v2281 = vadd.f32 %v2274, 1.0
        %v2282 = vadd.f32 %v2276, 1.0
        %v2283 = vadd.f32 %v2278, 1.0
        %v2284 = vadd.f32 %v2280, 1.0
        %v2285 = vrcp.pop %v2281
        %v2286 = vrcp.pop %v2282
        %v2287 = vrcp.pop %v2283
        %v2288 = vrcp.pop %v2284
        %v2289 = vmul.f32 %v2222, %v2285
        %v2290 = vmul.f32 %v2224, %v2286
        %v2291 = vmul.f32 %v2263, %v2287
        %v2292 = vmul.f32 %v2265, %v2288
        %v2293 = vpack.c.bf16 %v2289, %v2289
        %v2294 = vpack.c.bf16 %v2290, %v2290
        %v2295 = vpack.c.bf16 %v2291, %v2291
        %v2296 = vpack.c.bf16 %v2292, %v2292
        %v2297 = vld [vmem:[%s939] sm:$0xf]
        %v2298 = vld [vmem:[%s939 + $0x4] sm:$0xf]
        %v2299 = vld [vmem:[%s939 + $0x8] sm:$0xf]
        %v2300 = vld [vmem:[%s939 + $0xc] sm:$0xf]
        %v2301 = vld [vmem:[%s939 + $0x10] sm:$0xf]
        %v2302 = vld [vmem:[%s939 + $0x14] sm:$0xf]
        %v2303 = vld [vmem:[%s939 + $0x18] sm:$0xf]
        %v2304 = vld [vmem:[%s939 + $0x1c] sm:$0xf]
        %v2305 = vld [vmem:[%s939 + $0x20] sm:$0xf]
        %v2306 = vld [vmem:[%s939 + $0x24] sm:$0xf]
        %v2307 = vld [vmem:[%s939 + $0x28] sm:$0xf]
        %v2308 = vld [vmem:[%s939 + $0x2c] sm:$0xf]
        %v2309 = vld [vmem:[%s939 + $0x30] sm:$0xf]
        %v2310 = vld [vmem:[%s939 + $0x34] sm:$0xf]
        %v2311 = vld [vmem:[%s939 + $0x38] sm:$0xf]
        %v2312 = vld [vmem:[%s939 + $0x3c] sm:$0xf]
        %v2313 = vld [vmem:[%s939 + $0x40] sm:$0xf]
        %v2314 = vld [vmem:[%s939 + $0x44] sm:$0xf]
        %v2315 = vld [vmem:[%s939 + $0x48] sm:$0xf]
        %v2316 = vld [vmem:[%s939 + $0x4c] sm:$0xf]
        %v2317 = vld [vmem:[%s939 + $0x50] sm:$0xf]
        %v2318 = vld [vmem:[%s939 + $0x54] sm:$0xf]
        %v2319 = vld [vmem:[%s939 + $0x58] sm:$0xf]
        %v2320 = vld [vmem:[%s939 + $0x5c] sm:$0xf]
        %v2321 = vld [vmem:[%s939 + $0x60] sm:$0xf]
        %v2322 = vld [vmem:[%s939 + $0x64] sm:$0xf]
        %v2323 = vld [vmem:[%s939 + $0x68] sm:$0xf]
        %v2324 = vld [vmem:[%s939 + $0x6c] sm:$0xf]
        %v2325 = vld [vmem:[%s939 + $0x70] sm:$0xf]
        %v2326 = vld [vmem:[%s939 + $0x74] sm:$0xf]
        %v2327 = vld [vmem:[%s939 + $0x78] sm:$0xf]
        %v2328 = vld [vmem:[%s939 + $0x7c] sm:$0xf]
        %v2329 = vld [vmem:[%s939 + $0x80] sm:$0xf]
        %v2330 = vld [vmem:[%s939 + $0x84] sm:$0xf]
        %v2331 = vld [vmem:[%s939 + $0x88] sm:$0xf]
        %v2332 = vld [vmem:[%s939 + $0x8c] sm:$0xf]
        %v2333 = vld [vmem:[%s939 + $0x90] sm:$0xf]
        %v2334 = vld [vmem:[%s939 + $0x94] sm:$0xf]
        %v2335 = vld [vmem:[%s939 + $0x98] sm:$0xf]
        %v2336 = vld [vmem:[%s939 + $0x9c] sm:$0xf]
        %v2337 = vld [vmem:[%s939 + $0xa0] sm:$0xf]
        %v2338 = vld [vmem:[%s939 + $0xa4] sm:$0xf]
        %v2339 = vld [vmem:[%s939 + $0xa8] sm:$0xf]
        %v2340 = vld [vmem:[%s939 + $0xac] sm:$0xf]
        %v2341 = vld [vmem:[%s939 + $0xb0] sm:$0xf]
        %v2342 = vld [vmem:[%s939 + $0xb4] sm:$0xf]
        %v2343 = vld [vmem:[%s939 + $0xb8] sm:$0xf]
        %v2344 = vld [vmem:[%s939 + $0xbc] sm:$0xf]
        %v2345 = vld [vmem:[%s939 + $0xc0] sm:$0xf]
        %v2346 = vld [vmem:[%s939 + $0xc4] sm:$0xf]
        %v2347 = vld [vmem:[%s939 + $0xc8] sm:$0xf]
        %v2348 = vld [vmem:[%s939 + $0xcc] sm:$0xf]
        %v2349 = vld [vmem:[%s939 + $0xd0] sm:$0xf]
        %v2350 = vld [vmem:[%s939 + $0xd4] sm:$0xf]
        %v2351 = vld [vmem:[%s939 + $0xd8] sm:$0xf]
        %v2352 = vld [vmem:[%s939 + $0xdc] sm:$0xf]
        %v2353 = vld [vmem:[%s939 + $0xe0] sm:$0xf]
        %v2354 = vld [vmem:[%s939 + $0xe4] sm:$0xf]
        %v2355 = vld [vmem:[%s939 + $0xe8] sm:$0xf]
        %v2356 = vld [vmem:[%s939 + $0xec] sm:$0xf]
        %v2357 = vld [vmem:[%s939 + $0xf0] sm:$0xf]
        %v2358 = vld [vmem:[%s939 + $0xf4] sm:$0xf]
        %v2359 = vld [vmem:[%s939 + $0xf8] sm:$0xf]
        %v2360 = vld [vmem:[%s939 + $0xfc] sm:$0xf]
        %v2361 = vld [vmem:[%s1072] sm:$0x1]
        %v2363 = vlaneseq
        %v2364 = vshrl.u32 %v2363, 7
        %v2365 = vsub.s32 0, %v2364
        %v2366 = vrot.slane %v2361, %v2365
        %v2432 = vunpack.c.l.b16 %v2297
        %v2433 = vunpack.c.l.b16 %v2298
        %v2434 = vunpack.c.l.b16 %v2299
        %v2435 = vunpack.c.l.b16 %v2300
        %v2436 = vunpack.c.l.b16 %v2301
        %v2437 = vunpack.c.l.b16 %v2302
        %v2438 = vunpack.c.l.b16 %v2303
        %v2439 = vunpack.c.l.b16 %v2304
        %v2440 = vunpack.c.l.b16 %v2305
        %v2441 = vunpack.c.l.b16 %v2306
        %v2442 = vunpack.c.l.b16 %v2307
        %v2443 = vunpack.c.l.b16 %v2308
        %v2444 = vunpack.c.l.b16 %v2309
        %v2445 = vunpack.c.l.b16 %v2310
        %v2446 = vunpack.c.l.b16 %v2311
        %v2447 = vunpack.c.l.b16 %v2312
        %v2448 = vunpack.c.l.b16 %v2313
        %v2449 = vunpack.c.l.b16 %v2314
        %v2450 = vunpack.c.l.b16 %v2315
        %v2451 = vunpack.c.l.b16 %v2316
        %v2452 = vunpack.c.l.b16 %v2317
        %v2453 = vunpack.c.l.b16 %v2318
        %v2454 = vunpack.c.l.b16 %v2319
        %v2455 = vunpack.c.l.b16 %v2320
        %v2456 = vunpack.c.l.b16 %v2321
        %v2457 = vunpack.c.l.b16 %v2322
        %v2458 = vunpack.c.l.b16 %v2323
        %v2459 = vunpack.c.l.b16 %v2324
        %v2460 = vunpack.c.l.b16 %v2325
        %v2461 = vunpack.c.l.b16 %v2326
        %v2462 = vunpack.c.l.b16 %v2327
        %v2463 = vunpack.c.l.b16 %v2328
        %v2464 = vunpack.c.l.b16 %v2329
        %v2465 = vunpack.c.l.b16 %v2330
        %v2466 = vunpack.c.l.b16 %v2331
        %v2467 = vunpack.c.l.b16 %v2332
        %v2468 = vunpack.c.l.b16 %v2333
        %v2469 = vunpack.c.l.b16 %v2334
        %v2470 = vunpack.c.l.b16 %v2335
        %v2471 = vunpack.c.l.b16 %v2336
        %v2472 = vunpack.c.l.b16 %v2337
        %v2473 = vunpack.c.l.b16 %v2338
        %v2474 = vunpack.c.l.b16 %v2339
        %v2475 = vunpack.c.l.b16 %v2340
        %v2476 = vunpack.c.l.b16 %v2341
        %v2477 = vunpack.c.l.b16 %v2342
        %v2478 = vunpack.c.l.b16 %v2343
        %v2479 = vunpack.c.l.b16 %v2344
        %v2480 = vunpack.c.l.b16 %v2345
        %v2481 = vunpack.c.l.b16 %v2346
        %v2482 = vunpack.c.l.b16 %v2347
        %v2483 = vunpack.c.l.b16 %v2348
        %v2484 = vunpack.c.l.b16 %v2349
        %v2485 = vunpack.c.l.b16 %v2350
        %v2486 = vunpack.c.l.b16 %v2351
        %v2487 = vunpack.c.l.b16 %v2352
        %v2488 = vunpack.c.l.b16 %v2353
        %v2489 = vunpack.c.l.b16 %v2354
        %v2490 = vunpack.c.l.b16 %v2355
        %v2491 = vunpack.c.l.b16 %v2356
        %v2492 = vunpack.c.l.b16 %v2357
        %v2493 = vunpack.c.l.b16 %v2358
        %v2494 = vunpack.c.l.b16 %v2359
        %v2495 = vunpack.c.l.b16 %v2360
        %v2496 = vpack.c.b16 %v2433, %v2432
        %v2497 = vpack.c.b16 %v2435, %v2434
        %v2498 = vpack.c.b16 %v2437, %v2436
        %v2499 = vpack.c.b16 %v2439, %v2438
        %v2500 = vpack.c.b16 %v2441, %v2440
        %v2501 = vpack.c.b16 %v2443, %v2442
        %v2502 = vpack.c.b16 %v2445, %v2444
        %v2503 = vpack.c.b16 %v2447, %v2446
        %v2504 = vpack.c.b16 %v2449, %v2448
        %v2505 = vpack.c.b16 %v2451, %v2450
        %v2506 = vpack.c.b16 %v2453, %v2452
        %v2507 = vpack.c.b16 %v2455, %v2454
        %v2508 = vpack.c.b16 %v2457, %v2456
        %v2509 = vpack.c.b16 %v2459, %v2458
        %v2510 = vpack.c.b16 %v2461, %v2460
        %v2511 = vpack.c.b16 %v2463, %v2462
        %v2512 = vpack.c.b16 %v2465, %v2464
        %v2513 = vpack.c.b16 %v2467, %v2466
        %v2514 = vpack.c.b16 %v2469, %v2468
        %v2515 = vpack.c.b16 %v2471, %v2470
        %v2516 = vpack.c.b16 %v2473, %v2472
        %v2517 = vpack.c.b16 %v2475, %v2474
        %v2518 = vpack.c.b16 %v2477, %v2476
        %v2519 = vpack.c.b16 %v2479, %v2478
        %v2520 = vpack.c.b16 %v2481, %v2480
        %v2521 = vpack.c.b16 %v2483, %v2482
        %v2522 = vpack.c.b16 %v2485, %v2484
        %v2523 = vpack.c.b16 %v2487, %v2486
        %v2524 = vpack.c.b16 %v2489, %v2488
        %v2525 = vpack.c.b16 %v2491, %v2490
        %v2526 = vpack.c.b16 %v2493, %v2492
        %v2527 = vpack.c.b16 %v2495, %v2494
        %2560 = vmatprep.subr.bf16.mxu0 0
        %2561 = vmatpush1.bf16.msra.mxu0 %v2503
        %2562 = vmatprep.subr.bf16.mxu0 0
        %2563 = vmatpush1.bf16.msra.mxu0 %v2502
        %2564 = vmatprep.subr.bf16.mxu0 0
        %2565 = vmatpush1.bf16.msra.mxu0 %v2501
        %2566 = vmatprep.subr.bf16.mxu0 0
        %2567 = vmatpush1.bf16.msra.mxu0 %v2500
        %2568 = vmatprep.subr.bf16.mxu0 0
        %2569 = vmatpush1.bf16.msra.mxu0 %v2499
        %2570 = vmatprep.subr.bf16.mxu0 0
        %2571 = vmatpush1.bf16.msra.mxu0 %v2498
        %2572 = vmatprep.subr.bf16.mxu0 0
        %2573 = vmatpush1.bf16.msra.mxu0 %v2497
        %2574 = vmatprep.subr.bf16.mxu0 0
        %2575 = vmatpush1.bf16.msra.mxu0 %v2496
        %2576 = vmatprep.subr.bf16.mxu0 0
        %2577 = vmatpush2.bf16.msra.mxu0 %v2511
        %2578 = vmatprep.subr.bf16.mxu0 0
        %2579 = vmatpush2.bf16.msra.mxu0 %v2510
        %2580 = vmatprep.subr.bf16.mxu0 0
        %2581 = vmatpush2.bf16.msra.mxu0 %v2509
        %2582 = vmatprep.subr.bf16.mxu0 0
        %2583 = vmatpush2.bf16.msra.mxu0 %v2508
        %2584 = vmatprep.subr.bf16.mxu0 0
        %2585 = vmatpush2.bf16.msra.mxu0 %v2507
        %2586 = vmatprep.subr.bf16.mxu0 0
        %2587 = vmatpush2.bf16.msra.mxu0 %v2506
        %2588 = vmatprep.subr.bf16.mxu0 0
        %2589 = vmatpush2.bf16.msra.mxu0 %v2505
        %2590 = vmatprep.subr.bf16.mxu0 0
        %2591 = vmatpush2.bf16.msra.mxu0 %v2504
        %2592 = vmatprep.mubr.bf16.mxu0 %v2294
        %2593 = vmatmul.mubr.bf16.gmra.mxu0 %v2293
        %v2594 = vpop.f32.mrf.mxu0
        %v2595 = vadd.f32 %v2366, %v2594
        %v2596 = vpop.f32.mrf.mxu0
        %v2597 = vpop.f32.mrf.mxu0
        %v2598 = vpop.f32.mrf.mxu0
        %2599 = vdwg.mxu0
        %2600 = vmatprep.subr.bf16.mxu0 0
        %2601 = vmatpush1.bf16.msra.mxu0 %v2519
        %2602 = vmatprep.subr.bf16.mxu0 0
        %2603 = vmatpush1.bf16.msra.mxu0 %v2518
        %2604 = vmatprep.subr.bf16.mxu0 0
        %2605 = vmatpush1.bf16.msra.mxu0 %v2517
        %2606 = vmatprep.subr.bf16.mxu0 0
        %2607 = vmatpush1.bf16.msra.mxu0 %v2516
        %2608 = vmatprep.subr.bf16.mxu0 0
        %2609 = vmatpush1.bf16.msra.mxu0 %v2515
        %2610 = vmatprep.subr.bf16.mxu0 0
        %2611 = vmatpush1.bf16.msra.mxu0 %v2514
        %2612 = vmatprep.subr.bf16.mxu0 0
        %2613 = vmatpush1.bf16.msra.mxu0 %v2513
        %2614 = vmatprep.subr.bf16.mxu0 0
        %2615 = vmatpush1.bf16.msra.mxu0 %v2512
        %2616 = vmatprep.subr.bf16.mxu0 0
        %2617 = vmatpush2.bf16.msra.mxu0 %v2527
        %2618 = vmatprep.subr.bf16.mxu0 0
        %2619 = vmatpush2.bf16.msra.mxu0 %v2526
        %2620 = vmatprep.subr.bf16.mxu0 0
        %2621 = vmatpush2.bf16.msra.mxu0 %v2525
        %2622 = vmatprep.subr.bf16.mxu0 0
        %2623 = vmatpush2.bf16.msra.mxu0 %v2524
        %2624 = vmatprep.subr.bf16.mxu0 0
        %2625 = vmatpush2.bf16.msra.mxu0 %v2523
        %2626 = vmatprep.subr.bf16.mxu0 0
        %2627 = vmatpush2.bf16.msra.mxu0 %v2522
        %2628 = vmatprep.subr.bf16.mxu0 0
        %2629 = vmatpush2.bf16.msra.mxu0 %v2521
        %2630 = vmatprep.subr.bf16.mxu0 0
        %2631 = vmatpush2.bf16.msra.mxu0 %v2520
        %2632 = vmatprep.mubr.bf16.mxu0 %v2296
        %2633 = vmatmul.mubr.bf16.gmra.mxu0 %v2295
        %v2634 = vpop.f32.mrf.mxu0
        %v2635 = vadd.f32 %v2595, %v2634
        %v2636 = vpop.f32.mrf.mxu0
        %v2637 = vpop.f32.mrf.mxu0
        %v2638 = vpop.f32.mrf.mxu0
        %2639 = vdwg.mxu0
        %v2640 = vadd.f32 %v1944, %v2635
        %2641 = vst [vmem:[#allocation2] sm:$0xff] %v2640
        %p2642 = scmp.eq.s32.totalorder %s57, 1
        // Predicated region
        $region157: #{tpu_custom_call.1} parent=103 // pred_check
          %p2643 = pneg %p2642
        $region158: #{tpu_custom_call.1} parent=103 // pred_check_branch
          %2645 = sbr.rel (%p2643) target = $region160
        $region159: #{tpu_custom_call.1} parent=103 // pred_region
          %v2646 = vld [vmem:[%s13] sm:$0x1]
          %v2647 = vld [vmem:[%s14] sm:$0x1]
          %vm2648 = vcmask 1040384
          %v2649 = vsel %vm2648, %v2640, 0.0
          %2650 = vadd.xlane.f32.xlu0 %v2649
          %v2651 = vpop.xlane.xlu0 %2650
          %v2652 = vmul.f32 %v2651, %v1085
          %v2653 = vsub.f32 %v2640, %v2652
          %v2654 = vmul.f32 %v2653, %v2653
          %v2655 = vsel %vm2648, %v2654, 0.0
          %2656 = vadd.xlane.f32.xlu0 %v2655
          %v2657 = vpop.xlane.xlu0 %2656
          %v2658 = vmul.f32 %v2657, %v1085
          %v2659 = vadd.f32 %v2658, 1e-05
          %v2660 = vrsqrt.pop %v2659
          %v2661 = vmul.f32 %v2653, %v2660
          %v2662 = vmul.f32 %v2661, %v2646
          %v2663 = vadd.f32 %v2662, %v2647
          %v2664 = vpack.c.bf16 %v2663, %v2663
          %v2665 = vld [vmem:[#allocation19] sm:$0xf]
          %v2666 = vld [vmem:[#allocation19 + $0x4] sm:$0xf]
          %v2667 = vld [vmem:[#allocation19 + $0x8] sm:$0xf]
          %v2668 = vld [vmem:[#allocation19 + $0xc] sm:$0xf]
          %v2669 = vld [vmem:[#allocation19 + $0x10] sm:$0xf]
          %v2670 = vld [vmem:[#allocation19 + $0x14] sm:$0xf]
          %v2671 = vld [vmem:[#allocation19 + $0x18] sm:$0xf]
          %v2672 = vld [vmem:[#allocation19 + $0x1c] sm:$0xf]
          %v2673 = vld [vmem:[#allocation19 + $0x20] sm:$0xf]
          %v2674 = vld [vmem:[#allocation19 + $0x24] sm:$0xf]
          %v2675 = vld [vmem:[#allocation19 + $0x28] sm:$0xf]
          %v2676 = vld [vmem:[#allocation19 + $0x2c] sm:$0xf]
          %v2677 = vld [vmem:[#allocation19 + $0x30] sm:$0xf]
          %v2678 = vld [vmem:[#allocation19 + $0x34] sm:$0xf]
          %v2679 = vld [vmem:[#allocation19 + $0x38] sm:$0xf]
          %v2680 = vld [vmem:[#allocation19 + $0x3c] sm:$0xf]
          %v2681 = vld [vmem:[%s16] sm:$0x1]
          %v2698 = vunpack.c.l.b16 %v2665
          %v2699 = vunpack.c.l.b16 %v2666
          %v2700 = vunpack.c.l.b16 %v2667
          %v2701 = vunpack.c.l.b16 %v2668
          %v2702 = vunpack.c.l.b16 %v2669
          %v2703 = vunpack.c.l.b16 %v2670
          %v2704 = vunpack.c.l.b16 %v2671
          %v2705 = vunpack.c.l.b16 %v2672
          %v2706 = vunpack.c.l.b16 %v2673
          %v2707 = vunpack.c.l.b16 %v2674
          %v2708 = vunpack.c.l.b16 %v2675
          %v2709 = vunpack.c.l.b16 %v2676
          %v2710 = vunpack.c.l.b16 %v2677
          %v2711 = vunpack.c.l.b16 %v2678
          %v2712 = vunpack.c.l.b16 %v2679
          %v2713 = vunpack.c.l.b16 %v2680
          %v2714 = vpack.c.b16 %v2699, %v2698
          %v2715 = vpack.c.b16 %v2701, %v2700
          %v2716 = vpack.c.b16 %v2703, %v2702
          %v2717 = vpack.c.b16 %v2705, %v2704
          %v2718 = vpack.c.b16 %v2707, %v2706
          %v2719 = vpack.c.b16 %v2709, %v2708
          %v2720 = vpack.c.b16 %v2711, %v2710
          %v2721 = vpack.c.b16 %v2713, %v2712
          %2730 = vmatprep.subr.bf16.mxu0 0
          %2731 = vmatpush1.bf16.msra.mxu0 %v2721
          %2732 = vmatprep.subr.bf16.mxu0 0
          %2733 = vmatpush1.bf16.msra.mxu0 %v2720
          %2734 = vmatprep.subr.bf16.mxu0 0
          %2735 = vmatpush1.bf16.msra.mxu0 %v2719
          %2736 = vmatprep.subr.bf16.mxu0 0
          %2737 = vmatpush1.bf16.msra.mxu0 %v2718
          %2738 = vmatprep.subr.bf16.mxu0 0
          %2739 = vmatpush1.bf16.msra.mxu0 %v2717
          %2740 = vmatprep.subr.bf16.mxu0 0
          %2741 = vmatpush1.bf16.msra.mxu0 %v2716
          %2742 = vmatprep.subr.bf16.mxu0 0
          %2743 = vmatpush1.bf16.msra.mxu0 %v2715
          %2744 = vmatprep.subr.bf16.mxu0 0
          %2745 = vmatpush1.bf16.msra.mxu0 %v2714
          %2746 = vmatprep.subr.bf16.mxu0 0
          %2747 = vmatpush2.bf16.msra.mxu0 0
          %2748 = vmatprep.subr.bf16.mxu0 0
          %2749 = vmatpush2.bf16.msra.mxu0 0
          %2750 = vmatprep.subr.bf16.mxu0 0
          %2751 = vmatpush2.bf16.msra.mxu0 0
          %2752 = vmatprep.subr.bf16.mxu0 0
          %2753 = vmatpush2.bf16.msra.mxu0 0
          %2754 = vmatprep.subr.bf16.mxu0 0
          %2755 = vmatpush2.bf16.msra.mxu0 0
          %2756 = vmatprep.subr.bf16.mxu0 0
          %2757 = vmatpush2.bf16.msra.mxu0 0
          %2758 = vmatprep.subr.bf16.mxu0 0
          %2759 = vmatpush2.bf16.msra.mxu0 0
          %2760 = vmatprep.subr.bf16.mxu0 0
          %2761 = vmatpush2.bf16.msra.mxu0 0
          %2762 = vmatprep.mubr.bf16.mxu0 0
          %2763 = vmatmul.mubr.bf16.gmra.mxu0 %v2664
          %v2764 = vpop.f32.mrf.mxu0
          %v2765 = vadd.f32 %v2681, %v2764
          %v2766 = vpop.f32.mrf.mxu0
          %v2767 = vpop.f32.mrf.mxu0
          %v2768 = vpop.f32.mrf.mxu0
          %2769 = vdwg.mxu0
          %v2770 = vmul.f32 %v2765, 0.5
          %v2771 = vmul.f32 %v2765, 0.044715
          %v2772 = vmul.f32 %v2771, %v2765
          %v2773 = vmul.f32 %v2772, %v2765
          %v2774 = vadd.f32 %v2765, %v2773
          %v2775 = vmul.f32 %v2774, 0.7978846
          %v2776 = vtanh.pop %v2775
          %v2777 = vadd.f32 %v2776, 1.0
          %v2778 = vmul.f32 %v2770, %v2777
          %v2779 = vpack.c.bf16 %v2778, %v2778
          %v2780 = vld [vmem:[#allocation21] sm:$0xf]
          %v2781 = vld [vmem:[#allocation21 + $0x4] sm:$0xf]
          %v2782 = vld [vmem:[#allocation21 + $0x8] sm:$0xf]
          %v2783 = vld [vmem:[#allocation21 + $0xc] sm:$0xf]
          %v2784 = vld [vmem:[#allocation21 + $0x10] sm:$0xf]
          %v2785 = vld [vmem:[#allocation21 + $0x14] sm:$0xf]
          %v2786 = vld [vmem:[#allocation21 + $0x18] sm:$0xf]
          %v2787 = vld [vmem:[#allocation21 + $0x1c] sm:$0xf]
          %v2788 = vld [vmem:[#allocation21 + $0x20] sm:$0xf]
          %v2789 = vld [vmem:[#allocation21 + $0x24] sm:$0xf]
          %v2790 = vld [vmem:[#allocation21 + $0x28] sm:$0xf]
          %v2791 = vld [vmem:[#allocation21 + $0x2c] sm:$0xf]
          %v2792 = vld [vmem:[#allocation21 + $0x30] sm:$0xf]
          %v2793 = vld [vmem:[#allocation21 + $0x34] sm:$0xf]
          %v2794 = vld [vmem:[#allocation21 + $0x38] sm:$0xf]
          %v2795 = vld [vmem:[#allocation21 + $0x3c] sm:$0xf]
          %v2796 = vld [vmem:[%s18] sm:$0x1]
          %v2813 = vunpack.c.l.b16 %v2780
          %v2814 = vunpack.c.l.b16 %v2781
          %v2815 = vunpack.c.l.b16 %v2782
          %v2816 = vunpack.c.l.b16 %v2783
          %v2817 = vunpack.c.l.b16 %v2784
          %v2818 = vunpack.c.l.b16 %v2785
          %v2819 = vunpack.c.l.b16 %v2786
          %v2820 = vunpack.c.l.b16 %v2787
          %v2821 = vunpack.c.l.b16 %v2788
          %v2822 = vunpack.c.l.b16 %v2789
          %v2823 = vunpack.c.l.b16 %v2790
          %v2824 = vunpack.c.l.b16 %v2791
          %v2825 = vunpack.c.l.b16 %v2792
          %v2826 = vunpack.c.l.b16 %v2793
          %v2827 = vunpack.c.l.b16 %v2794
          %v2828 = vunpack.c.l.b16 %v2795
          %v2829 = vpack.c.b16 %v2814, %v2813
          %v2830 = vpack.c.b16 %v2816, %v2815
          %v2831 = vpack.c.b16 %v2818, %v2817
          %v2832 = vpack.c.b16 %v2820, %v2819
          %v2833 = vpack.c.b16 %v2822, %v2821
          %v2834 = vpack.c.b16 %v2824, %v2823
          %v2835 = vpack.c.b16 %v2826, %v2825
          %v2836 = vpack.c.b16 %v2828, %v2827
          %2845 = vmatprep.subr.bf16.mxu0 0
          %2846 = vmatpush1.bf16.msra.mxu0 %v2836
          %2847 = vmatprep.subr.bf16.mxu0 0
          %2848 = vmatpush1.bf16.msra.mxu0 %v2835
          %2849 = vmatprep.subr.bf16.mxu0 0
          %2850 = vmatpush1.bf16.msra.mxu0 %v2834
          %2851 = vmatprep.subr.bf16.mxu0 0
          %2852 = vmatpush1.bf16.msra.mxu0 %v2833
          %2853 = vmatprep.subr.bf16.mxu0 0
          %2854 = vmatpush1.bf16.msra.mxu0 %v2832
          %2855 = vmatprep.subr.bf16.mxu0 0
          %2856 = vmatpush1.bf16.msra.mxu0 %v2831
          %2857 = vmatprep.subr.bf16.mxu0 0
          %2858 = vmatpush1.bf16.msra.mxu0 %v2830
          %2859 = vmatprep.subr.bf16.mxu0 0
          %2860 = vmatpush1.bf16.msra.mxu0 %v2829
          %2861 = vmatprep.subr.bf16.mxu0 0
          %2862 = vmatpush2.bf16.msra.mxu0 0
          %2863 = vmatprep.subr.bf16.mxu0 0
          %2864 = vmatpush2.bf16.msra.mxu0 0
          %2865 = vmatprep.subr.bf16.mxu0 0
          %2866 = vmatpush2.bf16.msra.mxu0 0
          %2867 = vmatprep.subr.bf16.mxu0 0
          %2868 = vmatpush2.bf16.msra.mxu0 0
          %2869 = vmatprep.subr.bf16.mxu0 0
          %2870 = vmatpush2.bf16.msra.mxu0 0
          %2871 = vmatprep.subr.bf16.mxu0 0
          %2872 = vmatpush2.bf16.msra.mxu0 0
          %2873 = vmatprep.subr.bf16.mxu0 0
          %2874 = vmatpush2.bf16.msra.mxu0 0
          %2875 = vmatprep.subr.bf16.mxu0 0
          %2876 = vmatpush2.bf16.msra.mxu0 0
          %2877 = vmatprep.mubr.bf16.mxu0 0
          %2878 = vmatmul.mubr.bf16.gmra.mxu0 %v2779
          %v2879 = vpop.f32.mrf.mxu0
          %v2880 = vadd.f32 %v2796, %v2879
          %v2881 = vpop.f32.mrf.mxu0
          %v2882 = vpop.f32.mrf.mxu0
          %v2883 = vpop.f32.mrf.mxu0
          %2884 = vdwg.mxu0
          %v2885 = vmul.f32 %v2880, 0.5
          %v2886 = vmul.f32 %v2880, 0.044715
          %v2887 = vmul.f32 %v2886, %v2880
          %v2888 = vmul.f32 %v2887, %v2880
          %v2889 = vadd.f32 %v2880, %v2888
          %v2890 = vmul.f32 %v2889, 0.7978846
          %v2891 = vtanh.pop %v2890
          %v2892 = vadd.f32 %v2891, 1.0
          %v2893 = vmul.f32 %v2885, %v2892
          %v2894 = vpack.c.bf16 %v2893, %v2893
          %v2895 = vld [vmem:[#allocation22] sm:$0xf]
          %v2896 = vld [vmem:[#allocation22 + $0x4] sm:$0xf]
          %v2897 = vld [vmem:[#allocation22 + $0x8] sm:$0xf]
          %v2898 = vld [vmem:[#allocation22 + $0xc] sm:$0xf]
          %v2899 = vld [vmem:[#allocation22 + $0x10] sm:$0xf]
          %v2900 = vld [vmem:[#allocation22 + $0x14] sm:$0xf]
          %v2901 = vld [vmem:[#allocation22 + $0x18] sm:$0xf]
          %v2902 = vld [vmem:[#allocation22 + $0x1c] sm:$0xf]
          %v2903 = vld [vmem:[#allocation22 + $0x20] sm:$0xf]
          %v2904 = vld [vmem:[#allocation22 + $0x24] sm:$0xf]
          %v2905 = vld [vmem:[#allocation22 + $0x28] sm:$0xf]
          %v2906 = vld [vmem:[#allocation22 + $0x2c] sm:$0xf]
          %v2907 = vld [vmem:[#allocation22 + $0x30] sm:$0xf]
          %v2908 = vld [vmem:[#allocation22 + $0x34] sm:$0xf]
          %v2909 = vld [vmem:[#allocation22 + $0x38] sm:$0xf]
          %v2910 = vld [vmem:[#allocation22 + $0x3c] sm:$0xf]
          %v2911 = vld [vmem:[%s20] sm:$0x1]
          %v2928 = vunpack.c.l.b16 %v2895
          %v2929 = vunpack.c.l.b16 %v2896
          %v2930 = vunpack.c.l.b16 %v2897
          %v2931 = vunpack.c.l.b16 %v2898
          %v2932 = vunpack.c.l.b16 %v2899
          %v2933 = vunpack.c.l.b16 %v2900
          %v2934 = vunpack.c.l.b16 %v2901
          %v2935 = vunpack.c.l.b16 %v2902
          %v2936 = vunpack.c.l.b16 %v2903
          %v2937 = vunpack.c.l.b16 %v2904
          %v2938 = vunpack.c.l.b16 %v2905
          %v2939 = vunpack.c.l.b16 %v2906
          %v2940 = vunpack.c.l.b16 %v2907
          %v2941 = vunpack.c.l.b16 %v2908
          %v2942 = vunpack.c.l.b16 %v2909
          %v2943 = vunpack.c.l.b16 %v2910
          %v2944 = vpack.c.b16 %v2929, %v2928
          %v2945 = vpack.c.b16 %v2931, %v2930
          %v2946 = vpack.c.b16 %v2933, %v2932
          %v2947 = vpack.c.b16 %v2935, %v2934
          %v2948 = vpack.c.b16 %v2937, %v2936
          %v2949 = vpack.c.b16 %v2939, %v2938
          %v2950 = vpack.c.b16 %v2941, %v2940
          %v2951 = vpack.c.b16 %v2943, %v2942
          %2960 = vmatprep.subr.bf16.mxu0 0
          %2961 = vmatpush1.bf16.msra.mxu0 %v2951
          %2962 = vmatprep.subr.bf16.mxu0 0
          %2963 = vmatpush1.bf16.msra.mxu0 %v2950
          %2964 = vmatprep.subr.bf16.mxu0 0
          %2965 = vmatpush1.bf16.msra.mxu0 %v2949
          %2966 = vmatprep.subr.bf16.mxu0 0
          %2967 = vmatpush1.bf16.msra.mxu0 %v2948
          %2968 = vmatprep.subr.bf16.mxu0 0
          %2969 = vmatpush1.bf16.msra.mxu0 %v2947
          %2970 = vmatprep.subr.bf16.mxu0 0
          %2971 = vmatpush1.bf16.msra.mxu0 %v2946
          %2972 = vmatprep.subr.bf16.mxu0 0
          %2973 = vmatpush1.bf16.msra.mxu0 %v2945
          %2974 = vmatprep.subr.bf16.mxu0 0
          %2975 = vmatpush1.bf16.msra.mxu0 %v2944
          %2976 = vmatprep.subr.bf16.mxu0 0
          %2977 = vmatpush2.bf16.msra.mxu0 0
          %2978 = vmatprep.subr.bf16.mxu0 0
          %2979 = vmatpush2.bf16.msra.mxu0 0
          %2980 = vmatprep.subr.bf16.mxu0 0
          %2981 = vmatpush2.bf16.msra.mxu0 0
          %2982 = vmatprep.subr.bf16.mxu0 0
          %2983 = vmatpush2.bf16.msra.mxu0 0
          %2984 = vmatprep.subr.bf16.mxu0 0
          %2985 = vmatpush2.bf16.msra.mxu0 0
          %2986 = vmatprep.subr.bf16.mxu0 0
          %2987 = vmatpush2.bf16.msra.mxu0 0
          %2988 = vmatprep.subr.bf16.mxu0 0
          %2989 = vmatpush2.bf16.msra.mxu0 0
          %2990 = vmatprep.subr.bf16.mxu0 0
          %2991 = vmatpush2.bf16.msra.mxu0 0
          %2992 = vmatprep.mubr.bf16.mxu0 0
          %2993 = vmatmul.mubr.bf16.gmra.mxu0 %v2894
          %v2994 = vpop.f32.mrf.mxu0
          %v2995 = vadd.f32 %v2911, %v2994
          %v2996 = vpop.f32.mrf.mxu0
          %v2997 = vpop.f32.mrf.mxu0
          %v2998 = vpop.f32.mrf.mxu0
          %2999 = vdwg.mxu0
          %3000 = vst [vmem:[%s1058] sm:$0x1] %v2995
        $region160: #{tpu_custom_call.1} parent=103 // pred_fallthru
          _
        %s3001 = sand.u32 %s578, 1
        %s3002 = scalar_lea.sflag [#allocation6], %s3001
        %s3003 = sand.u32 %s578, 1
        %s3004 = scalar_lea.vmem [#allocation24], %s3003
        // Predicated region
        $region161: #{tpu_custom_call.1} parent=103 // pred_check
          %p3005 = pneg %p588
        $region162: #{tpu_custom_call.1} parent=103 // pred_check_branch
          %3007 = sbr.rel (%p3005) target = $region164
        $region163: #{tpu_custom_call.1} parent=103 // pred_region
          %s3009 = ssub.s32 16, 16
          %3010 = vsyncadd %s3002, %s3009
          %s3011 = smul.addr %s56, 16
          %s3012 = scalar_lea.hbm %s21, %s3011
          %s3014 = sshll.u32 %s3004, 4
          %s3015 = int_to_ptr.vmem [resolvable:$true] %s3014
          %3017 = dma.vmem_to_hbm [thread:$0]  %s3015, 16, %s3012, %s3002
        $region164: #{tpu_custom_call.1} parent=103 // pred_fallthru
          _
      $region104: #{tpu_custom_call.1} parent=5 // pred_fallthru
        _
      %p3018 = scmp.le.s32.totalorder 2, %s47
      // Predicated region
      $region165: #{tpu_custom_call.1} parent=5 // pred_check
        %p3019 = pneg %p3018
      $region166: #{tpu_custom_call.1} parent=5 // pred_check_branch
        %3021 = sbr.rel (%p3019) target = $region168
      $region167: #{tpu_custom_call.1} parent=5 // pred_region
        %s3022 = ssub.s32 %s47, 2
        // Predicated region
        $region169: #{tpu_custom_call.1} parent=167 // pred_check
          %p3023 = pneg %p594
        $region170: #{tpu_custom_call.1} parent=167 // pred_check_branch
          %3025 = sbr.rel (%p3023) target = $region172
        $region171: #{tpu_custom_call.1} parent=167 // pred_region
          %s3026 = sand.u32 %s579, 1
          %s3027 = scalar_lea.sflag [#allocation6], %s3026
          %s3028 = sand.u32 %s579, 1
          %s3029 = scalar_lea.vmem [#allocation24], %s3028
          %3030 = dma.done %s3027, 16
        $region172: #{tpu_custom_call.1} parent=167 // pred_fallthru
          _
      $region168: #{tpu_custom_call.1} parent=5 // pred_fallthru
        _
    $region6: #{tpu_custom_call.1} parent=1 // loop_footer
      %s51 = sadd.s32 1, %s47
    $region7: #{tpu_custom_call.1} parent=1 // loop_footer_branch
      %46 = sbr.rel target = $region3
    $region8: #{tpu_custom_call.1} parent=1 // loop_exit
      _
    %3031 = vsyncpa [#allocation5], 1
    %s3032 = scalar_lea.sflag [#allocation5], 1
    %3033 = vsyncpa %s3032, 1
    %3034 = vsyncpa [#allocation8], 1
    %s3035 = scalar_lea.sflag [#allocation8], 1
    %3036 = vsyncpa %s3035, 1
    %3037 = vsyncpa [#allocation11], 1
    %s3038 = scalar_lea.sflag [#allocation11], 1
    %3039 = vsyncpa %s3038, 1
    %3040 = vsyncpa [#allocation14], 1
    %s3041 = scalar_lea.sflag [#allocation14], 1
    %3042 = vsyncpa %s3041, 1
    %3043 = vsyncpa [#allocation17], 1
    %s3044 = scalar_lea.sflag [#allocation17], 1
    %3045 = vsyncpa %s3044, 1
    %3046 = vsyncpa [#allocation20], 1
    %3047 = vsyncpa [#allocation23], 1
    %3048 = vsyncpa [#allocation6], 1
    %s3049 = scalar_lea.sflag [#allocation6], 1
    %3050 = vsyncpa %s3049, 1

</llo_original>
